<compile_context>
chip_gen: v7x
topology: tpu7x:2x2x1
jax: 0.10.0
libtpu: 0.0.40
codegen_flags: <defaults>
</compile_context>

<pallas_src>
import functools

import jax
import jax.numpy as jnp
from jax.experimental import pallas as pl
from jax.experimental.pallas import tpu as pltpu

EPS = 1e-5
HIDDEN = 500                      # fixed by the module definition
VMEM_LIMIT = 32 * 1024 * 1024     # > v5e's 16 MiB scoped default, safe everywhere


def _round_up(n, m):
    return (n + m - 1) // m * m


# --------------------------------------------------------------------------
# Per-tile statistics writer: one full-block (1, 2, F) store.
# Only the last tile masks padded batch rows, and only if padding exists.
# --------------------------------------------------------------------------
def _write_stats(st_ref, h, *, valid_last, tb):
    def write(hm):
        s = jnp.sum(hm, axis=0, keepdims=True)
        ss = jnp.sum(hm * hm, axis=0, keepdims=True)
        st_ref[...] = jnp.concatenate([s, ss], axis=0)[None]

    if valid_last == tb:          # static: no batch padding anywhere
        write(h)
    else:
        is_last = pl.program_id(0) == pl.num_programs(0) - 1

        @pl.when(jnp.logical_not(is_last))
        def _():
            write(h)

        @pl.when(is_last)
        def _():
            row = jax.lax.broadcasted_iota(jnp.int32, (tb, 1), 0)
            write(jnp.where(row < valid_last, h, 0.0))


# --------------------------------------------------------------------------
# Stages 1 & 2: out = x @ W + b (bf16 MXU, f32 accumulation) + [sum, sumsq].
# --------------------------------------------------------------------------
def _linear_stats_kernel(x_ref, w_ref, b_ref, out_ref, st_ref, *, valid_last, tb):
    h = jnp.dot(x_ref[...], w_ref[...],
                preferred_element_type=jnp.float32) + b_ref[...]
    out_ref[...] = h.astype(out_ref.dtype)
    _write_stats(st_ref, h, valid_last=valid_last, tb=tb)


# --------------------------------------------------------------------------
# Stage 3: enc = h2 * sc2 + shift2 ; dec = h2 @ W3_eff + b3_eff
# (BN2 folded into W3/b3 so the matmul does not wait on the elementwise chain)
# --------------------------------------------------------------------------
def _stage3_kernel(h2_ref, sc2_ref, sh2_ref, w3_ref, b3_ref, enc_ref, dec_ref):
    h2 = h2_ref[...]                              # bf16
    enc_ref[...] = (h2.astype(jnp.float32) * sc2_ref[...]
                    + sh2_ref[...]).astype(enc_ref.dtype)
    dec_ref[...] = jnp.dot(h2, w3_ref[...],
                           preferred_element_type=jnp.float32) + b3_ref[...]


# --------------------------------------------------------------------------
# Parameters (PyTorch-like init, unpadded).
# --------------------------------------------------------------------------
def init_params(key, input_dim, latent_dim, output_dim):
    ks = jax.random.split(key, 6)

    def lin(kw, kb, fan_in, fan_out):
        bound = 1.0 / jnp.sqrt(jnp.float32(fan_in))
        w = jax.random.uniform(kw, (fan_in, fan_out), jnp.float32, -bound, bound)
        b = jax.random.uniform(kb, (fan_out,), jnp.float32, -bound, bound)
        return w, b

    w1, b1 = lin(ks[0], ks[1], input_dim, HIDDEN)
    w2, b2 = lin(ks[2], ks[3], HIDDEN, latent_dim)
    w3, b3 = lin(ks[4], ks[5], latent_dim, output_dim)
    # BatchNorm affine params: PyTorch default init (gamma=1, beta=0)
    g1, be1 = jnp.ones((HIDDEN,), jnp.float32), jnp.zeros((HIDDEN,), jnp.float32)
    g2, be2 = jnp.ones((latent_dim,), jnp.float32), jnp.zeros((latent_dim,), jnp.float32)
    return dict(w1=w1, b1=b1, g1=g1, be1=be1,
                w2=w2, b2=b2, g2=g2, be2=be2,
                w3=w3, b3=b3)


# --------------------------------------------------------------------------
# One-time parameter padding + dtype casts (hoisted out of the per-call path).
# Feature dims are padded to multiples of 128 so every load/store is
# lane-dense and MXU tiles are unmasked; padded rows/cols are zero (including
# the gammas) so padded columns stay exactly zero through every stage.
# --------------------------------------------------------------------------
def prepare_params(params):
    f32, bf16 = jnp.float32, jnp.bfloat16
    D, H = params["w1"].shape
    L = params["w2"].shape[1]
    O = params["w3"].shape[1]
    DP, HP, LP, OP = (_round_up(d, 128) for d in (D, H, L, O))

    def pad2(a, r, c):
        return jnp.pad(a, ((0, r - a.shape[0]), (0, c - a.shape[1])))

    def pad1(a, n):
        return jnp.pad(a, (0, n - a.shape[0]))

    return dict(
        w1=pad2(params["w1"], DP, HP).astype(bf16),
        b1=pad1(params["b1"], HP).reshape(1, HP).astype(f32),
        g1=pad1(params["g1"], HP).astype(f32),
        be1=pad1(params["be1"], HP).astype(f32),
        w2=pad2(params["w2"], HP, LP).astype(f32),   # f32: scaled by sc1 per call
        b2=pad1(params["b2"], LP).astype(f32),
        g2=pad1(params["g2"], LP).astype(f32),
        be2=pad1(params["be2"], LP).astype(f32),
        w3=pad2(params["w3"], LP, OP).astype(f32),   # f32: scaled by sc2 per call
        b3=pad1(params["b3"], OP).astype(f32),
    )


# --------------------------------------------------------------------------
# Forward pass wrapper: pad x -> 3 batch-tiled pallas_calls -> slice back.
# --------------------------------------------------------------------------
@functools.partial(jax.jit, static_argnames=("latent_dim", "output_dim", "block_b"))
def encoder_forward(x, pp, *, latent_dim, output_dim, block_b=512):
    f32, bf16 = jnp.float32, jnp.bfloat16
    B, D = x.shape
    DP, HP = pp["w1"].shape
    LP = pp["w2"].shape[1]
    OP = pp["w3"].shape[1]

    # Batch tiling: at least 2 tiles (one per v7x TensorCore via the
    # "parallel" axis) with minimal batch padding (< 8 rows when B > block_b
    # doesn't force larger tiles).
    nt_target = max(2, pl.cdiv(B, block_b))
    TB = _round_up(pl.cdiv(B, nt_target), 8)
    BP = _round_up(B, TB)
    nt = BP // TB
    valid_last = B - (nt - 1) * TB          # true rows in the last tile

    xp = jnp.pad(x, ((0, BP - B), (0, DP - D))).astype(bf16)

    cparams = pltpu.CompilerParams(dimension_semantics=("parallel",),
                                   vmem_limit_bytes=VMEM_LIMIT)
    inv_b = 1.0 / B
    kern = functools.partial(_linear_stats_kernel, valid_last=valid_last, tb=TB)

    # ---------------- stage 1: Linear(input_dim, 512) + h1 stats ----------------
    h1, st1 = pl.pallas_call(
        kern,
        grid=(nt,),
        in_specs=[
            pl.BlockSpec((TB, DP), lambda i: (i, 0)),
            pl.BlockSpec((DP, HP), lambda i: (0, 0)),
            pl.BlockSpec((1, HP), lambda i: (0, 0)),
        ],
        out_specs=(
            pl.BlockSpec((TB, HP), lambda i: (i, 0)),
            pl.BlockSpec((1, 2, HP), lambda i: (i, 0, 0)),
        ),
        out_shape=(
            jax.ShapeDtypeStruct((BP, HP), bf16),
            jax.ShapeDtypeStruct((nt, 2, HP), f32),
        ),
        compiler_params=cparams,
        cost_estimate=pl.CostEstimate(
            flops=2 * BP * DP * HP, transcendentals=0,
            bytes_accessed=BP * DP * 2 + DP * HP * 2 + BP * HP * 2 + nt * 2 * HP * 4),
    )(xp, pp["w1"], pp["b1"])

    # ---- BN1 statistics (full batch, f32) folded into the second linear ----
    tot1 = jnp.sum(st1, axis=0)                                   # (2, HP)
    m1 = tot1[0] * inv_b
    v1 = jnp.maximum(tot1[1] * inv_b - m1 * m1, 0.0)
    sc1 = pp["g1"] * jax.lax.rsqrt(v1 + EPS)                      # gamma/sqrt(var+eps)
    w2_eff = (pp["w2"] * sc1[:, None]).astype(bf16)               # BN1 scale -> W2
    b2_eff = (pp["b2"] + (pp["be1"] - m1 * sc1) @ pp["w2"]).reshape(1, LP)

    # ---------------- stage 2: Linear(512, latent) + h2 stats ----------------
    # (stats are taken from the in-register f32 h2; h2 itself is stored bf16)
    h2, st2 = pl.pallas_call(
        kern,
        grid=(nt,),
        in_specs=[
            pl.BlockSpec((TB, HP), lambda i: (i, 0)),
            pl.BlockSpec((HP, LP), lambda i: (0, 0)),
            pl.BlockSpec((1, LP), lambda i: (0, 0)),
        ],
        out_specs=(
            pl.BlockSpec((TB, LP), lambda i: (i, 0)),
            pl.BlockSpec((1, 2, LP), lambda i: (i, 0, 0)),
        ),
        out_shape=(
            jax.ShapeDtypeStruct((BP, LP), bf16),
            jax.ShapeDtypeStruct((nt, 2, LP), f32),
        ),
        compiler_params=cparams,
        cost_estimate=pl.CostEstimate(
            flops=2 * BP * HP * LP, transcendentals=0,
            bytes_accessed=BP * HP * 2 + HP * LP * 2 + BP * LP * 2 + nt * 2 * LP * 4),
    )(h1, w2_eff, b2_eff)

    # ---- BN2 statistics (full batch); fold scale/shift and also into W3/b3 ----
    tot2 = jnp.sum(st2, axis=0)
    m2 = tot2[0] * inv_b
    v2 = jnp.maximum(tot2[1] * inv_b - m2 * m2, 0.0)
    sc2 = pp["g2"] * jax.lax.rsqrt(v2 + EPS)                      # (LP,)
    sh2 = pp["be2"] - m2 * sc2                                    # (LP,)
    w3_eff = (pp["w3"] * sc2[:, None]).astype(bf16)
    b3_eff = (pp["b3"] + sh2 @ pp["w3"]).reshape(1, OP)

    # ---------------- stage 3: BN2 normalize + decoder Linear ----------------
    enc_p, dec_p = pl.pallas_call(
        _stage3_kernel,
        grid=(nt,),
        in_specs=[
            pl.BlockSpec((TB, LP), lambda i: (i, 0)),
            pl.BlockSpec((1, LP), lambda i: (0, 0)),
            pl.BlockSpec((1, LP), lambda i: (0, 0)),
            pl.BlockSpec((LP, OP), lambda i: (0, 0)),
            pl.BlockSpec((1, OP), lambda i: (0, 0)),
        ],
        out_specs=(
            pl.BlockSpec((TB, LP), lambda i: (i, 0)),
            pl.BlockSpec((TB, OP), lambda i: (i, 0)),
        ),
        out_shape=(
            jax.ShapeDtypeStruct((BP, LP), f32),
            jax.ShapeDtypeStruct((BP, OP), f32),
        ),
        compiler_params=cparams,
        cost_estimate=pl.CostEstimate(
            flops=2 * BP * LP * OP, transcendentals=0,
            bytes_accessed=BP * LP * 2 + LP * OP * 2 + BP * LP * 4 + BP * OP * 4),
    )(h2, sc2.reshape(1, LP), sh2.reshape(1, LP), w3_eff, b3_eff)

    # Slice padded batch rows / feature columns back to the true shapes.
    return enc_p[:B, :latent_dim], dec_p[:B, :output_dim]


# --------------------------------------------------------------------------
# Plain-JAX f32 reference (unpadded), for correctness checking.
# --------------------------------------------------------------------------
def reference_forward(x, p):
    def bn(h, g, be):
        m = jnp.mean(h, axis=0, keepdims=True)
        v = jnp.mean((h - m) ** 2, axis=0, keepdims=True)
        return (h - m) / jnp.sqrt(v + EPS) * g + be

    h1 = bn(x @ p["w1"] + p["b1"], p["g1"], p["be1"])
    enc = bn(h1 @ p["w2"] + p["b2"], p["g2"], p["be2"])
    dec = enc @ p["w3"] + p["b3"]
    return enc, dec


if __name__ == "__main__":
    # Small shapes that still exercise batch tiling/padding (200 -> 2x104 tiles)
    # and all lane-padding paths (500->512, 600->640, 60->128, 40->128).
    B, input_dim, latent_dim, output_dim = 200, 600, 60, 40

    key = jax.random.PRNGKey(0)
    kx, kp = jax.random.split(key)
    x = jax.random.normal(kx, (B, input_dim), jnp.float32)
    params = init_params(kp, input_dim, latent_dim, output_dim)
    pparams = prepare_params(params)          # one-time pad/cast (hoisted)

    enc, dec = encoder_forward(x, pparams,
                               latent_dim=latent_dim, output_dim=output_dim)
    jax.block_until_ready((enc, dec))

    enc_ref, dec_ref = reference_forward(x, params)
    assert enc.shape == (B, latent_dim) and dec.shape == (B, output_dim)
    # bf16 MXU operands and bf16 inter-stage activations (f32 accumulation and
    # f32 BN stats) -> relaxed tolerance.
    assert jnp.allclose(enc, enc_ref, atol=5e-2, rtol=5e-2), \
        float(jnp.max(jnp.abs(enc - enc_ref)))
    assert jnp.allclose(dec, dec_ref, atol=5e-2, rtol=5e-2), \
        float(jnp.max(jnp.abs(dec - dec_ref)))

    print("KERNEL_OK")
</pallas_src>

<mosaic_0001>
module attributes {stable_mosaic.version = 11 : i64} {
  func.func @_linear_stats_kernel(%arg0: i32, %arg1: memref<104x640xbf16, #tpu.memory_space<vmem>>, %arg2: memref<640x512xbf16, #tpu.memory_space<vmem>>, %arg3: memref<1x512xf32, #tpu.memory_space<vmem>>, %arg4: memref<104x512xbf16, #tpu.memory_space<vmem>>, %arg5: memref<1x2x512xf32, #tpu.memory_space<vmem>>) attributes {dimension_semantics = [#tpu.dimension_semantics<parallel>], iteration_bounds = array<i64: 2>, scalar_prefetch = 0 : i64, scratch_operands = 0 : i64, tpu.core_type = #tpu.core_type<tc>, window_params = [{transform_indices = @transform_0, window_bounds = array<i64: 104, 640>}, {pipeline_mode = #tpu.pipeline_mode<synchronous>, transform_indices = @transform_1, window_bounds = array<i64: 640, 512>}, {pipeline_mode = #tpu.pipeline_mode<synchronous>, transform_indices = @transform_2, window_bounds = array<i64: 1, 512>}, {transform_indices = @transform_3, window_bounds = array<i64: 104, 512>}, {transform_indices = @transform_4, window_bounds = array<i64: 1, 2, 512>}]} {
    %c0 = arith.constant 0 : index
    %c0_0 = arith.constant 0 : index
    %0 = vector.load %arg1[%c0, %c0_0] : memref<104x640xbf16, #tpu.memory_space<vmem>>, vector<104x640xbf16>
    %c0_1 = arith.constant 0 : index
    %c0_2 = arith.constant 0 : index
    %1 = vector.load %arg2[%c0_1, %c0_2] : memref<640x512xbf16, #tpu.memory_space<vmem>>, vector<640x512xbf16>
    %cst = arith.constant dense<0.000000e+00> : vector<104x512xf32>
    %2 = tpu.matmul %0, %1, %cst {dimension_numbers = #tpu.dot_dimension_numbers<[1], [0], [0], [1], [0, 0, 1, 1], [], []>} : vector<104x640xbf16>, vector<640x512xbf16>, vector<104x512xf32> -> vector<104x512xf32>
    %c0_3 = arith.constant 0 : index
    %c0_4 = arith.constant 0 : index
    %3 = vector.load %arg3[%c0_3, %c0_4] : memref<1x512xf32, #tpu.memory_space<vmem>>, vector<1x512xf32>
    %4 = vector.broadcast %3 : vector<1x512xf32> to vector<104x512xf32>
    %5 = arith.addf %2, %4 : vector<104x512xf32>
    %6 = arith.truncf %5 : vector<104x512xf32> to vector<104x512xbf16>
    %c0_5 = arith.constant 0 : index
    %c0_6 = arith.constant 0 : index
    %7 = vector.load %arg4[%c0_5, %c0_6] : memref<104x512xbf16, #tpu.memory_space<vmem>>, vector<104x512xbf16>
    tpu.vector_store %arg4[%c0_5, %c0_6], %6 {strides = array<i32>} : memref<104x512xbf16, #tpu.memory_space<vmem>>, vector<104x512xbf16>,
    %c1_i32 = arith.constant 1 : i32
    %8 = arith.cmpi eq, %arg0, %c1_i32 : i32
    %true = arith.constant true
    %9 = arith.xori %8, %true : i1
    %10 = arith.extui %9 : i1 to i32
    %c0_i32 = arith.constant 0 : i32
    %11 = arith.cmpi ne, %10, %c0_i32 : i32
    scf.if %11 {
      %cst_8 = arith.constant dense<0.000000e+00> : vector<512xf32>
      %14 = vector.multi_reduction <add>, %5, %cst_8 [0] : vector<104x512xf32> to vector<512xf32>
      %15 = vector.shape_cast %14 : vector<512xf32> to vector<1x512xf32>
      %16 = arith.mulf %5, %5 : vector<104x512xf32>
      %cst_9 = arith.constant dense<0.000000e+00> : vector<512xf32>
      %17 = vector.multi_reduction <add>, %16, %cst_9 [0] : vector<104x512xf32> to vector<512xf32>
      %18 = vector.shape_cast %17 : vector<512xf32> to vector<1x512xf32>
      %19 = tpu.concatenate %15, %18 in 0 : vector<1x512xf32>, vector<1x512xf32> -> vector<2x512xf32>
      %20 = vector.shape_cast %19 : vector<2x512xf32> to vector<1x2x512xf32>
      %c0_10 = arith.constant 0 : index
      %c0_11 = arith.constant 0 : index
      %c0_12 = arith.constant 0 : index
      %21 = vector.load %arg5[%c0_10, %c0_11, %c0_12] : memref<1x2x512xf32, #tpu.memory_space<vmem>>, vector<1x2x512xf32>
      tpu.vector_store %arg5[%c0_10, %c0_11, %c0_12], %20 {strides = array<i32>} : memref<1x2x512xf32, #tpu.memory_space<vmem>>, vector<1x2x512xf32>,
    } else {
    }
    %12 = arith.extui %8 : i1 to i32
    %c0_i32_7 = arith.constant 0 : i32
    %13 = arith.cmpi ne, %12, %c0_i32_7 : i32
    scf.if %13 {
      %14 = tpu.iota {dimensions = array<i32: 0>} : vector<104x1xi32>
      %c96_i32 = arith.constant 96 : i32
      %15 = vector.broadcast %c96_i32 : i32 to vector<104x1xi32>
      %16 = arith.cmpi slt, %14, %15 : vector<104x1xi32>
      %cst_8 = arith.constant 0.000000e+00 : f32
      %17 = vector.shape_cast %16 : vector<104x1xi1> to vector<104x1xi1>
      %18 = vector.broadcast %17 : vector<104x1xi1> to vector<104x512xi1>
      %19 = vector.broadcast %cst_8 : f32 to vector<104x512xf32>
      %20 = arith.select %18, %5, %19 : vector<104x512xi1>, vector<104x512xf32>
      %cst_9 = arith.constant dense<0.000000e+00> : vector<512xf32>
      %21 = vector.multi_reduction <add>, %20, %cst_9 [0] : vector<104x512xf32> to vector<512xf32>
      %22 = vector.shape_cast %21 : vector<512xf32> to vector<1x512xf32>
      %23 = arith.mulf %20, %20 : vector<104x512xf32>
      %cst_10 = arith.constant dense<0.000000e+00> : vector<512xf32>
      %24 = vector.multi_reduction <add>, %23, %cst_10 [0] : vector<104x512xf32> to vector<512xf32>
      %25 = vector.shape_cast %24 : vector<512xf32> to vector<1x512xf32>
      %26 = tpu.concatenate %22, %25 in 0 : vector<1x512xf32>, vector<1x512xf32> -> vector<2x512xf32>
      %27 = vector.shape_cast %26 : vector<2x512xf32> to vector<1x2x512xf32>
      %c0_11 = arith.constant 0 : index
      %c0_12 = arith.constant 0 : index
      %c0_13 = arith.constant 0 : index
      %28 = vector.load %arg5[%c0_11, %c0_12, %c0_13] : memref<1x2x512xf32, #tpu.memory_space<vmem>>, vector<1x2x512xf32>
      tpu.vector_store %arg5[%c0_11, %c0_12, %c0_13], %27 {strides = array<i32>} : memref<1x2x512xf32, #tpu.memory_space<vmem>>, vector<1x2x512xf32>,
    } else {
    }
    return
  }
  func.func @transform_0(%arg0: i32) -> (i32, i32) {
    %c0_i32 = arith.constant 0 : i32
    %c0_i32_0 = arith.constant 0 : i32
    return %arg0, %c0_i32 : i32, i32
  }
  func.func @transform_1(%arg0: i32) -> (i32, i32) {
    %c0_i32 = arith.constant 0 : i32
    %c0_i32_0 = arith.constant 0 : i32
    %c0_i32_1 = arith.constant 0 : i32
    return %c0_i32, %c0_i32_0 : i32, i32
  }
  func.func @transform_2(%arg0: i32) -> (i32, i32) {
    %c0_i32 = arith.constant 0 : i32
    %c0_i32_0 = arith.constant 0 : i32
    %c0_i32_1 = arith.constant 0 : i32
    return %c0_i32, %c0_i32_0 : i32, i32
  }
  func.func @transform_3(%arg0: i32) -> (i32, i32) {
    %c0_i32 = arith.constant 0 : i32
    %c0_i32_0 = arith.constant 0 : i32
    return %arg0, %c0_i32 : i32, i32
  }
  func.func @transform_4(%arg0: i32) -> (i32, i32, i32) {
    %c0_i32 = arith.constant 0 : i32
    %c0_i32_0 = arith.constant 0 : i32
    %c0_i32_1 = arith.constant 0 : i32
    return %arg0, %c0_i32, %c0_i32_0 : i32, i32, i32
  }
}

module attributes {stable_mosaic.version = 11 : i64} {
  func.func @_linear_stats_kernel(%arg0: i32, %arg1: memref<104x512xbf16, #tpu.memory_space<vmem>>, %arg2: memref<512x128xbf16, #tpu.memory_space<vmem>>, %arg3: memref<1x128xf32, #tpu.memory_space<vmem>>, %arg4: memref<104x128xbf16, #tpu.memory_space<vmem>>, %arg5: memref<1x2x128xf32, #tpu.memory_space<vmem>>) attributes {dimension_semantics = [#tpu.dimension_semantics<parallel>], iteration_bounds = array<i64: 2>, scalar_prefetch = 0 : i64, scratch_operands = 0 : i64, tpu.core_type = #tpu.core_type<tc>, window_params = [{transform_indices = @transform_0, window_bounds = array<i64: 104, 512>}, {pipeline_mode = #tpu.pipeline_mode<synchronous>, transform_indices = @transform_1, window_bounds = array<i64: 512, 128>}, {pipeline_mode = #tpu.pipeline_mode<synchronous>, transform_indices = @transform_2, window_bounds = array<i64: 1, 128>}, {transform_indices = @transform_3, window_bounds = array<i64: 104, 128>}, {transform_indices = @transform_4, window_bounds = array<i64: 1, 2, 128>}]} {
    %c0 = arith.constant 0 : index
    %c0_0 = arith.constant 0 : index
    %0 = vector.load %arg1[%c0, %c0_0] : memref<104x512xbf16, #tpu.memory_space<vmem>>, vector<104x512xbf16>
    %c0_1 = arith.constant 0 : index
    %c0_2 = arith.constant 0 : index
    %1 = vector.load %arg2[%c0_1, %c0_2] : memref<512x128xbf16, #tpu.memory_space<vmem>>, vector<512x128xbf16>
    %cst = arith.constant dense<0.000000e+00> : vector<104x128xf32>
    %2 = tpu.matmul %0, %1, %cst {dimension_numbers = #tpu.dot_dimension_numbers<[1], [0], [0], [1], [0, 0, 1, 1], [], []>} : vector<104x512xbf16>, vector<512x128xbf16>, vector<104x128xf32> -> vector<104x128xf32>
    %c0_3 = arith.constant 0 : index
    %c0_4 = arith.constant 0 : index
    %3 = vector.load %arg3[%c0_3, %c0_4] : memref<1x128xf32, #tpu.memory_space<vmem>>, vector<1x128xf32>
    %4 = vector.broadcast %3 : vector<1x128xf32> to vector<104x128xf32>
    %5 = arith.addf %2, %4 : vector<104x128xf32>
    %6 = arith.truncf %5 : vector<104x128xf32> to vector<104x128xbf16>
    %c0_5 = arith.constant 0 : index
    %c0_6 = arith.constant 0 : index
    %7 = vector.load %arg4[%c0_5, %c0_6] : memref<104x128xbf16, #tpu.memory_space<vmem>>, vector<104x128xbf16>
    tpu.vector_store %arg4[%c0_5, %c0_6], %6 {strides = array<i32>} : memref<104x128xbf16, #tpu.memory_space<vmem>>, vector<104x128xbf16>,
    %c1_i32 = arith.constant 1 : i32
    %8 = arith.cmpi eq, %arg0, %c1_i32 : i32
    %true = arith.constant true
    %9 = arith.xori %8, %true : i1
    %10 = arith.extui %9 : i1 to i32
    %c0_i32 = arith.constant 0 : i32
    %11 = arith.cmpi ne, %10, %c0_i32 : i32
    scf.if %11 {
      %cst_8 = arith.constant dense<0.000000e+00> : vector<128xf32>
      %14 = vector.multi_reduction <add>, %5, %cst_8 [0] : vector<104x128xf32> to vector<128xf32>
      %15 = vector.shape_cast %14 : vector<128xf32> to vector<1x128xf32>
      %16 = arith.mulf %5, %5 : vector<104x128xf32>
      %cst_9 = arith.constant dense<0.000000e+00> : vector<128xf32>
      %17 = vector.multi_reduction <add>, %16, %cst_9 [0] : vector<104x128xf32> to vector<128xf32>
      %18 = vector.shape_cast %17 : vector<128xf32> to vector<1x128xf32>
      %19 = tpu.concatenate %15, %18 in 0 : vector<1x128xf32>, vector<1x128xf32> -> vector<2x128xf32>
      %20 = vector.shape_cast %19 : vector<2x128xf32> to vector<1x2x128xf32>
      %c0_10 = arith.constant 0 : index
      %c0_11 = arith.constant 0 : index
      %c0_12 = arith.constant 0 : index
      %21 = vector.load %arg5[%c0_10, %c0_11, %c0_12] : memref<1x2x128xf32, #tpu.memory_space<vmem>>, vector<1x2x128xf32>
      tpu.vector_store %arg5[%c0_10, %c0_11, %c0_12], %20 {strides = array<i32>} : memref<1x2x128xf32, #tpu.memory_space<vmem>>, vector<1x2x128xf32>,
    } else {
    }
    %12 = arith.extui %8 : i1 to i32
    %c0_i32_7 = arith.constant 0 : i32
    %13 = arith.cmpi ne, %12, %c0_i32_7 : i32
    scf.if %13 {
      %14 = tpu.iota {dimensions = array<i32: 0>} : vector<104x1xi32>
      %c96_i32 = arith.constant 96 : i32
      %15 = vector.broadcast %c96_i32 : i32 to vector<104x1xi32>
      %16 = arith.cmpi slt, %14, %15 : vector<104x1xi32>
      %cst_8 = arith.constant 0.000000e+00 : f32
      %17 = vector.shape_cast %16 : vector<104x1xi1> to vector<104x1xi1>
      %18 = vector.broadcast %17 : vector<104x1xi1> to vector<104x128xi1>
      %19 = vector.broadcast %cst_8 : f32 to vector<104x128xf32>
      %20 = arith.select %18, %5, %19 : vector<104x128xi1>, vector<104x128xf32>
      %cst_9 = arith.constant dense<0.000000e+00> : vector<128xf32>
      %21 = vector.multi_reduction <add>, %20, %cst_9 [0] : vector<104x128xf32> to vector<128xf32>
      %22 = vector.shape_cast %21 : vector<128xf32> to vector<1x128xf32>
      %23 = arith.mulf %20, %20 : vector<104x128xf32>
      %cst_10 = arith.constant dense<0.000000e+00> : vector<128xf32>
      %24 = vector.multi_reduction <add>, %23, %cst_10 [0] : vector<104x128xf32> to vector<128xf32>
      %25 = vector.shape_cast %24 : vector<128xf32> to vector<1x128xf32>
      %26 = tpu.concatenate %22, %25 in 0 : vector<1x128xf32>, vector<1x128xf32> -> vector<2x128xf32>
      %27 = vector.shape_cast %26 : vector<2x128xf32> to vector<1x2x128xf32>
      %c0_11 = arith.constant 0 : index
      %c0_12 = arith.constant 0 : index
      %c0_13 = arith.constant 0 : index
      %28 = vector.load %arg5[%c0_11, %c0_12, %c0_13] : memref<1x2x128xf32, #tpu.memory_space<vmem>>, vector<1x2x128xf32>
      tpu.vector_store %arg5[%c0_11, %c0_12, %c0_13], %27 {strides = array<i32>} : memref<1x2x128xf32, #tpu.memory_space<vmem>>, vector<1x2x128xf32>,
    } else {
    }
    return
  }
  func.func @transform_0(%arg0: i32) -> (i32, i32) {
    %c0_i32 = arith.constant 0 : i32
    %c0_i32_0 = arith.constant 0 : i32
    return %arg0, %c0_i32 : i32, i32
  }
  func.func @transform_1(%arg0: i32) -> (i32, i32) {
    %c0_i32 = arith.constant 0 : i32
    %c0_i32_0 = arith.constant 0 : i32
    %c0_i32_1 = arith.constant 0 : i32
    return %c0_i32, %c0_i32_0 : i32, i32
  }
  func.func @transform_2(%arg0: i32) -> (i32, i32) {
    %c0_i32 = arith.constant 0 : i32
    %c0_i32_0 = arith.constant 0 : i32
    %c0_i32_1 = arith.constant 0 : i32
    return %c0_i32, %c0_i32_0 : i32, i32
  }
  func.func @transform_3(%arg0: i32) -> (i32, i32) {
    %c0_i32 = arith.constant 0 : i32
    %c0_i32_0 = arith.constant 0 : i32
    return %arg0, %c0_i32 : i32, i32
  }
  func.func @transform_4(%arg0: i32) -> (i32, i32, i32) {
    %c0_i32 = arith.constant 0 : i32
    %c0_i32_0 = arith.constant 0 : i32
    %c0_i32_1 = arith.constant 0 : i32
    return %arg0, %c0_i32, %c0_i32_0 : i32, i32, i32
  }
}

module attributes {stable_mosaic.version = 11 : i64} {
  func.func @_stage3_kernel(%arg0: i32, %arg1: memref<104x128xbf16, #tpu.memory_space<vmem>>, %arg2: memref<1x128xf32, #tpu.memory_space<vmem>>, %arg3: memref<1x128xf32, #tpu.memory_space<vmem>>, %arg4: memref<128x128xbf16, #tpu.memory_space<vmem>>, %arg5: memref<1x128xf32, #tpu.memory_space<vmem>>, %arg6: memref<104x128xf32, #tpu.memory_space<vmem>>, %arg7: memref<104x128xf32, #tpu.memory_space<vmem>>) attributes {dimension_semantics = [#tpu.dimension_semantics<parallel>], iteration_bounds = array<i64: 2>, scalar_prefetch = 0 : i64, scratch_operands = 0 : i64, tpu.core_type = #tpu.core_type<tc>, window_params = [{transform_indices = @transform_0, window_bounds = array<i64: 104, 128>}, {pipeline_mode = #tpu.pipeline_mode<synchronous>, transform_indices = @transform_1, window_bounds = array<i64: 1, 128>}, {pipeline_mode = #tpu.pipeline_mode<synchronous>, transform_indices = @transform_2, window_bounds = array<i64: 1, 128>}, {pipeline_mode = #tpu.pipeline_mode<synchronous>, transform_indices = @transform_3, window_bounds = array<i64: 128, 128>}, {pipeline_mode = #tpu.pipeline_mode<synchronous>, transform_indices = @transform_4, window_bounds = array<i64: 1, 128>}, {transform_indices = @transform_5, window_bounds = array<i64: 104, 128>}, {transform_indices = @transform_6, window_bounds = array<i64: 104, 128>}]} {
    %c0 = arith.constant 0 : index
    %c0_0 = arith.constant 0 : index
    %0 = vector.load %arg1[%c0, %c0_0] : memref<104x128xbf16, #tpu.memory_space<vmem>>, vector<104x128xbf16>
    %1 = arith.extf %0 : vector<104x128xbf16> to vector<104x128xf32>
    %c0_1 = arith.constant 0 : index
    %c0_2 = arith.constant 0 : index
    %2 = vector.load %arg2[%c0_1, %c0_2] : memref<1x128xf32, #tpu.memory_space<vmem>>, vector<1x128xf32>
    %3 = vector.broadcast %2 : vector<1x128xf32> to vector<104x128xf32>
    %4 = arith.mulf %1, %3 : vector<104x128xf32>
    %c0_3 = arith.constant 0 : index
    %c0_4 = arith.constant 0 : index
    %5 = vector.load %arg3[%c0_3, %c0_4] : memref<1x128xf32, #tpu.memory_space<vmem>>, vector<1x128xf32>
    %6 = vector.broadcast %5 : vector<1x128xf32> to vector<104x128xf32>
    %7 = arith.addf %4, %6 : vector<104x128xf32>
    %c0_5 = arith.constant 0 : index
    %c0_6 = arith.constant 0 : index
    %8 = vector.load %arg6[%c0_5, %c0_6] : memref<104x128xf32, #tpu.memory_space<vmem>>, vector<104x128xf32>
    tpu.vector_store %arg6[%c0_5, %c0_6], %7 {strides = array<i32>} : memref<104x128xf32, #tpu.memory_space<vmem>>, vector<104x128xf32>,
    %c0_7 = arith.constant 0 : index
    %c0_8 = arith.constant 0 : index
    %9 = vector.load %arg4[%c0_7, %c0_8] : memref<128x128xbf16, #tpu.memory_space<vmem>>, vector<128x128xbf16>
    %cst = arith.constant dense<0.000000e+00> : vector<104x128xf32>
    %10 = tpu.matmul %0, %9, %cst {dimension_numbers = #tpu.dot_dimension_numbers<[1], [0], [0], [1], [0, 0, 1, 1], [], []>} : vector<104x128xbf16>, vector<128x128xbf16>, vector<104x128xf32> -> vector<104x128xf32>
    %c0_9 = arith.constant 0 : index
    %c0_10 = arith.constant 0 : index
    %11 = vector.load %arg5[%c0_9, %c0_10] : memref<1x128xf32, #tpu.memory_space<vmem>>, vector<1x128xf32>
    %12 = vector.broadcast %11 : vector<1x128xf32> to vector<104x128xf32>
    %13 = arith.addf %10, %12 : vector<104x128xf32>
    %c0_11 = arith.constant 0 : index
    %c0_12 = arith.constant 0 : index
    %14 = vector.load %arg7[%c0_11, %c0_12] : memref<104x128xf32, #tpu.memory_space<vmem>>, vector<104x128xf32>
    tpu.vector_store %arg7[%c0_11, %c0_12], %13 {strides = array<i32>} : memref<104x128xf32, #tpu.memory_space<vmem>>, vector<104x128xf32>,
    return
  }
  func.func @transform_0(%arg0: i32) -> (i32, i32) {
    %c0_i32 = arith.constant 0 : i32
    %c0_i32_0 = arith.constant 0 : i32
    return %arg0, %c0_i32 : i32, i32
  }
  func.func @transform_1(%arg0: i32) -> (i32, i32) {
    %c0_i32 = arith.constant 0 : i32
    %c0_i32_0 = arith.constant 0 : i32
    %c0_i32_1 = arith.constant 0 : i32
    return %c0_i32, %c0_i32_0 : i32, i32
  }
  func.func @transform_2(%arg0: i32) -> (i32, i32) {
    %c0_i32 = arith.constant 0 : i32
    %c0_i32_0 = arith.constant 0 : i32
    %c0_i32_1 = arith.constant 0 : i32
    return %c0_i32, %c0_i32_0 : i32, i32
  }
  func.func @transform_3(%arg0: i32) -> (i32, i32) {
    %c0_i32 = arith.constant 0 : i32
    %c0_i32_0 = arith.constant 0 : i32
    %c0_i32_1 = arith.constant 0 : i32
    return %c0_i32, %c0_i32_0 : i32, i32
  }
  func.func @transform_4(%arg0: i32) -> (i32, i32) {
    %c0_i32 = arith.constant 0 : i32
    %c0_i32_0 = arith.constant 0 : i32
    %c0_i32_1 = arith.constant 0 : i32
    return %c0_i32, %c0_i32_0 : i32, i32
  }
  func.func @transform_5(%arg0: i32) -> (i32, i32) {
    %c0_i32 = arith.constant 0 : i32
    %c0_i32_0 = arith.constant 0 : i32
    return %arg0, %c0_i32 : i32, i32
  }
  func.func @transform_6(%arg0: i32) -> (i32, i32) {
    %c0_i32 = arith.constant 0 : i32
    %c0_i32_0 = arith.constant 0 : i32
    return %arg0, %c0_i32 : i32, i32
  }
}

</mosaic_0001>

<llo_original>
// kernel: encoder_forward.5
$region0: #{encoder_forward.5}
  #allocation0 [shape = 'u32[]', space=smem, size = 0x4, offset = 0x4, fixed_abs, tag = 'smem constant byte address 0x4 - core index']
  #allocation1 [shape = 'u32[144,128]{1,0:T(1,128)}', space=vmem, size = 0x12000, scoped, tag = 'internal scratch']
  %s0 = inlined_call_operand.vmem [shape: bf16[208,128], index: 0, kind: input, shape index: {}]
  %s1 = inlined_call_operand.vmem [shape: f32[1,128], index: 1, kind: input, shape index: {}]
  %s2 = inlined_call_operand.vmem [shape: f32[1,128], index: 2, kind: input, shape index: {}]
  %s3 = inlined_call_operand.vmem [shape: bf16[128,128], index: 3, kind: input, shape index: {}]
  %s4 = inlined_call_operand.vmem [shape: f32[1,128], index: 4, kind: input, shape index: {}]
  %s5 = inlined_call_operand.vmem [shape: f32[208,128], index: 5, kind: output, shape index: {0}]
  %s6 = inlined_call_operand.vmem [shape: f32[208,128], index: 6, kind: output, shape index: {1}]
  %7 = xla_tuple %s5, %s6
  %s8 = sld [smem:[#allocation0]]
  $region61: #{encoder_forward.5} parent=0
    _
  %s10 = ssub.s32 1, %s8
  %s11 = scalar_select 0, %s10, %s8
  loop: start=0, step=1, limit=4
  $region2: #{encoder_forward.5} parent=0 // loop_pre_header
    _
  $region3: #{encoder_forward.5} parent=0 // loop_header
    %s13 = sphi 0, %s17
    %p14 = scmp.ge.s32.totalorder %s13, 4
    %s23 = sphi 0, %s25
    %s26 = sphi 0, %s23
    %s27 = sphi 0, %s26
    %s43 = sphi 0, %s27
    %s47 = sphi 0, %s47
    %s49 = sphi 0, %s47
    %s50 = sphi 0, %s49
    %s64 = sphi 0, %s50
    %s68 = sphi 0, %s68
    %s70 = sphi 0, %s68
    %s71 = sphi 0, %s70
    %s85 = sphi 0, %s71
    %s89 = sphi 0, %s89
    %s91 = sphi 0, %s89
    %s92 = sphi 0, %s91
    %s106 = sphi 0, %s92
    %s110 = sphi 0, %s110
    %s112 = sphi 0, %s110
    %s113 = sphi 0, %s112
    %s127 = sphi 0, %s113
    %s133 = sphi 0, %s135
    %s136 = sphi 0, %s133
    %s137 = sphi 0, %s136
    %s153 = sphi 0, %s137
    %s159 = sphi 0, %s161
    %s162 = sphi 0, %s159
    %s163 = sphi 0, %s162
    %s179 = sphi 0, %s163
  $region4: #{encoder_forward.5} parent=0 // loop_header_branch
    %16 = sbr.rel (%p14) target = $region8
  $region5: #{encoder_forward.5} parent=0 // loop_body
    %s18 = ssub.s32 %s13, 1
    %s19 = ssub.s32 %s13, 2
    %s20 = sadd.s32 %s13, 1
    %s21 = ssub.s32 %s13, %s20
    %p22 = scmp.eq.s32.totalorder %s21, 0
    %s24 = sadd.s32 %s23, 1
    %s25 = scalar_select %p22, %s23, %s24
    %p28 = pneg %p22
    %p29 = scmp.eq.s32.totalorder %s13, 1
    %p30 = por %p28, %p29
    %p31 = scmp.ne.s32.totalorder %s23, %s26
    %p32 = scmp.eq.s32.totalorder %s13, 0
    %p33 = por %p31, %p32
    %p34 = scmp.ne.s32.totalorder %s23, %s26
    %p35 = scmp.eq.s32.totalorder %s18, 1
    %p36 = por %p34, %p35
    %p37 = scmp.ne.s32.totalorder %s26, %s27
    %p38 = scmp.eq.s32.totalorder %s18, 0
    %p39 = por %p37, %p38
    %p40 = scmp.ne.s32.totalorder %s26, %s27
    %p41 = scmp.eq.s32.totalorder %s19, 1
    %p42 = por %p40, %p41
    %p44 = scmp.ne.s32.totalorder %s27, %s43
    %p45 = scmp.eq.s32.totalorder %s19, 0
    %p46 = por %p44, %p45
    %s48 = sadd.s32 %s47, 1
    %p51 = scmp.eq.s32.totalorder %s13, 1
    %p52 = scmp.ne.s32.totalorder %s47, %s49
    %p53 = scmp.eq.s32.totalorder %s13, 0
    %p54 = por %p52, %p53
    %p55 = scmp.ne.s32.totalorder %s47, %s49
    %p56 = scmp.eq.s32.totalorder %s18, 1
    %p57 = por %p55, %p56
    %p58 = scmp.ne.s32.totalorder %s49, %s50
    %p59 = scmp.eq.s32.totalorder %s18, 0
    %p60 = por %p58, %p59
    %p61 = scmp.ne.s32.totalorder %s49, %s50
    %p62 = scmp.eq.s32.totalorder %s19, 1
    %p63 = por %p61, %p62
    %p65 = scmp.ne.s32.totalorder %s50, %s64
    %p66 = scmp.eq.s32.totalorder %s19, 0
    %p67 = por %p65, %p66
    %s69 = sadd.s32 %s68, 1
    %p72 = scmp.eq.s32.totalorder %s13, 1
    %p73 = scmp.ne.s32.totalorder %s68, %s70
    %p74 = scmp.eq.s32.totalorder %s13, 0
    %p75 = por %p73, %p74
    %p76 = scmp.ne.s32.totalorder %s68, %s70
    %p77 = scmp.eq.s32.totalorder %s18, 1
    %p78 = por %p76, %p77
    %p79 = scmp.ne.s32.totalorder %s70, %s71
    %p80 = scmp.eq.s32.totalorder %s18, 0
    %p81 = por %p79, %p80
    %p82 = scmp.ne.s32.totalorder %s70, %s71
    %p83 = scmp.eq.s32.totalorder %s19, 1
    %p84 = por %p82, %p83
    %p86 = scmp.ne.s32.totalorder %s71, %s85
    %p87 = scmp.eq.s32.totalorder %s19, 0
    %p88 = por %p86, %p87
    %s90 = sadd.s32 %s89, 1
    %p93 = scmp.eq.s32.totalorder %s13, 1
    %p94 = scmp.ne.s32.totalorder %s89, %s91
    %p95 = scmp.eq.s32.totalorder %s13, 0
    %p96 = por %p94, %p95
    %p97 = scmp.ne.s32.totalorder %s89, %s91
    %p98 = scmp.eq.s32.totalorder %s18, 1
    %p99 = por %p97, %p98
    %p100 = scmp.ne.s32.totalorder %s91, %s92
    %p101 = scmp.eq.s32.totalorder %s18, 0
    %p102 = por %p100, %p101
    %p103 = scmp.ne.s32.totalorder %s91, %s92
    %p104 = scmp.eq.s32.totalorder %s19, 1
    %p105 = por %p103, %p104
    %p107 = scmp.ne.s32.totalorder %s92, %s106
    %p108 = scmp.eq.s32.totalorder %s19, 0
    %p109 = por %p107, %p108
    %s111 = sadd.s32 %s110, 1
    %p114 = scmp.eq.s32.totalorder %s13, 1
    %p115 = scmp.ne.s32.totalorder %s110, %s112
    %p116 = scmp.eq.s32.totalorder %s13, 0
    %p117 = por %p115, %p116
    %p118 = scmp.ne.s32.totalorder %s110, %s112
    %p119 = scmp.eq.s32.totalorder %s18, 1
    %p120 = por %p118, %p119
    %p121 = scmp.ne.s32.totalorder %s112, %s113
    %p122 = scmp.eq.s32.totalorder %s18, 0
    %p123 = por %p121, %p122
    %p124 = scmp.ne.s32.totalorder %s112, %s113
    %p125 = scmp.eq.s32.totalorder %s19, 1
    %p126 = por %p124, %p125
    %p128 = scmp.ne.s32.totalorder %s113, %s127
    %p129 = scmp.eq.s32.totalorder %s19, 0
    %p130 = por %p128, %p129
    %s131 = ssub.s32 %s13, %s20
    %p132 = scmp.eq.s32.totalorder %s131, 0
    %s134 = sadd.s32 %s133, 1
    %s135 = scalar_select %p132, %s133, %s134
    %p138 = pneg %p132
    %p139 = scmp.eq.s32.totalorder %s13, 1
    %p140 = por %p138, %p139
    %p141 = scmp.ne.s32.totalorder %s133, %s136
    %p142 = scmp.eq.s32.totalorder %s13, 0
    %p143 = por %p141, %p142
    %p144 = scmp.ne.s32.totalorder %s133, %s136
    %p145 = scmp.eq.s32.totalorder %s18, 1
    %p146 = por %p144, %p145
    %p147 = scmp.ne.s32.totalorder %s136, %s137
    %p148 = scmp.eq.s32.totalorder %s18, 0
    %p149 = por %p147, %p148
    %p150 = scmp.ne.s32.totalorder %s136, %s137
    %p151 = scmp.eq.s32.totalorder %s19, 1
    %p152 = por %p150, %p151
    %p154 = scmp.ne.s32.totalorder %s137, %s153
    %p155 = scmp.eq.s32.totalorder %s19, 0
    %p156 = por %p154, %p155
    %s157 = ssub.s32 %s13, %s20
    %p158 = scmp.eq.s32.totalorder %s157, 0
    %s160 = sadd.s32 %s159, 1
    %s161 = scalar_select %p158, %s159, %s160
    %p164 = pneg %p158
    %p165 = scmp.eq.s32.totalorder %s13, 1
    %p166 = por %p164, %p165
    %p167 = scmp.ne.s32.totalorder %s159, %s162
    %p168 = scmp.eq.s32.totalorder %s13, 0
    %p169 = por %p167, %p168
    %p170 = scmp.ne.s32.totalorder %s159, %s162
    %p171 = scmp.eq.s32.totalorder %s18, 1
    %p172 = por %p170, %p171
    %p173 = scmp.ne.s32.totalorder %s162, %s163
    %p174 = scmp.eq.s32.totalorder %s18, 0
    %p175 = por %p173, %p174
    %p176 = scmp.ne.s32.totalorder %s162, %s163
    %p177 = scmp.eq.s32.totalorder %s19, 1
    %p178 = por %p176, %p177
    %p180 = scmp.ne.s32.totalorder %s163, %s179
    %p181 = scmp.eq.s32.totalorder %s19, 0
    %p182 = por %p180, %p181
    %p183 = scmp.le.s32.totalorder 1, %s13
    %p184 = scmp.lt.s32.totalorder %s13, 3
    %p185 = pnand %p183, %p184
    %p186 = pneg %p185
    // Predicated region
    $region9: #{encoder_forward.5} parent=5 // pred_check
      _
    $region10: #{encoder_forward.5} parent=5 // pred_check_branch
      %188 = sbr.rel (%p185) target = $region12
    $region11: #{encoder_forward.5} parent=5 // pred_region
      %s189 = ssub.s32 %s13, 1
      // Predicated region
      $region13: #{encoder_forward.5} parent=11 // pred_check
        %p190 = pneg %p60
      $region14: #{encoder_forward.5} parent=11 // pred_check_branch
        %192 = sbr.rel (%p190) target = $region16
      $region15: #{encoder_forward.5} parent=11 // pred_region
        _
      $region16: #{encoder_forward.5} parent=11 // pred_fallthru
        _
      // Predicated region
      $region17: #{encoder_forward.5} parent=11 // pred_check
        %p193 = pneg %p81
      $region18: #{encoder_forward.5} parent=11 // pred_check_branch
        %195 = sbr.rel (%p193) target = $region20
      $region19: #{encoder_forward.5} parent=11 // pred_region
        _
      $region20: #{encoder_forward.5} parent=11 // pred_fallthru
        _
      // Predicated region
      $region21: #{encoder_forward.5} parent=11 // pred_check
        %p196 = pneg %p102
      $region22: #{encoder_forward.5} parent=11 // pred_check_branch
        %198 = sbr.rel (%p196) target = $region24
      $region23: #{encoder_forward.5} parent=11 // pred_region
        _
      $region24: #{encoder_forward.5} parent=11 // pred_fallthru
        _
      // Predicated region
      $region25: #{encoder_forward.5} parent=11 // pred_check
        %p199 = pneg %p123
      $region26: #{encoder_forward.5} parent=11 // pred_check_branch
        %201 = sbr.rel (%p199) target = $region28
      $region27: #{encoder_forward.5} parent=11 // pred_region
        _
      $region28: #{encoder_forward.5} parent=11 // pred_fallthru
        _
    $region12: #{encoder_forward.5} parent=5 // pred_fallthru
      _
    %p202 = scmp.lt.s32.totalorder %s13, 2
    // Predicated region
    $region29: #{encoder_forward.5} parent=5 // pred_check
      %p203 = pneg %p202
    $region30: #{encoder_forward.5} parent=5 // pred_check_branch
      %205 = sbr.rel (%p203) target = $region32
    $region31: #{encoder_forward.5} parent=5 // pred_region
      // Predicated region
      $region33: #{encoder_forward.5} parent=31 // pred_check
        %p206 = pneg %p33
      $region34: #{encoder_forward.5} parent=31 // pred_check_branch
        %208 = sbr.rel (%p206) target = $region36
      $region35: #{encoder_forward.5} parent=31 // pred_region
        %s209 = smul.u32 13, %s13
        %p210 = scmp.lt.s32.totalorder %s209, 25
        %s211 = scalar_select %p210, %s209, 25
        %s212 = smul.addr %s211, 4
        %s213 = scalar_lea.vmem %s0, %s212
        %s214 = smul.u32 13, %s13
      $region36: #{encoder_forward.5} parent=31 // pred_fallthru
        _
    $region32: #{encoder_forward.5} parent=5 // pred_fallthru
      _
    %p215 = scmp.le.s32.totalorder 1, %s13
    %p216 = scmp.lt.s32.totalorder %s13, 3
    %p217 = pnand %p215, %p216
    %p218 = pneg %p217
    // Predicated region
    $region37: #{encoder_forward.5} parent=5 // pred_check
      _
    $region38: #{encoder_forward.5} parent=5 // pred_check_branch
      %220 = sbr.rel (%p217) target = $region40
    $region39: #{encoder_forward.5} parent=5 // pred_region
      %s221 = ssub.s32 %s13, 1
      %s222 = smul.u32 13, %s18
      %p223 = scmp.lt.s32.totalorder %s222, 25
      %s224 = scalar_select %p223, %s222, 25
      %s225 = smul.addr %s224, 4
      %s226 = scalar_lea.vmem %s0, %s225
      %p227 = pneg %p39
      %p228 = pneg %p36
      %p229 = pneg %p60
      %p230 = pneg %p57
      %p231 = pneg %p81
      %p232 = pneg %p78
      %p233 = pneg %p102
      %p234 = pneg %p99
      %p235 = pneg %p123
      %p236 = pneg %p120
      %p237 = pneg %p149
      %p238 = pneg %p146
      %s239 = smul.u32 13, %s18
      %p240 = scmp.lt.s32.totalorder %s239, 25
      %s241 = scalar_select %p240, %s239, 25
      %s242 = smul.addr %s241, 8
      %s243 = scalar_lea.vmem %s5, %s242
      %p244 = pneg %p175
      %p245 = pneg %p172
      %s246 = smul.u32 13, %s18
      %p247 = scmp.lt.s32.totalorder %s246, 25
      %s248 = scalar_select %p247, %s246, 25
      %s249 = smul.addr %s248, 8
      %s250 = scalar_lea.vmem %s6, %s249
      %s251 = smul.u32 13, %s18
      %p252 = scmp.lt.s32.totalorder %s251, 25
      %s253 = scalar_select %p252, %s251, 25
      %s254 = smul.addr %s253, 4
      %s255 = scalar_lea.vmem %s0, %s254
      %s256 = smul.u32 13, %s18
      %s257 = smul.u32 13, %s18
      %p258 = scmp.lt.s32.totalorder %s257, 25
      %s259 = scalar_select %p258, %s257, 25
      %s260 = smul.addr %s259, 8
      %s261 = scalar_lea.vmem %s5, %s260
      %s262 = smul.u32 13, %s18
      %s263 = smul.u32 13, %s18
      %p264 = scmp.lt.s32.totalorder %s263, 25
      %s265 = scalar_select %p264, %s263, 25
      %s266 = smul.addr %s265, 8
      %s267 = scalar_lea.vmem %s6, %s266
      %s268 = smul.u32 13, %s18
      %v270 = vld [vmem:[%s255] sm:$0xf]
      %v271 = vld [vmem:[%s255 + $0x4] sm:$0xf]
      %v272 = vld [vmem:[%s255 + $0x8] sm:$0xf]
      %v273 = vld [vmem:[%s255 + $0xc] sm:$0xf]
      %v274 = vld [vmem:[%s255 + $0x10] sm:$0xf]
      %v275 = vld [vmem:[%s255 + $0x14] sm:$0xf]
      %v276 = vld [vmem:[%s255 + $0x18] sm:$0xf]
      %v277 = vld [vmem:[%s255 + $0x1c] sm:$0xf]
      %v278 = vld [vmem:[%s255 + $0x20] sm:$0xf]
      %v279 = vld [vmem:[%s255 + $0x24] sm:$0xf]
      %v280 = vld [vmem:[%s255 + $0x28] sm:$0xf]
      %v281 = vld [vmem:[%s255 + $0x2c] sm:$0xf]
      %v282 = vld [vmem:[%s255 + $0x30] sm:$0xf]
      %v283 = vunpack.c.l.bf16 %v270
      %v284 = vunpack.c.l.bf16 %v271
      %v285 = vunpack.c.l.bf16 %v272
      %v286 = vunpack.c.l.bf16 %v273
      %v287 = vunpack.c.l.bf16 %v274
      %v288 = vunpack.c.l.bf16 %v275
      %v289 = vunpack.c.l.bf16 %v276
      %v290 = vunpack.c.l.bf16 %v277
      %v291 = vunpack.c.l.bf16 %v278
      %v292 = vunpack.c.l.bf16 %v279
      %v293 = vunpack.c.l.bf16 %v280
      %v294 = vunpack.c.l.bf16 %v281
      %v295 = vunpack.c.l.bf16 %v282
      %v296 = vld [vmem:[%s1] sm:$0x1]
      %v298 = vlaneseq
      %v299 = vshrl.u32 %v298, 7
      %v300 = vsub.s32 0, %v299
      %v301 = vrot.slane %v296, %v300
      %v303 = vmul.f32 %v283, %v301
      %v304 = vmul.f32 %v284, %v301
      %v305 = vmul.f32 %v285, %v301
      %v306 = vmul.f32 %v286, %v301
      %v307 = vmul.f32 %v287, %v301
      %v308 = vmul.f32 %v288, %v301
      %v309 = vmul.f32 %v289, %v301
      %v310 = vmul.f32 %v290, %v301
      %v311 = vmul.f32 %v291, %v301
      %v312 = vmul.f32 %v292, %v301
      %v313 = vmul.f32 %v293, %v301
      %v314 = vmul.f32 %v294, %v301
      %v315 = vmul.f32 %v295, %v301
      %v316 = vld [vmem:[%s2] sm:$0x1]
      %v318 = vlaneseq
      %v319 = vshrl.u32 %v318, 7
      %v320 = vsub.s32 0, %v319
      %v321 = vrot.slane %v316, %v320
      %v323 = vadd.f32 %v303, %v321
      %v324 = vadd.f32 %v304, %v321
      %v325 = vadd.f32 %v305, %v321
      %v326 = vadd.f32 %v306, %v321
      %v327 = vadd.f32 %v307, %v321
      %v328 = vadd.f32 %v308, %v321
      %v329 = vadd.f32 %v309, %v321
      %v330 = vadd.f32 %v310, %v321
      %v331 = vadd.f32 %v311, %v321
      %v332 = vadd.f32 %v312, %v321
      %v333 = vadd.f32 %v313, %v321
      %v334 = vadd.f32 %v314, %v321
      %v335 = vadd.f32 %v315, %v321
      %336 = vst [vmem:[%s261] sm:$0xff] %v323
      %337 = vst [vmem:[%s261 + $0x8] sm:$0xff] %v324
      %338 = vst [vmem:[%s261 + $0x10] sm:$0xff] %v325
      %339 = vst [vmem:[%s261 + $0x18] sm:$0xff] %v326
      %340 = vst [vmem:[%s261 + $0x20] sm:$0xff] %v327
      %341 = vst [vmem:[%s261 + $0x28] sm:$0xff] %v328
      %342 = vst [vmem:[%s261 + $0x30] sm:$0xff] %v329
      %343 = vst [vmem:[%s261 + $0x38] sm:$0xff] %v330
      %344 = vst [vmem:[%s261 + $0x40] sm:$0xff] %v331
      %345 = vst [vmem:[%s261 + $0x48] sm:$0xff] %v332
      %346 = vst [vmem:[%s261 + $0x50] sm:$0xff] %v333
      %347 = vst [vmem:[%s261 + $0x58] sm:$0xff] %v334
      %348 = vst [vmem:[%s261 + $0x60] sm:$0xff] %v335
      %v349 = vld [vmem:[%s3] sm:$0xf]
      %v350 = vld [vmem:[%s3 + $0x4] sm:$0xf]
      %v351 = vld [vmem:[%s3 + $0x8] sm:$0xf]
      %v352 = vld [vmem:[%s3 + $0xc] sm:$0xf]
      %v353 = vld [vmem:[%s3 + $0x10] sm:$0xf]
      %v354 = vld [vmem:[%s3 + $0x14] sm:$0xf]
      %v355 = vld [vmem:[%s3 + $0x18] sm:$0xf]
      %v356 = vld [vmem:[%s3 + $0x1c] sm:$0xf]
      %v357 = vld [vmem:[%s3 + $0x20] sm:$0xf]
      %v358 = vld [vmem:[%s3 + $0x24] sm:$0xf]
      %v359 = vld [vmem:[%s3 + $0x28] sm:$0xf]
      %v360 = vld [vmem:[%s3 + $0x2c] sm:$0xf]
      %v361 = vld [vmem:[%s3 + $0x30] sm:$0xf]
      %v362 = vld [vmem:[%s3 + $0x34] sm:$0xf]
      %v363 = vld [vmem:[%s3 + $0x38] sm:$0xf]
      %v364 = vld [vmem:[%s3 + $0x3c] sm:$0xf]
      %v365 = vld [vmem:[%s4] sm:$0x1]
      %v367 = vlaneseq
      %v368 = vshrl.u32 %v367, 7
      %v369 = vsub.s32 0, %v368
      %v370 = vrot.slane %v365, %v369
      %v385 = vunpack.c.l.b16 %v270
      %v386 = vunpack.c.l.b16 %v271
      %v387 = vunpack.c.l.b16 %v272
      %v388 = vunpack.c.l.b16 %v273
      %v389 = vunpack.c.l.b16 %v274
      %v390 = vunpack.c.l.b16 %v275
      %v391 = vunpack.c.l.b16 %v276
      %v392 = vunpack.c.l.b16 %v277
      %v393 = vunpack.c.l.b16 %v278
      %v394 = vunpack.c.l.b16 %v279
      %v395 = vunpack.c.l.b16 %v280
      %v396 = vunpack.c.l.b16 %v281
      %v397 = vunpack.c.l.b16 %v282
      %v398 = vpack.c.b16 %v386, %v385
      %v399 = vpack.c.b16 %v388, %v387
      %v400 = vpack.c.b16 %v390, %v389
      %v401 = vpack.c.b16 %v392, %v391
      %v402 = vpack.c.b16 %v394, %v393
      %v403 = vpack.c.b16 %v396, %v395
      %v404 = vpack.c.b16 %v397, %v397
      %v428 = vunpack.c.l.b16 %v349
      %v429 = vunpack.c.l.b16 %v350
      %v430 = vunpack.c.l.b16 %v351
      %v431 = vunpack.c.l.b16 %v352
      %v432 = vunpack.c.l.b16 %v353
      %v433 = vunpack.c.l.b16 %v354
      %v434 = vunpack.c.l.b16 %v355
      %v435 = vunpack.c.l.b16 %v356
      %v436 = vunpack.c.l.b16 %v357
      %v437 = vunpack.c.l.b16 %v358
      %v438 = vunpack.c.l.b16 %v359
      %v439 = vunpack.c.l.b16 %v360
      %v440 = vunpack.c.l.b16 %v361
      %v441 = vunpack.c.l.b16 %v362
      %v442 = vunpack.c.l.b16 %v363
      %v443 = vunpack.c.l.b16 %v364
      %v444 = vpack.c.b16 %v429, %v428
      %v445 = vpack.c.b16 %v431, %v430
      %v446 = vpack.c.b16 %v433, %v432
      %v447 = vpack.c.b16 %v435, %v434
      %v448 = vpack.c.b16 %v437, %v436
      %v449 = vpack.c.b16 %v439, %v438
      %v450 = vpack.c.b16 %v441, %v440
      %v451 = vpack.c.b16 %v443, %v442
      %460 = vmatprep.subr.bf16.mxu0 0
      %461 = vmatpush1.bf16.msra.mxu0 %v444
      %462 = vmatprep.subr.bf16.mxu0 0
      %463 = vmatpush1.bf16.msra.mxu0 %v445
      %464 = vmatprep.subr.bf16.mxu0 0
      %465 = vmatpush1.bf16.msra.mxu0 %v446
      %466 = vmatprep.subr.bf16.mxu0 0
      %467 = vmatpush1.bf16.msra.mxu0 %v447
      %468 = vmatprep.subr.bf16.mxu0 0
      %469 = vmatpush1.bf16.msra.mxu0 %v448
      %470 = vmatprep.subr.bf16.mxu0 0
      %471 = vmatpush1.bf16.msra.mxu0 %v449
      %472 = vmatprep.subr.bf16.mxu0 0
      %473 = vmatpush1.bf16.msra.mxu0 %v450
      %474 = vmatprep.subr.bf16.mxu0 0
      %475 = vmatpush1.bf16.msra.mxu0 %v451
      %476 = vmatprep.subr.bf16.mxu0 0
      %477 = vmatpush1.bf16.msra.mxu0 0
      %478 = vmatprep.subr.bf16.mxu0 0
      %479 = vmatpush1.bf16.msra.mxu0 0
      %480 = vmatprep.subr.bf16.mxu0 0
      %481 = vmatpush1.bf16.msra.mxu0 0
      %482 = vmatprep.subr.bf16.mxu0 0
      %483 = vmatpush1.bf16.msra.mxu0 0
      %484 = vmatprep.subr.bf16.mxu0 0
      %485 = vmatpush1.bf16.msra.mxu0 0
      %486 = vmatprep.subr.bf16.mxu0 0
      %487 = vmatpush1.bf16.msra.mxu0 0
      %488 = vmatprep.subr.bf16.mxu0 0
      %489 = vmatpush1.bf16.msra.mxu0 0
      %490 = vmatprep.subr.bf16.mxu0 0
      %491 = vmatpush1.bf16.msra.mxu0 0
      %492 = vmatprep.mubr.bf16.mxu0 0
      %493 = vmatmul.mubr.bf16.gmra.mrb[0].mxu0 %v398
      %v494 = vpop.f32.mrb[0].mxu0
      %v495 = vadd.f32 %v370, %v494
      %v496 = vpop.f32.mrb[0].mxu0
      %v497 = vpop.f32.mrb[0].mxu0
      %v498 = vadd.f32 %v370, %v497
      %v499 = vpop.f32.mrb[0].mxu0
      %500 = vmatprep.mubr.bf16.mxu0 0
      %501 = vmatmul.mubr.bf16.gmra.mrb[0].mxu0 %v399
      %v502 = vpop.f32.mrb[0].mxu0
      %v503 = vadd.f32 %v370, %v502
      %v504 = vpop.f32.mrb[0].mxu0
      %v505 = vpop.f32.mrb[0].mxu0
      %v506 = vadd.f32 %v370, %v505
      %v507 = vpop.f32.mrb[0].mxu0
      %508 = vmatprep.mubr.bf16.mxu0 0
      %509 = vmatmul.mubr.bf16.gmra.mrb[0].mxu0 %v400
      %v510 = vpop.f32.mrb[0].mxu0
      %v511 = vadd.f32 %v370, %v510
      %v512 = vpop.f32.mrb[0].mxu0
      %v513 = vpop.f32.mrb[0].mxu0
      %v514 = vadd.f32 %v370, %v513
      %v515 = vpop.f32.mrb[0].mxu0
      %516 = vmatprep.mubr.bf16.mxu0 0
      %517 = vmatmul.mubr.bf16.gmra.mrb[0].mxu0 %v401
      %v518 = vpop.f32.mrb[0].mxu0
      %v519 = vadd.f32 %v370, %v518
      %v520 = vpop.f32.mrb[0].mxu0
      %v521 = vpop.f32.mrb[0].mxu0
      %v522 = vadd.f32 %v370, %v521
      %v523 = vpop.f32.mrb[0].mxu0
      %524 = vmatprep.mubr.bf16.mxu0 0
      %525 = vmatmul.mubr.bf16.gmra.mrb[0].mxu0 %v402
      %v526 = vpop.f32.mrb[0].mxu0
      %v527 = vadd.f32 %v370, %v526
      %v528 = vpop.f32.mrb[0].mxu0
      %v529 = vpop.f32.mrb[0].mxu0
      %v530 = vadd.f32 %v370, %v529
      %v531 = vpop.f32.mrb[0].mxu0
      %532 = vmatprep.mubr.bf16.mxu0 0
      %533 = vmatmul.mubr.bf16.gmra.mrb[0].mxu0 %v403
      %v534 = vpop.f32.mrb[0].mxu0
      %v535 = vadd.f32 %v370, %v534
      %v536 = vpop.f32.mrb[0].mxu0
      %v537 = vpop.f32.mrb[0].mxu0
      %v538 = vadd.f32 %v370, %v537
      %v539 = vpop.f32.mrb[0].mxu0
      %540 = vmatprep.mubr.bf16.mxu0 0
      %541 = vmatmul.mubr.bf16.gmra.mrb[0].mxu0 %v404
      %v542 = vpop.f32.mrb[0].mxu0
      %v543 = vadd.f32 %v370, %v542
      %v544 = vpop.f32.mrb[0].mxu0
      %v545 = vpop.f32.mrb[0].mxu0
      %v546 = vpop.f32.mrb[0].mxu0
      %547 = vdwg.mxu0
      %548 = vst [vmem:[%s267] sm:$0xff] %v495
      %549 = vst [vmem:[%s267 + $0x8] sm:$0xff] %v498
      %550 = vst [vmem:[%s267 + $0x10] sm:$0xff] %v503
      %551 = vst [vmem:[%s267 + $0x18] sm:$0xff] %v506
      %552 = vst [vmem:[%s267 + $0x20] sm:$0xff] %v511
      %553 = vst [vmem:[%s267 + $0x28] sm:$0xff] %v514
      %554 = vst [vmem:[%s267 + $0x30] sm:$0xff] %v519
      %555 = vst [vmem:[%s267 + $0x38] sm:$0xff] %v522
      %556 = vst [vmem:[%s267 + $0x40] sm:$0xff] %v527
      %557 = vst [vmem:[%s267 + $0x48] sm:$0xff] %v530
      %558 = vst [vmem:[%s267 + $0x50] sm:$0xff] %v535
      %559 = vst [vmem:[%s267 + $0x58] sm:$0xff] %v538
      %560 = vst [vmem:[%s267 + $0x60] sm:$0xff] %v543
      %s561 = smul.u32 13, %s18
      %p562 = scmp.lt.s32.totalorder %s561, 25
      %s563 = scalar_select %p562, %s561, 25
      %s564 = smul.addr %s563, 8
      %s565 = scalar_lea.vmem %s5, %s564
      %s566 = smul.u32 13, %s18
      %p567 = scmp.lt.s32.totalorder %s566, 25
      %s568 = scalar_select %p567, %s566, 25
      %s569 = smul.addr %s568, 8
      %s570 = scalar_lea.vmem %s6, %s569
      // Predicated region
      $region41: #{encoder_forward.5} parent=39 // pred_check
        %p571 = pneg %p146
      $region42: #{encoder_forward.5} parent=39 // pred_check_branch
        %573 = sbr.rel (%p571) target = $region44
      $region43: #{encoder_forward.5} parent=39 // pred_region
        %s574 = smul.u32 13, %s18
      $region44: #{encoder_forward.5} parent=39 // pred_fallthru
        _
      // Predicated region
      $region45: #{encoder_forward.5} parent=39 // pred_check
        %p575 = pneg %p172
      $region46: #{encoder_forward.5} parent=39 // pred_check_branch
        %577 = sbr.rel (%p575) target = $region48
      $region47: #{encoder_forward.5} parent=39 // pred_region
        %s578 = smul.u32 13, %s18
      $region48: #{encoder_forward.5} parent=39 // pred_fallthru
        _
    $region40: #{encoder_forward.5} parent=5 // pred_fallthru
      _
    %p579 = scmp.le.s32.totalorder 2, %s13
    // Predicated region
    $region49: #{encoder_forward.5} parent=5 // pred_check
      %p580 = pneg %p579
    $region50: #{encoder_forward.5} parent=5 // pred_check_branch
      %582 = sbr.rel (%p580) target = $region52
    $region51: #{encoder_forward.5} parent=5 // pred_region
      %s583 = ssub.s32 %s13, 2
      // Predicated region
      $region53: #{encoder_forward.5} parent=51 // pred_check
        %p584 = pneg %p152
      $region54: #{encoder_forward.5} parent=51 // pred_check_branch
        %586 = sbr.rel (%p584) target = $region56
      $region55: #{encoder_forward.5} parent=51 // pred_region
        %s587 = smul.u32 13, %s19
        %p588 = scmp.lt.s32.totalorder %s587, 25
        %s589 = scalar_select %p588, %s587, 25
        %s590 = smul.addr %s589, 8
        %s591 = scalar_lea.vmem %s5, %s590
      $region56: #{encoder_forward.5} parent=51 // pred_fallthru
        _
      // Predicated region
      $region57: #{encoder_forward.5} parent=51 // pred_check
        %p592 = pneg %p178
      $region58: #{encoder_forward.5} parent=51 // pred_check_branch
        %594 = sbr.rel (%p592) target = $region60
      $region59: #{encoder_forward.5} parent=51 // pred_region
        %s595 = smul.u32 13, %s19
        %p596 = scmp.lt.s32.totalorder %s595, 25
        %s597 = scalar_select %p596, %s595, 25
        %s598 = smul.addr %s597, 8
        %s599 = scalar_lea.vmem %s6, %s598
      $region60: #{encoder_forward.5} parent=51 // pred_fallthru
        _
    $region52: #{encoder_forward.5} parent=5 // pred_fallthru
      _
  $region6: #{encoder_forward.5} parent=0 // loop_footer
    %s17 = sadd.s32 1, %s13
  $region7: #{encoder_forward.5} parent=0 // loop_footer_branch
    %12 = sbr.rel target = $region3
  $region8: #{encoder_forward.5} parent=0 // loop_exit
    _

// kernel: encoder_forward.4
$region0: #{encoder_forward.4}
  #allocation0 [shape = 'u32[]', space=smem, size = 0x4, offset = 0x4, fixed_abs, tag = 'smem constant byte address 0x4 - core index']
  #allocation1 [shape = 'u32[144,128]{1,0:T(1,128)}', space=vmem, size = 0x12000, scoped, tag = 'internal scratch']
  %s0 = inlined_call_operand.vmem [shape: bf16[208,512], index: 0, kind: input, shape index: {}]
  %s1 = inlined_call_operand.vmem [shape: bf16[512,128], index: 1, kind: input, shape index: {}]
  %s2 = inlined_call_operand.vmem [shape: f32[1,128], index: 2, kind: input, shape index: {}]
  %s3 = inlined_call_operand.vmem [shape: bf16[208,128], index: 3, kind: output, shape index: {0}]
  %s4 = inlined_call_operand.vmem [shape: f32[2,2,128], index: 4, kind: output, shape index: {1}]
  %5 = xla_tuple %s3, %s4
  %s6 = sld [smem:[#allocation0]]
  $region61: #{encoder_forward.4} parent=0
    _
  %s8 = ssub.s32 1, %s6
  %s9 = scalar_select 0, %s8, %s6
  loop: start=0, step=1, limit=4
  $region2: #{encoder_forward.4} parent=0 // loop_pre_header
    _
  $region3: #{encoder_forward.4} parent=0 // loop_header
    %s11 = sphi 0, %s15
    %p12 = scmp.ge.s32.totalorder %s11, 4
    %s21 = sphi 0, %s23
    %s24 = sphi 0, %s21
    %s25 = sphi 0, %s24
    %s41 = sphi 0, %s25
    %s45 = sphi 0, %s45
    %s47 = sphi 0, %s45
    %s48 = sphi 0, %s47
    %s62 = sphi 0, %s48
    %s66 = sphi 0, %s66
    %s68 = sphi 0, %s66
    %s69 = sphi 0, %s68
    %s83 = sphi 0, %s69
    %s89 = sphi 0, %s91
    %s92 = sphi 0, %s89
    %s93 = sphi 0, %s92
    %s109 = sphi 0, %s93
    %s115 = sphi 0, %s117
    %s118 = sphi 0, %s115
    %s119 = sphi 0, %s118
    %s135 = sphi 0, %s119
  $region4: #{encoder_forward.4} parent=0 // loop_header_branch
    %14 = sbr.rel (%p12) target = $region8
  $region5: #{encoder_forward.4} parent=0 // loop_body
    %s16 = ssub.s32 %s11, 1
    %s17 = ssub.s32 %s11, 2
    %s18 = sadd.s32 %s11, 1
    %s19 = ssub.s32 %s11, %s18
    %p20 = scmp.eq.s32.totalorder %s19, 0
    %s22 = sadd.s32 %s21, 1
    %s23 = scalar_select %p20, %s21, %s22
    %p26 = pneg %p20
    %p27 = scmp.eq.s32.totalorder %s11, 1
    %p28 = por %p26, %p27
    %p29 = scmp.ne.s32.totalorder %s21, %s24
    %p30 = scmp.eq.s32.totalorder %s11, 0
    %p31 = por %p29, %p30
    %p32 = scmp.ne.s32.totalorder %s21, %s24
    %p33 = scmp.eq.s32.totalorder %s16, 1
    %p34 = por %p32, %p33
    %p35 = scmp.ne.s32.totalorder %s24, %s25
    %p36 = scmp.eq.s32.totalorder %s16, 0
    %p37 = por %p35, %p36
    %p38 = scmp.ne.s32.totalorder %s24, %s25
    %p39 = scmp.eq.s32.totalorder %s17, 1
    %p40 = por %p38, %p39
    %p42 = scmp.ne.s32.totalorder %s25, %s41
    %p43 = scmp.eq.s32.totalorder %s17, 0
    %p44 = por %p42, %p43
    %s46 = sadd.s32 %s45, 1
    %p49 = scmp.eq.s32.totalorder %s11, 1
    %p50 = scmp.ne.s32.totalorder %s45, %s47
    %p51 = scmp.eq.s32.totalorder %s11, 0
    %p52 = por %p50, %p51
    %p53 = scmp.ne.s32.totalorder %s45, %s47
    %p54 = scmp.eq.s32.totalorder %s16, 1
    %p55 = por %p53, %p54
    %p56 = scmp.ne.s32.totalorder %s47, %s48
    %p57 = scmp.eq.s32.totalorder %s16, 0
    %p58 = por %p56, %p57
    %p59 = scmp.ne.s32.totalorder %s47, %s48
    %p60 = scmp.eq.s32.totalorder %s17, 1
    %p61 = por %p59, %p60
    %p63 = scmp.ne.s32.totalorder %s48, %s62
    %p64 = scmp.eq.s32.totalorder %s17, 0
    %p65 = por %p63, %p64
    %s67 = sadd.s32 %s66, 1
    %p70 = scmp.eq.s32.totalorder %s11, 1
    %p71 = scmp.ne.s32.totalorder %s66, %s68
    %p72 = scmp.eq.s32.totalorder %s11, 0
    %p73 = por %p71, %p72
    %p74 = scmp.ne.s32.totalorder %s66, %s68
    %p75 = scmp.eq.s32.totalorder %s16, 1
    %p76 = por %p74, %p75
    %p77 = scmp.ne.s32.totalorder %s68, %s69
    %p78 = scmp.eq.s32.totalorder %s16, 0
    %p79 = por %p77, %p78
    %p80 = scmp.ne.s32.totalorder %s68, %s69
    %p81 = scmp.eq.s32.totalorder %s17, 1
    %p82 = por %p80, %p81
    %p84 = scmp.ne.s32.totalorder %s69, %s83
    %p85 = scmp.eq.s32.totalorder %s17, 0
    %p86 = por %p84, %p85
    %s87 = ssub.s32 %s11, %s18
    %p88 = scmp.eq.s32.totalorder %s87, 0
    %s90 = sadd.s32 %s89, 1
    %s91 = scalar_select %p88, %s89, %s90
    %p94 = pneg %p88
    %p95 = scmp.eq.s32.totalorder %s11, 1
    %p96 = por %p94, %p95
    %p97 = scmp.ne.s32.totalorder %s89, %s92
    %p98 = scmp.eq.s32.totalorder %s11, 0
    %p99 = por %p97, %p98
    %p100 = scmp.ne.s32.totalorder %s89, %s92
    %p101 = scmp.eq.s32.totalorder %s16, 1
    %p102 = por %p100, %p101
    %p103 = scmp.ne.s32.totalorder %s92, %s93
    %p104 = scmp.eq.s32.totalorder %s16, 0
    %p105 = por %p103, %p104
    %p106 = scmp.ne.s32.totalorder %s92, %s93
    %p107 = scmp.eq.s32.totalorder %s17, 1
    %p108 = por %p106, %p107
    %p110 = scmp.ne.s32.totalorder %s93, %s109
    %p111 = scmp.eq.s32.totalorder %s17, 0
    %p112 = por %p110, %p111
    %s113 = ssub.s32 %s11, %s18
    %p114 = scmp.eq.s32.totalorder %s113, 0
    %s116 = sadd.s32 %s115, 1
    %s117 = scalar_select %p114, %s115, %s116
    %p120 = pneg %p114
    %p121 = scmp.eq.s32.totalorder %s11, 1
    %p122 = por %p120, %p121
    %p123 = scmp.ne.s32.totalorder %s115, %s118
    %p124 = scmp.eq.s32.totalorder %s11, 0
    %p125 = por %p123, %p124
    %p126 = scmp.ne.s32.totalorder %s115, %s118
    %p127 = scmp.eq.s32.totalorder %s16, 1
    %p128 = por %p126, %p127
    %p129 = scmp.ne.s32.totalorder %s118, %s119
    %p130 = scmp.eq.s32.totalorder %s16, 0
    %p131 = por %p129, %p130
    %p132 = scmp.ne.s32.totalorder %s118, %s119
    %p133 = scmp.eq.s32.totalorder %s17, 1
    %p134 = por %p132, %p133
    %p136 = scmp.ne.s32.totalorder %s119, %s135
    %p137 = scmp.eq.s32.totalorder %s17, 0
    %p138 = por %p136, %p137
    %p139 = scmp.le.s32.totalorder 1, %s11
    %p140 = scmp.lt.s32.totalorder %s11, 3
    %p141 = pnand %p139, %p140
    %p142 = pneg %p141
    // Predicated region
    $region9: #{encoder_forward.4} parent=5 // pred_check
      _
    $region10: #{encoder_forward.4} parent=5 // pred_check_branch
      %144 = sbr.rel (%p141) target = $region12
    $region11: #{encoder_forward.4} parent=5 // pred_region
      %s145 = ssub.s32 %s11, 1
      // Predicated region
      $region13: #{encoder_forward.4} parent=11 // pred_check
        %p146 = pneg %p58
      $region14: #{encoder_forward.4} parent=11 // pred_check_branch
        %148 = sbr.rel (%p146) target = $region16
      $region15: #{encoder_forward.4} parent=11 // pred_region
        _
      $region16: #{encoder_forward.4} parent=11 // pred_fallthru
        _
      // Predicated region
      $region17: #{encoder_forward.4} parent=11 // pred_check
        %p149 = pneg %p79
      $region18: #{encoder_forward.4} parent=11 // pred_check_branch
        %151 = sbr.rel (%p149) target = $region20
      $region19: #{encoder_forward.4} parent=11 // pred_region
        _
      $region20: #{encoder_forward.4} parent=11 // pred_fallthru
        _
    $region12: #{encoder_forward.4} parent=5 // pred_fallthru
      _
    %p152 = scmp.lt.s32.totalorder %s11, 2
    // Predicated region
    $region21: #{encoder_forward.4} parent=5 // pred_check
      %p153 = pneg %p152
    $region22: #{encoder_forward.4} parent=5 // pred_check_branch
      %155 = sbr.rel (%p153) target = $region24
    $region23: #{encoder_forward.4} parent=5 // pred_region
      // Predicated region
      $region25: #{encoder_forward.4} parent=23 // pred_check
        %p156 = pneg %p31
      $region26: #{encoder_forward.4} parent=23 // pred_check_branch
        %158 = sbr.rel (%p156) target = $region28
      $region27: #{encoder_forward.4} parent=23 // pred_region
        %s159 = smul.u32 13, %s11
        %p160 = scmp.lt.s32.totalorder %s159, 25
        %s161 = scalar_select %p160, %s159, 25
        %s162 = smul.addr %s161, 4
        %s163 = smul.addr %s162, 4
        %s164 = scalar_lea.vmem %s0, %s163
        %s165 = smul.u32 13, %s11
      $region28: #{encoder_forward.4} parent=23 // pred_fallthru
        _
    $region24: #{encoder_forward.4} parent=5 // pred_fallthru
      _
    %p166 = scmp.le.s32.totalorder 1, %s11
    %p167 = scmp.lt.s32.totalorder %s11, 3
    %p168 = pnand %p166, %p167
    %p169 = pneg %p168
    // Predicated region
    $region29: #{encoder_forward.4} parent=5 // pred_check
      _
    $region30: #{encoder_forward.4} parent=5 // pred_check_branch
      %171 = sbr.rel (%p168) target = $region32
    $region31: #{encoder_forward.4} parent=5 // pred_region
      %s172 = ssub.s32 %s11, 1
      %s173 = smul.u32 13, %s16
      %p174 = scmp.lt.s32.totalorder %s173, 25
      %s175 = scalar_select %p174, %s173, 25
      %s176 = smul.addr %s175, 4
      %s177 = smul.addr %s176, 4
      %s178 = scalar_lea.vmem %s0, %s177
      %p179 = pneg %p37
      %p180 = pneg %p34
      %p181 = pneg %p58
      %p182 = pneg %p55
      %p183 = pneg %p79
      %p184 = pneg %p76
      %p185 = pneg %p105
      %p186 = pneg %p102
      %s187 = smul.u32 13, %s16
      %p188 = scmp.lt.s32.totalorder %s187, 25
      %s189 = scalar_select %p188, %s187, 25
      %s190 = smul.addr %s189, 4
      %s191 = scalar_lea.vmem %s3, %s190
      %p192 = pneg %p131
      %p193 = pneg %p128
      %p194 = scmp.lt.s32.totalorder %s16, 1
      %s195 = scalar_select %p194, %s16, 1
      %s196 = smul.addr %s195, 2
      %s197 = scalar_lea.vmem %s4, %s196
      %s198 = smul.u32 13, %s16
      %p199 = scmp.lt.s32.totalorder %s198, 25
      %s200 = scalar_select %p199, %s198, 25
      %s201 = smul.addr %s200, 4
      %s202 = smul.addr %s201, 4
      %s203 = scalar_lea.vmem %s0, %s202
      %s204 = smul.u32 13, %s16
      %s205 = smul.u32 13, %s16
      %p206 = scmp.lt.s32.totalorder %s205, 25
      %s207 = scalar_select %p206, %s205, 25
      %s208 = smul.addr %s207, 4
      %s209 = scalar_lea.vmem %s3, %s208
      %s210 = smul.u32 13, %s16
      %p211 = scmp.lt.s32.totalorder %s16, 1
      %s212 = scalar_select %p211, %s16, 1
      %s213 = smul.addr %s212, 2
      %s214 = scalar_lea.vmem %s4, %s213
      %v216 = vld [vmem:[%s203] sm:$0xff]
      %v217 = vld [vmem:[%s203 + $0x8] sm:$0xff]
      %v218 = vld [vmem:[%s203 + $0x10] sm:$0xff]
      %v219 = vld [vmem:[%s203 + $0x18] sm:$0xff]
      %v220 = vld [vmem:[%s203 + $0x20] sm:$0xff]
      %v221 = vld [vmem:[%s203 + $0x28] sm:$0xff]
      %v222 = vld [vmem:[%s203 + $0x30] sm:$0xff]
      %v223 = vld [vmem:[%s203 + $0x38] sm:$0xff]
      %v224 = vld [vmem:[%s203 + $0x40] sm:$0xff]
      %v225 = vld [vmem:[%s203 + $0x48] sm:$0xff]
      %v226 = vld [vmem:[%s203 + $0x50] sm:$0xff]
      %v227 = vld [vmem:[%s203 + $0x58] sm:$0xff]
      %v228 = vld [vmem:[%s203 + $0x60] sm:$0xff]
      %v229 = vld [vmem:[%s203 + $0x68] sm:$0xff]
      %v230 = vld [vmem:[%s203 + $0x70] sm:$0xff]
      %v231 = vld [vmem:[%s203 + $0x78] sm:$0xff]
      %v232 = vld [vmem:[%s203 + $0x80] sm:$0xff]
      %v233 = vld [vmem:[%s203 + $0x88] sm:$0xff]
      %v234 = vld [vmem:[%s203 + $0x90] sm:$0xff]
      %v235 = vld [vmem:[%s203 + $0x98] sm:$0xff]
      %v236 = vld [vmem:[%s203 + $0xa0] sm:$0xff]
      %v237 = vld [vmem:[%s203 + $0xa8] sm:$0xff]
      %v238 = vld [vmem:[%s203 + $0xb0] sm:$0xff]
      %v239 = vld [vmem:[%s203 + $0xb8] sm:$0xff]
      %v240 = vld [vmem:[%s203 + $0xc0] sm:$0xff]
      %v241 = vld [vmem:[%s203 + $0xc8] sm:$0xff]
      %v242 = vld [vmem:[%s1] sm:$0xf]
      %v243 = vld [vmem:[%s1 + $0x4] sm:$0xf]
      %v244 = vld [vmem:[%s1 + $0x8] sm:$0xf]
      %v245 = vld [vmem:[%s1 + $0xc] sm:$0xf]
      %v246 = vld [vmem:[%s1 + $0x10] sm:$0xf]
      %v247 = vld [vmem:[%s1 + $0x14] sm:$0xf]
      %v248 = vld [vmem:[%s1 + $0x18] sm:$0xf]
      %v249 = vld [vmem:[%s1 + $0x1c] sm:$0xf]
      %v250 = vld [vmem:[%s1 + $0x20] sm:$0xf]
      %v251 = vld [vmem:[%s1 + $0x24] sm:$0xf]
      %v252 = vld [vmem:[%s1 + $0x28] sm:$0xf]
      %v253 = vld [vmem:[%s1 + $0x2c] sm:$0xf]
      %v254 = vld [vmem:[%s1 + $0x30] sm:$0xf]
      %v255 = vld [vmem:[%s1 + $0x34] sm:$0xf]
      %v256 = vld [vmem:[%s1 + $0x38] sm:$0xf]
      %v257 = vld [vmem:[%s1 + $0x3c] sm:$0xf]
      %v258 = vld [vmem:[%s1 + $0x40] sm:$0xf]
      %v259 = vld [vmem:[%s1 + $0x44] sm:$0xf]
      %v260 = vld [vmem:[%s1 + $0x48] sm:$0xf]
      %v261 = vld [vmem:[%s1 + $0x4c] sm:$0xf]
      %v262 = vld [vmem:[%s1 + $0x50] sm:$0xf]
      %v263 = vld [vmem:[%s1 + $0x54] sm:$0xf]
      %v264 = vld [vmem:[%s1 + $0x58] sm:$0xf]
      %v265 = vld [vmem:[%s1 + $0x5c] sm:$0xf]
      %v266 = vld [vmem:[%s1 + $0x60] sm:$0xf]
      %v267 = vld [vmem:[%s1 + $0x64] sm:$0xf]
      %v268 = vld [vmem:[%s1 + $0x68] sm:$0xf]
      %v269 = vld [vmem:[%s1 + $0x6c] sm:$0xf]
      %v270 = vld [vmem:[%s1 + $0x70] sm:$0xf]
      %v271 = vld [vmem:[%s1 + $0x74] sm:$0xf]
      %v272 = vld [vmem:[%s1 + $0x78] sm:$0xf]
      %v273 = vld [vmem:[%s1 + $0x7c] sm:$0xf]
      %v274 = vld [vmem:[%s1 + $0x80] sm:$0xf]
      %v275 = vld [vmem:[%s1 + $0x84] sm:$0xf]
      %v276 = vld [vmem:[%s1 + $0x88] sm:$0xf]
      %v277 = vld [vmem:[%s1 + $0x8c] sm:$0xf]
      %v278 = vld [vmem:[%s1 + $0x90] sm:$0xf]
      %v279 = vld [vmem:[%s1 + $0x94] sm:$0xf]
      %v280 = vld [vmem:[%s1 + $0x98] sm:$0xf]
      %v281 = vld [vmem:[%s1 + $0x9c] sm:$0xf]
      %v282 = vld [vmem:[%s1 + $0xa0] sm:$0xf]
      %v283 = vld [vmem:[%s1 + $0xa4] sm:$0xf]
      %v284 = vld [vmem:[%s1 + $0xa8] sm:$0xf]
      %v285 = vld [vmem:[%s1 + $0xac] sm:$0xf]
      %v286 = vld [vmem:[%s1 + $0xb0] sm:$0xf]
      %v287 = vld [vmem:[%s1 + $0xb4] sm:$0xf]
      %v288 = vld [vmem:[%s1 + $0xb8] sm:$0xf]
      %v289 = vld [vmem:[%s1 + $0xbc] sm:$0xf]
      %v290 = vld [vmem:[%s1 + $0xc0] sm:$0xf]
      %v291 = vld [vmem:[%s1 + $0xc4] sm:$0xf]
      %v292 = vld [vmem:[%s1 + $0xc8] sm:$0xf]
      %v293 = vld [vmem:[%s1 + $0xcc] sm:$0xf]
      %v294 = vld [vmem:[%s1 + $0xd0] sm:$0xf]
      %v295 = vld [vmem:[%s1 + $0xd4] sm:$0xf]
      %v296 = vld [vmem:[%s1 + $0xd8] sm:$0xf]
      %v297 = vld [vmem:[%s1 + $0xdc] sm:$0xf]
      %v298 = vld [vmem:[%s1 + $0xe0] sm:$0xf]
      %v299 = vld [vmem:[%s1 + $0xe4] sm:$0xf]
      %v300 = vld [vmem:[%s1 + $0xe8] sm:$0xf]
      %v301 = vld [vmem:[%s1 + $0xec] sm:$0xf]
      %v302 = vld [vmem:[%s1 + $0xf0] sm:$0xf]
      %v303 = vld [vmem:[%s1 + $0xf4] sm:$0xf]
      %v304 = vld [vmem:[%s1 + $0xf8] sm:$0xf]
      %v305 = vld [vmem:[%s1 + $0xfc] sm:$0xf]
      %v306 = vld [vmem:[%s2] sm:$0x1]
      %v308 = vlaneseq
      %v309 = vshrl.u32 %v308, 7
      %v310 = vsub.s32 0, %v309
      %v311 = vrot.slane %v306, %v310
      %v339 = vunpack.c.l.b16 %v216
      %v340 = vunpack.c.h.b16 %v216
      %v341 = vunpack.c.l.b16 %v217
      %v342 = vunpack.c.h.b16 %v217
      %v343 = vunpack.c.l.b16 %v218
      %v344 = vunpack.c.h.b16 %v218
      %v345 = vunpack.c.l.b16 %v219
      %v346 = vunpack.c.h.b16 %v219
      %v347 = vunpack.c.l.b16 %v220
      %v348 = vunpack.c.h.b16 %v220
      %v349 = vunpack.c.l.b16 %v221
      %v350 = vunpack.c.h.b16 %v221
      %v351 = vunpack.c.l.b16 %v222
      %v352 = vunpack.c.h.b16 %v222
      %v353 = vunpack.c.l.b16 %v223
      %v354 = vunpack.c.h.b16 %v223
      %v355 = vunpack.c.l.b16 %v224
      %v356 = vunpack.c.h.b16 %v224
      %v357 = vunpack.c.l.b16 %v225
      %v358 = vunpack.c.h.b16 %v225
      %v359 = vunpack.c.l.b16 %v226
      %v360 = vunpack.c.h.b16 %v226
      %v361 = vunpack.c.l.b16 %v227
      %v362 = vunpack.c.h.b16 %v227
      %v363 = vunpack.c.l.b16 %v228
      %v364 = vunpack.c.h.b16 %v228
      %v365 = vunpack.c.l.b16 %v229
      %v366 = vunpack.c.h.b16 %v229
      %v367 = vunpack.c.l.b16 %v230
      %v368 = vunpack.c.h.b16 %v230
      %v369 = vunpack.c.l.b16 %v231
      %v370 = vunpack.c.h.b16 %v231
      %v371 = vunpack.c.l.b16 %v232
      %v372 = vunpack.c.h.b16 %v232
      %v373 = vunpack.c.l.b16 %v233
      %v374 = vunpack.c.h.b16 %v233
      %v375 = vunpack.c.l.b16 %v234
      %v376 = vunpack.c.h.b16 %v234
      %v377 = vunpack.c.l.b16 %v235
      %v378 = vunpack.c.h.b16 %v235
      %v379 = vunpack.c.l.b16 %v236
      %v380 = vunpack.c.h.b16 %v236
      %v381 = vunpack.c.l.b16 %v237
      %v382 = vunpack.c.h.b16 %v237
      %v383 = vunpack.c.l.b16 %v238
      %v384 = vunpack.c.h.b16 %v238
      %v385 = vunpack.c.l.b16 %v239
      %v386 = vunpack.c.h.b16 %v239
      %v387 = vunpack.c.l.b16 %v240
      %v388 = vunpack.c.h.b16 %v240
      %v389 = vunpack.c.l.b16 %v241
      %v390 = vunpack.c.h.b16 %v241
      %v391 = vpack.c.b16 %v343, %v339
      %v392 = vpack.c.b16 %v344, %v340
      %v393 = vpack.c.b16 %v345, %v341
      %v394 = vpack.c.b16 %v346, %v342
      %v395 = vpack.c.b16 %v351, %v347
      %v396 = vpack.c.b16 %v352, %v348
      %v397 = vpack.c.b16 %v353, %v349
      %v398 = vpack.c.b16 %v354, %v350
      %v399 = vpack.c.b16 %v359, %v355
      %v400 = vpack.c.b16 %v360, %v356
      %v401 = vpack.c.b16 %v361, %v357
      %v402 = vpack.c.b16 %v362, %v358
      %v403 = vpack.c.b16 %v367, %v363
      %v404 = vpack.c.b16 %v368, %v364
      %v405 = vpack.c.b16 %v369, %v365
      %v406 = vpack.c.b16 %v370, %v366
      %v407 = vpack.c.b16 %v375, %v371
      %v408 = vpack.c.b16 %v376, %v372
      %v409 = vpack.c.b16 %v377, %v373
      %v410 = vpack.c.b16 %v378, %v374
      %v411 = vpack.c.b16 %v383, %v379
      %v412 = vpack.c.b16 %v384, %v380
      %v413 = vpack.c.b16 %v385, %v381
      %v414 = vpack.c.b16 %v386, %v382
      %v415 = vpack.c.b16 %v387, %v387
      %v416 = vpack.c.b16 %v388, %v388
      %v417 = vpack.c.b16 %v389, %v389
      %v418 = vpack.c.b16 %v390, %v390
      %v511 = vunpack.c.l.b16 %v242
      %v512 = vunpack.c.l.b16 %v243
      %v513 = vunpack.c.l.b16 %v244
      %v514 = vunpack.c.l.b16 %v245
      %v515 = vunpack.c.l.b16 %v246
      %v516 = vunpack.c.l.b16 %v247
      %v517 = vunpack.c.l.b16 %v248
      %v518 = vunpack.c.l.b16 %v249
      %v519 = vunpack.c.l.b16 %v250
      %v520 = vunpack.c.l.b16 %v251
      %v521 = vunpack.c.l.b16 %v252
      %v522 = vunpack.c.l.b16 %v253
      %v523 = vunpack.c.l.b16 %v254
      %v524 = vunpack.c.l.b16 %v255
      %v525 = vunpack.c.l.b16 %v256
      %v526 = vunpack.c.l.b16 %v257
      %v527 = vunpack.c.l.b16 %v258
      %v528 = vunpack.c.l.b16 %v259
      %v529 = vunpack.c.l.b16 %v260
      %v530 = vunpack.c.l.b16 %v261
      %v531 = vunpack.c.l.b16 %v262
      %v532 = vunpack.c.l.b16 %v263
      %v533 = vunpack.c.l.b16 %v264
      %v534 = vunpack.c.l.b16 %v265
      %v535 = vunpack.c.l.b16 %v266
      %v536 = vunpack.c.l.b16 %v267
      %v537 = vunpack.c.l.b16 %v268
      %v538 = vunpack.c.l.b16 %v269
      %v539 = vunpack.c.l.b16 %v270
      %v540 = vunpack.c.l.b16 %v271
      %v541 = vunpack.c.l.b16 %v272
      %v542 = vunpack.c.l.b16 %v273
      %v543 = vunpack.c.l.b16 %v274
      %v544 = vunpack.c.l.b16 %v275
      %v545 = vunpack.c.l.b16 %v276
      %v546 = vunpack.c.l.b16 %v277
      %v547 = vunpack.c.l.b16 %v278
      %v548 = vunpack.c.l.b16 %v279
      %v549 = vunpack.c.l.b16 %v280
      %v550 = vunpack.c.l.b16 %v281
      %v551 = vunpack.c.l.b16 %v282
      %v552 = vunpack.c.l.b16 %v283
      %v553 = vunpack.c.l.b16 %v284
      %v554 = vunpack.c.l.b16 %v285
      %v555 = vunpack.c.l.b16 %v286
      %v556 = vunpack.c.l.b16 %v287
      %v557 = vunpack.c.l.b16 %v288
      %v558 = vunpack.c.l.b16 %v289
      %v559 = vunpack.c.l.b16 %v290
      %v560 = vunpack.c.l.b16 %v291
      %v561 = vunpack.c.l.b16 %v292
      %v562 = vunpack.c.l.b16 %v293
      %v563 = vunpack.c.l.b16 %v294
      %v564 = vunpack.c.l.b16 %v295
      %v565 = vunpack.c.l.b16 %v296
      %v566 = vunpack.c.l.b16 %v297
      %v567 = vunpack.c.l.b16 %v298
      %v568 = vunpack.c.l.b16 %v299
      %v569 = vunpack.c.l.b16 %v300
      %v570 = vunpack.c.l.b16 %v301
      %v571 = vunpack.c.l.b16 %v302
      %v572 = vunpack.c.l.b16 %v303
      %v573 = vunpack.c.l.b16 %v304
      %v574 = vunpack.c.l.b16 %v305
      %v575 = vpack.c.b16 %v512, %v511
      %v576 = vpack.c.b16 %v514, %v513
      %v577 = vpack.c.b16 %v516, %v515
      %v578 = vpack.c.b16 %v518, %v517
      %v579 = vpack.c.b16 %v520, %v519
      %v580 = vpack.c.b16 %v522, %v521
      %v581 = vpack.c.b16 %v524, %v523
      %v582 = vpack.c.b16 %v526, %v525
      %v583 = vpack.c.b16 %v528, %v527
      %v584 = vpack.c.b16 %v530, %v529
      %v585 = vpack.c.b16 %v532, %v531
      %v586 = vpack.c.b16 %v534, %v533
      %v587 = vpack.c.b16 %v536, %v535
      %v588 = vpack.c.b16 %v538, %v537
      %v589 = vpack.c.b16 %v540, %v539
      %v590 = vpack.c.b16 %v542, %v541
      %v591 = vpack.c.b16 %v544, %v543
      %v592 = vpack.c.b16 %v546, %v545
      %v593 = vpack.c.b16 %v548, %v547
      %v594 = vpack.c.b16 %v550, %v549
      %v595 = vpack.c.b16 %v552, %v551
      %v596 = vpack.c.b16 %v554, %v553
      %v597 = vpack.c.b16 %v556, %v555
      %v598 = vpack.c.b16 %v558, %v557
      %v599 = vpack.c.b16 %v560, %v559
      %v600 = vpack.c.b16 %v562, %v561
      %v601 = vpack.c.b16 %v564, %v563
      %v602 = vpack.c.b16 %v566, %v565
      %v603 = vpack.c.b16 %v568, %v567
      %v604 = vpack.c.b16 %v570, %v569
      %v605 = vpack.c.b16 %v572, %v571
      %v606 = vpack.c.b16 %v574, %v573
      %639 = vmatprep.subr.bf16.mxu0 0
      %640 = vmatpush1.bf16.msra.mxu0 %v575
      %641 = vmatprep.subr.bf16.mxu0 0
      %642 = vmatpush1.bf16.msra.mxu0 %v576
      %643 = vmatprep.subr.bf16.mxu0 0
      %644 = vmatpush1.bf16.msra.mxu0 %v577
      %645 = vmatprep.subr.bf16.mxu0 0
      %646 = vmatpush1.bf16.msra.mxu0 %v578
      %647 = vmatprep.subr.bf16.mxu0 0
      %648 = vmatpush1.bf16.msra.mxu0 %v579
      %649 = vmatprep.subr.bf16.mxu0 0
      %650 = vmatpush1.bf16.msra.mxu0 %v580
      %651 = vmatprep.subr.bf16.mxu0 0
      %652 = vmatpush1.bf16.msra.mxu0 %v581
      %653 = vmatprep.subr.bf16.mxu0 0
      %654 = vmatpush1.bf16.msra.mxu0 %v582
      %655 = vmatprep.subr.bf16.mxu0 0
      %656 = vmatpush1.bf16.msra.mxu0 %v583
      %657 = vmatprep.subr.bf16.mxu0 0
      %658 = vmatpush1.bf16.msra.mxu0 %v584
      %659 = vmatprep.subr.bf16.mxu0 0
      %660 = vmatpush1.bf16.msra.mxu0 %v585
      %661 = vmatprep.subr.bf16.mxu0 0
      %662 = vmatpush1.bf16.msra.mxu0 %v586
      %663 = vmatprep.subr.bf16.mxu0 0
      %664 = vmatpush1.bf16.msra.mxu0 %v587
      %665 = vmatprep.subr.bf16.mxu0 0
      %666 = vmatpush1.bf16.msra.mxu0 %v588
      %667 = vmatprep.subr.bf16.mxu0 0
      %668 = vmatpush1.bf16.msra.mxu0 %v589
      %669 = vmatprep.subr.bf16.mxu0 0
      %670 = vmatpush1.bf16.msra.mxu0 %v590
      %671 = vmatprep.mubr.bf16.mxu0 %v392
      %672 = vmatmul.mubr.bf16.gmra.mrb[0].mxu0 %v391
      %v673 = vpop.f32.mrb[0].mxu0
      %v674 = vadd.f32 %v311, %v673
      %v675 = vpop.f32.mrb[0].mxu0
      %v676 = vpop.f32.mrb[0].mxu0
      %v677 = vadd.f32 %v311, %v676
      %v678 = vpop.f32.mrb[0].mxu0
      %679 = vmatprep.mubr.bf16.mxu0 %v396
      %680 = vmatmul.mubr.bf16.gmra.mrb[0].mxu0 %v395
      %v681 = vpop.f32.mrb[0].mxu0
      %v682 = vadd.f32 %v311, %v681
      %v683 = vpop.f32.mrb[0].mxu0
      %v684 = vpop.f32.mrb[0].mxu0
      %v685 = vadd.f32 %v311, %v684
      %v686 = vpop.f32.mrb[0].mxu0
      %687 = vmatprep.mubr.bf16.mxu0 %v400
      %688 = vmatmul.mubr.bf16.gmra.mrb[0].mxu0 %v399
      %v689 = vpop.f32.mrb[0].mxu0
      %v690 = vadd.f32 %v311, %v689
      %v691 = vpop.f32.mrb[0].mxu0
      %v692 = vpop.f32.mrb[0].mxu0
      %v693 = vadd.f32 %v311, %v692
      %v694 = vpop.f32.mrb[0].mxu0
      %695 = vmatprep.mubr.bf16.mxu0 %v404
      %696 = vmatmul.mubr.bf16.gmra.mrb[0].mxu0 %v403
      %v697 = vpop.f32.mrb[0].mxu0
      %v698 = vadd.f32 %v311, %v697
      %v699 = vpop.f32.mrb[0].mxu0
      %v700 = vpop.f32.mrb[0].mxu0
      %v701 = vadd.f32 %v311, %v700
      %v702 = vpop.f32.mrb[0].mxu0
      %703 = vmatprep.mubr.bf16.mxu0 %v408
      %704 = vmatmul.mubr.bf16.gmra.mrb[0].mxu0 %v407
      %v705 = vpop.f32.mrb[0].mxu0
      %v706 = vadd.f32 %v311, %v705
      %v707 = vpop.f32.mrb[0].mxu0
      %v708 = vpop.f32.mrb[0].mxu0
      %v709 = vadd.f32 %v311, %v708
      %v710 = vpop.f32.mrb[0].mxu0
      %711 = vmatprep.mubr.bf16.mxu0 %v412
      %712 = vmatmul.mubr.bf16.gmra.mrb[0].mxu0 %v411
      %v713 = vpop.f32.mrb[0].mxu0
      %v714 = vadd.f32 %v311, %v713
      %v715 = vpop.f32.mrb[0].mxu0
      %v716 = vpop.f32.mrb[0].mxu0
      %v717 = vadd.f32 %v311, %v716
      %v718 = vpop.f32.mrb[0].mxu0
      %719 = vmatprep.mubr.bf16.mxu0 %v416
      %720 = vmatmul.mubr.bf16.gmra.mrb[0].mxu0 %v415
      %v721 = vpop.f32.mrb[0].mxu0
      %v722 = vadd.f32 %v311, %v721
      %v723 = vpop.f32.mrb[0].mxu0
      %v724 = vpop.f32.mrb[0].mxu0
      %v725 = vpop.f32.mrb[0].mxu0
      %726 = vdwg.mxu0
      %727 = vmatprep.subr.bf16.mxu0 0
      %728 = vmatpush1.bf16.msra.mxu0 %v591
      %729 = vmatprep.subr.bf16.mxu0 0
      %730 = vmatpush1.bf16.msra.mxu0 %v592
      %731 = vmatprep.subr.bf16.mxu0 0
      %732 = vmatpush1.bf16.msra.mxu0 %v593
      %733 = vmatprep.subr.bf16.mxu0 0
      %734 = vmatpush1.bf16.msra.mxu0 %v594
      %735 = vmatprep.subr.bf16.mxu0 0
      %736 = vmatpush1.bf16.msra.mxu0 %v595
      %737 = vmatprep.subr.bf16.mxu0 0
      %738 = vmatpush1.bf16.msra.mxu0 %v596
      %739 = vmatprep.subr.bf16.mxu0 0
      %740 = vmatpush1.bf16.msra.mxu0 %v597
      %741 = vmatprep.subr.bf16.mxu0 0
      %742 = vmatpush1.bf16.msra.mxu0 %v598
      %743 = vmatprep.subr.bf16.mxu0 0
      %744 = vmatpush1.bf16.msra.mxu0 %v599
      %745 = vmatprep.subr.bf16.mxu0 0
      %746 = vmatpush1.bf16.msra.mxu0 %v600
      %747 = vmatprep.subr.bf16.mxu0 0
      %748 = vmatpush1.bf16.msra.mxu0 %v601
      %749 = vmatprep.subr.bf16.mxu0 0
      %750 = vmatpush1.bf16.msra.mxu0 %v602
      %751 = vmatprep.subr.bf16.mxu0 0
      %752 = vmatpush1.bf16.msra.mxu0 %v603
      %753 = vmatprep.subr.bf16.mxu0 0
      %754 = vmatpush1.bf16.msra.mxu0 %v604
      %755 = vmatprep.subr.bf16.mxu0 0
      %756 = vmatpush1.bf16.msra.mxu0 %v605
      %757 = vmatprep.subr.bf16.mxu0 0
      %758 = vmatpush1.bf16.msra.mxu0 %v606
      %759 = vmatprep.mubr.bf16.mxu0 %v394
      %760 = vmatmul.mubr.bf16.gmra.mrb[0].mxu0 %v393
      %v761 = vpop.f32.mrb[0].mxu0
      %v762 = vadd.f32 %v674, %v761
      %v763 = vpop.f32.mrb[0].mxu0
      %v764 = vpop.f32.mrb[0].mxu0
      %v765 = vadd.f32 %v677, %v764
      %v766 = vpop.f32.mrb[0].mxu0
      %767 = vmatprep.mubr.bf16.mxu0 %v398
      %768 = vmatmul.mubr.bf16.gmra.mrb[0].mxu0 %v397
      %v769 = vpop.f32.mrb[0].mxu0
      %v770 = vadd.f32 %v682, %v769
      %v771 = vpop.f32.mrb[0].mxu0
      %v772 = vpop.f32.mrb[0].mxu0
      %v773 = vadd.f32 %v685, %v772
      %v774 = vpop.f32.mrb[0].mxu0
      %775 = vmatprep.mubr.bf16.mxu0 %v402
      %776 = vmatmul.mubr.bf16.gmra.mrb[0].mxu0 %v401
      %v777 = vpop.f32.mrb[0].mxu0
      %v778 = vadd.f32 %v690, %v777
      %v779 = vpop.f32.mrb[0].mxu0
      %v780 = vpop.f32.mrb[0].mxu0
      %v781 = vadd.f32 %v693, %v780
      %v782 = vpop.f32.mrb[0].mxu0
      %783 = vmatprep.mubr.bf16.mxu0 %v406
      %784 = vmatmul.mubr.bf16.gmra.mrb[0].mxu0 %v405
      %v785 = vpop.f32.mrb[0].mxu0
      %v786 = vadd.f32 %v698, %v785
      %v787 = vpop.f32.mrb[0].mxu0
      %v788 = vpop.f32.mrb[0].mxu0
      %v789 = vadd.f32 %v701, %v788
      %v790 = vpop.f32.mrb[0].mxu0
      %791 = vmatprep.mubr.bf16.mxu0 %v410
      %792 = vmatmul.mubr.bf16.gmra.mrb[0].mxu0 %v409
      %v793 = vpop.f32.mrb[0].mxu0
      %v794 = vadd.f32 %v706, %v793
      %v795 = vpop.f32.mrb[0].mxu0
      %v796 = vpop.f32.mrb[0].mxu0
      %v797 = vadd.f32 %v709, %v796
      %v798 = vpop.f32.mrb[0].mxu0
      %799 = vmatprep.mubr.bf16.mxu0 %v414
      %800 = vmatmul.mubr.bf16.gmra.mrb[0].mxu0 %v413
      %v801 = vpop.f32.mrb[0].mxu0
      %v802 = vadd.f32 %v714, %v801
      %v803 = vpop.f32.mrb[0].mxu0
      %v804 = vpop.f32.mrb[0].mxu0
      %v805 = vadd.f32 %v717, %v804
      %v806 = vpop.f32.mrb[0].mxu0
      %807 = vmatprep.mubr.bf16.mxu0 %v418
      %808 = vmatmul.mubr.bf16.gmra.mrb[0].mxu0 %v417
      %v809 = vpop.f32.mrb[0].mxu0
      %v810 = vadd.f32 %v722, %v809
      %v811 = vpop.f32.mrb[0].mxu0
      %v812 = vpop.f32.mrb[0].mxu0
      %v813 = vpop.f32.mrb[0].mxu0
      %814 = vdwg.mxu0
      %v815 = vpack.c.bf16 %v765, %v762
      %v816 = vpack.c.bf16 %v773, %v770
      %v817 = vpack.c.bf16 %v781, %v778
      %v818 = vpack.c.bf16 %v789, %v786
      %v819 = vpack.c.bf16 %v797, %v794
      %v820 = vpack.c.bf16 %v805, %v802
      %v821 = vpack.c.bf16 %v810, %v810
      %v829 = vunpack.c.l.b16 %v815
      %v830 = vunpack.c.h.b16 %v815
      %v831 = vunpack.c.l.b16 %v816
      %v832 = vunpack.c.h.b16 %v816
      %v833 = vunpack.c.l.b16 %v817
      %v834 = vunpack.c.h.b16 %v817
      %v835 = vunpack.c.l.b16 %v818
      %v836 = vunpack.c.h.b16 %v818
      %v837 = vunpack.c.l.b16 %v819
      %v838 = vunpack.c.h.b16 %v819
      %v839 = vunpack.c.l.b16 %v820
      %v840 = vunpack.c.h.b16 %v820
      %v841 = vunpack.c.l.b16 %v821
      %v842 = vpack.c.b16 %v829, %v829
      %v843 = vpack.c.b16 %v830, %v830
      %v844 = vpack.c.b16 %v831, %v831
      %v845 = vpack.c.b16 %v832, %v832
      %v846 = vpack.c.b16 %v833, %v833
      %v847 = vpack.c.b16 %v834, %v834
      %v848 = vpack.c.b16 %v835, %v835
      %v849 = vpack.c.b16 %v836, %v836
      %v850 = vpack.c.b16 %v837, %v837
      %v851 = vpack.c.b16 %v838, %v838
      %v852 = vpack.c.b16 %v839, %v839
      %v853 = vpack.c.b16 %v840, %v840
      %v854 = vpack.c.b16 %v841, %v841
      %868 = vst [vmem:[%s209] sm:$0xf] %v842
      %869 = vst [vmem:[%s209 + $0x4] sm:$0xf] %v843
      %870 = vst [vmem:[%s209 + $0x8] sm:$0xf] %v844
      %871 = vst [vmem:[%s209 + $0xc] sm:$0xf] %v845
      %872 = vst [vmem:[%s209 + $0x10] sm:$0xf] %v846
      %873 = vst [vmem:[%s209 + $0x14] sm:$0xf] %v847
      %874 = vst [vmem:[%s209 + $0x18] sm:$0xf] %v848
      %875 = vst [vmem:[%s209 + $0x1c] sm:$0xf] %v849
      %876 = vst [vmem:[%s209 + $0x20] sm:$0xf] %v850
      %877 = vst [vmem:[%s209 + $0x24] sm:$0xf] %v851
      %878 = vst [vmem:[%s209 + $0x28] sm:$0xf] %v852
      %879 = vst [vmem:[%s209 + $0x2c] sm:$0xf] %v853
      %880 = vst [vmem:[%s209 + $0x30] sm:$0xf] %v854
      %p881 = scmp.eq.s32.totalorder %s16, 1
      %p882 = scmp.ne.s32.totalorder %s16, 1
      // Predicated region
      $region33: #{encoder_forward.4} parent=31 // pred_check
        %p883 = pneg %p882
      $region34: #{encoder_forward.4} parent=31 // pred_check_branch
        %885 = sbr.rel (%p883) target = $region36
      $region35: #{encoder_forward.4} parent=31 // pred_region
        %v886 = vadd.f32 %v762, %v765
        %v887 = vadd.f32 %v886, %v770
        %v888 = vadd.f32 %v887, %v773
        %v889 = vadd.f32 %v888, %v778
        %v890 = vadd.f32 %v889, %v781
        %v891 = vadd.f32 %v890, %v786
        %v892 = vadd.f32 %v891, %v789
        %v893 = vadd.f32 %v892, %v794
        %v894 = vadd.f32 %v893, %v797
        %v895 = vadd.f32 %v894, %v802
        %v896 = vadd.f32 %v895, %v805
        %v897 = vadd.f32 %v896, %v810
        %v898 = vrot.slane %v897, 4
        %v899 = vadd.f32 %v897, %v898
        %v900 = vrot.slane %v899, 2
        %v901 = vadd.f32 %v899, %v900
        %v902 = vrot.slane %v901, 1
        %v903 = vadd.f32 %v901, %v902
        %v904 = vmul.f32 %v762, %v762
        %v905 = vmul.f32 %v765, %v765
        %v906 = vmul.f32 %v770, %v770
        %v907 = vmul.f32 %v773, %v773
        %v908 = vmul.f32 %v778, %v778
        %v909 = vmul.f32 %v781, %v781
        %v910 = vmul.f32 %v786, %v786
        %v911 = vmul.f32 %v789, %v789
        %v912 = vmul.f32 %v794, %v794
        %v913 = vmul.f32 %v797, %v797
        %v914 = vmul.f32 %v802, %v802
        %v915 = vmul.f32 %v805, %v805
        %v916 = vmul.f32 %v810, %v810
        %v917 = vadd.f32 %v904, %v905
        %v918 = vadd.f32 %v917, %v906
        %v919 = vadd.f32 %v918, %v907
        %v920 = vadd.f32 %v919, %v908
        %v921 = vadd.f32 %v920, %v909
        %v922 = vadd.f32 %v921, %v910
        %v923 = vadd.f32 %v922, %v911
        %v924 = vadd.f32 %v923, %v912
        %v925 = vadd.f32 %v924, %v913
        %v926 = vadd.f32 %v925, %v914
        %v927 = vadd.f32 %v926, %v915
        %v928 = vadd.f32 %v927, %v916
        %v929 = vrot.slane %v928, 4
        %v930 = vadd.f32 %v928, %v929
        %v931 = vrot.slane %v930, 2
        %v932 = vadd.f32 %v930, %v931
        %v933 = vrot.slane %v932, 1
        %v934 = vadd.f32 %v932, %v933
        %vm935 = vcmask 1040384
        %v936 = vsel %vm935, %v903, %v934
        %937 = vst [vmem:[%s214] sm:$0x3] %v936
      $region36: #{encoder_forward.4} parent=31 // pred_fallthru
        _
      // Predicated region
      $region37: #{encoder_forward.4} parent=31 // pred_check
        %p938 = pneg %p881
      $region38: #{encoder_forward.4} parent=31 // pred_check_branch
        %940 = sbr.rel (%p938) target = $region40
      $region39: #{encoder_forward.4} parent=31 // pred_region
        %v941 = vlaneseq
        %v942 = vshrl.u32 %v941, 7
        %v943 = vadd.s32 %v942, 8
        %v944 = vadd.s32 %v942, 16
        %v945 = vadd.s32 %v942, 24
        %v946 = vadd.s32 %v942, 32
        %v947 = vadd.s32 %v942, 40
        %v948 = vadd.s32 %v942, 48
        %v949 = vadd.s32 %v942, 56
        %v950 = vadd.s32 %v942, 64
        %v951 = vadd.s32 %v942, 72
        %v952 = vadd.s32 %v942, 80
        %v953 = vadd.s32 %v942, 88
        %v954 = vadd.s32 %v942, 96
        %vm955 = vcmp.lt.s32.totalorder %v942, 96
        %vm956 = vcmp.lt.s32.totalorder %v943, 96
        %vm957 = vcmp.lt.s32.totalorder %v944, 96
        %vm958 = vcmp.lt.s32.totalorder %v945, 96
        %vm959 = vcmp.lt.s32.totalorder %v946, 96
        %vm960 = vcmp.lt.s32.totalorder %v947, 96
        %vm961 = vcmp.lt.s32.totalorder %v948, 96
        %vm962 = vcmp.lt.s32.totalorder %v949, 96
        %vm963 = vcmp.lt.s32.totalorder %v950, 96
        %vm964 = vcmp.lt.s32.totalorder %v951, 96
        %vm965 = vcmp.lt.s32.totalorder %v952, 96
        %vm966 = vcmp.lt.s32.totalorder %v953, 96
        %vm967 = vcmp.lt.s32.totalorder %v954, 96
        %v968 = vsel %vm955, 1, 0
        %v969 = vsel %vm956, 1, 0
        %v970 = vsel %vm957, 1, 0
        %v971 = vsel %vm958, 1, 0
        %v972 = vsel %vm959, 1, 0
        %v973 = vsel %vm960, 1, 0
        %v974 = vsel %vm961, 1, 0
        %v975 = vsel %vm962, 1, 0
        %v976 = vsel %vm963, 1, 0
        %v977 = vsel %vm964, 1, 0
        %v978 = vsel %vm965, 1, 0
        %v979 = vsel %vm966, 1, 0
        %v980 = vsel %vm967, 1, 0
        %vm981 = vcmp.eq.s32.totalorder %v968, 1
        %vm982 = vcmp.eq.s32.totalorder %v969, 1
        %vm983 = vcmp.eq.s32.totalorder %v970, 1
        %vm984 = vcmp.eq.s32.totalorder %v971, 1
        %vm985 = vcmp.eq.s32.totalorder %v972, 1
        %vm986 = vcmp.eq.s32.totalorder %v973, 1
        %vm987 = vcmp.eq.s32.totalorder %v974, 1
        %vm988 = vcmp.eq.s32.totalorder %v975, 1
        %vm989 = vcmp.eq.s32.totalorder %v976, 1
        %vm990 = vcmp.eq.s32.totalorder %v977, 1
        %vm991 = vcmp.eq.s32.totalorder %v978, 1
        %vm992 = vcmp.eq.s32.totalorder %v979, 1
        %vm993 = vcmp.eq.s32.totalorder %v980, 1
        %v994 = vsel %vm981, %v762, 0.0
        %v995 = vsel %vm982, %v765, 0.0
        %v996 = vsel %vm983, %v770, 0.0
        %v997 = vsel %vm984, %v773, 0.0
        %v998 = vsel %vm985, %v778, 0.0
        %v999 = vsel %vm986, %v781, 0.0
        %v1000 = vsel %vm987, %v786, 0.0
        %v1001 = vsel %vm988, %v789, 0.0
        %v1002 = vsel %vm989, %v794, 0.0
        %v1003 = vsel %vm990, %v797, 0.0
        %v1004 = vsel %vm991, %v802, 0.0
        %v1005 = vsel %vm992, %v805, 0.0
        %v1006 = vsel %vm993, %v810, 0.0
        %v1007 = vadd.f32 %v994, %v995
        %v1008 = vadd.f32 %v1007, %v996
        %v1009 = vadd.f32 %v1008, %v997
        %v1010 = vadd.f32 %v1009, %v998
        %v1011 = vadd.f32 %v1010, %v999
        %v1012 = vadd.f32 %v1011, %v1000
        %v1013 = vadd.f32 %v1012, %v1001
        %v1014 = vadd.f32 %v1013, %v1002
        %v1015 = vadd.f32 %v1014, %v1003
        %v1016 = vadd.f32 %v1015, %v1004
        %v1017 = vadd.f32 %v1016, %v1005
        %v1018 = vadd.f32 %v1017, %v1006
        %v1019 = vrot.slane %v1018, 4
        %v1020 = vadd.f32 %v1018, %v1019
        %v1021 = vrot.slane %v1020, 2
        %v1022 = vadd.f32 %v1020, %v1021
        %v1023 = vrot.slane %v1022, 1
        %v1024 = vadd.f32 %v1022, %v1023
        %v1025 = vmul.f32 %v994, %v994
        %v1026 = vmul.f32 %v995, %v995
        %v1027 = vmul.f32 %v996, %v996
        %v1028 = vmul.f32 %v997, %v997
        %v1029 = vmul.f32 %v998, %v998
        %v1030 = vmul.f32 %v999, %v999
        %v1031 = vmul.f32 %v1000, %v1000
        %v1032 = vmul.f32 %v1001, %v1001
        %v1033 = vmul.f32 %v1002, %v1002
        %v1034 = vmul.f32 %v1003, %v1003
        %v1035 = vmul.f32 %v1004, %v1004
        %v1036 = vmul.f32 %v1005, %v1005
        %v1037 = vmul.f32 %v1006, %v1006
        %v1038 = vadd.f32 %v1025, %v1026
        %v1039 = vadd.f32 %v1038, %v1027
        %v1040 = vadd.f32 %v1039, %v1028
        %v1041 = vadd.f32 %v1040, %v1029
        %v1042 = vadd.f32 %v1041, %v1030
        %v1043 = vadd.f32 %v1042, %v1031
        %v1044 = vadd.f32 %v1043, %v1032
        %v1045 = vadd.f32 %v1044, %v1033
        %v1046 = vadd.f32 %v1045, %v1034
        %v1047 = vadd.f32 %v1046, %v1035
        %v1048 = vadd.f32 %v1047, %v1036
        %v1049 = vadd.f32 %v1048, %v1037
        %v1050 = vrot.slane %v1049, 4
        %v1051 = vadd.f32 %v1049, %v1050
        %v1052 = vrot.slane %v1051, 2
        %v1053 = vadd.f32 %v1051, %v1052
        %v1054 = vrot.slane %v1053, 1
        %v1055 = vadd.f32 %v1053, %v1054
        %vm1056 = vcmask 1040384
        %v1057 = vsel %vm1056, %v1024, %v1055
        %1058 = vst [vmem:[%s214] sm:$0x3] %v1057
      $region40: #{encoder_forward.4} parent=31 // pred_fallthru
        _
      %s1059 = smul.u32 13, %s16
      %p1060 = scmp.lt.s32.totalorder %s1059, 25
      %s1061 = scalar_select %p1060, %s1059, 25
      %s1062 = smul.addr %s1061, 4
      %s1063 = scalar_lea.vmem %s3, %s1062
      %p1064 = scmp.lt.s32.totalorder %s16, 1
      %s1065 = scalar_select %p1064, %s16, 1
      %s1066 = smul.addr %s1065, 2
      %s1067 = scalar_lea.vmem %s4, %s1066
      // Predicated region
      $region41: #{encoder_forward.4} parent=31 // pred_check
        %p1068 = pneg %p102
      $region42: #{encoder_forward.4} parent=31 // pred_check_branch
        %1070 = sbr.rel (%p1068) target = $region44
      $region43: #{encoder_forward.4} parent=31 // pred_region
        %s1071 = smul.u32 13, %s16
      $region44: #{encoder_forward.4} parent=31 // pred_fallthru
        _
      // Predicated region
      $region45: #{encoder_forward.4} parent=31 // pred_check
        %p1072 = pneg %p128
      $region46: #{encoder_forward.4} parent=31 // pred_check_branch
        %1074 = sbr.rel (%p1072) target = $region48
      $region47: #{encoder_forward.4} parent=31 // pred_region
        _
      $region48: #{encoder_forward.4} parent=31 // pred_fallthru
        _
    $region32: #{encoder_forward.4} parent=5 // pred_fallthru
      _
    %p1075 = scmp.le.s32.totalorder 2, %s11
    // Predicated region
    $region49: #{encoder_forward.4} parent=5 // pred_check
      %p1076 = pneg %p1075
    $region50: #{encoder_forward.4} parent=5 // pred_check_branch
      %1078 = sbr.rel (%p1076) target = $region52
    $region51: #{encoder_forward.4} parent=5 // pred_region
      %s1079 = ssub.s32 %s11, 2
      // Predicated region
      $region53: #{encoder_forward.4} parent=51 // pred_check
        %p1080 = pneg %p108
      $region54: #{encoder_forward.4} parent=51 // pred_check_branch
        %1082 = sbr.rel (%p1080) target = $region56
      $region55: #{encoder_forward.4} parent=51 // pred_region
        %s1083 = smul.u32 13, %s17
        %p1084 = scmp.lt.s32.totalorder %s1083, 25
        %s1085 = scalar_select %p1084, %s1083, 25
        %s1086 = smul.addr %s1085, 4
        %s1087 = scalar_lea.vmem %s3, %s1086
      $region56: #{encoder_forward.4} parent=51 // pred_fallthru
        _
      // Predicated region
      $region57: #{encoder_forward.4} parent=51 // pred_check
        %p1088 = pneg %p134
      $region58: #{encoder_forward.4} parent=51 // pred_check_branch
        %1090 = sbr.rel (%p1088) target = $region60
      $region59: #{encoder_forward.4} parent=51 // pred_region
        %p1091 = scmp.lt.s32.totalorder %s17, 1
        %s1092 = scalar_select %p1091, %s17, 1
        %s1093 = smul.addr %s1092, 2
        %s1094 = scalar_lea.vmem %s4, %s1093
      $region60: #{encoder_forward.4} parent=51 // pred_fallthru
        _
    $region52: #{encoder_forward.4} parent=5 // pred_fallthru
      _
  $region6: #{encoder_forward.4} parent=0 // loop_footer
    %s15 = sadd.s32 1, %s11
  $region7: #{encoder_forward.4} parent=0 // loop_footer_branch
    %10 = sbr.rel target = $region3
  $region8: #{encoder_forward.4} parent=0 // loop_exit
    _

// kernel: encoder_forward.3
$region0: #{encoder_forward.3}
  #allocation0 [shape = 'u32[]', space=smem, size = 0x4, offset = 0x4, fixed_abs, tag = 'smem constant byte address 0x4 - core index']
  #allocation1 [shape = 'u32[144,128]{1,0:T(1,128)}', space=vmem, size = 0x12000, scoped, tag = 'internal scratch']
  %s0 = inlined_call_operand.vmem [shape: bf16[208,640], index: 0, kind: input, shape index: {}]
  %s1 = inlined_call_operand.vmem [shape: bf16[640,512], index: 1, kind: input, shape index: {}]
  %s2 = inlined_call_operand.vmem [shape: f32[1,512], index: 2, kind: input, shape index: {}]
  %s3 = inlined_call_operand.vmem [shape: bf16[208,512], index: 3, kind: output, shape index: {0}]
  %s4 = inlined_call_operand.vmem [shape: f32[2,2,512], index: 4, kind: output, shape index: {1}]
  %5 = xla_tuple %s3, %s4
  %s6 = sld [smem:[#allocation0]]
  $region61: #{encoder_forward.3} parent=0
    _
  %s8 = ssub.s32 1, %s6
  %s9 = scalar_select 0, %s8, %s6
  loop: start=0, step=1, limit=4
  $region2: #{encoder_forward.3} parent=0 // loop_pre_header
    _
  $region3: #{encoder_forward.3} parent=0 // loop_header
    %s11 = sphi 0, %s15
    %p12 = scmp.ge.s32.totalorder %s11, 4
    %s21 = sphi 0, %s23
    %s24 = sphi 0, %s21
    %s25 = sphi 0, %s24
    %s41 = sphi 0, %s25
    %s45 = sphi 0, %s45
    %s47 = sphi 0, %s45
    %s48 = sphi 0, %s47
    %s62 = sphi 0, %s48
    %s66 = sphi 0, %s66
    %s68 = sphi 0, %s66
    %s69 = sphi 0, %s68
    %s83 = sphi 0, %s69
    %s89 = sphi 0, %s91
    %s92 = sphi 0, %s89
    %s93 = sphi 0, %s92
    %s109 = sphi 0, %s93
    %s115 = sphi 0, %s117
    %s118 = sphi 0, %s115
    %s119 = sphi 0, %s118
    %s135 = sphi 0, %s119
  $region4: #{encoder_forward.3} parent=0 // loop_header_branch
    %14 = sbr.rel (%p12) target = $region8
  $region5: #{encoder_forward.3} parent=0 // loop_body
    %s16 = ssub.s32 %s11, 1
    %s17 = ssub.s32 %s11, 2
    %s18 = sadd.s32 %s11, 1
    %s19 = ssub.s32 %s11, %s18
    %p20 = scmp.eq.s32.totalorder %s19, 0
    %s22 = sadd.s32 %s21, 1
    %s23 = scalar_select %p20, %s21, %s22
    %p26 = pneg %p20
    %p27 = scmp.eq.s32.totalorder %s11, 1
    %p28 = por %p26, %p27
    %p29 = scmp.ne.s32.totalorder %s21, %s24
    %p30 = scmp.eq.s32.totalorder %s11, 0
    %p31 = por %p29, %p30
    %p32 = scmp.ne.s32.totalorder %s21, %s24
    %p33 = scmp.eq.s32.totalorder %s16, 1
    %p34 = por %p32, %p33
    %p35 = scmp.ne.s32.totalorder %s24, %s25
    %p36 = scmp.eq.s32.totalorder %s16, 0
    %p37 = por %p35, %p36
    %p38 = scmp.ne.s32.totalorder %s24, %s25
    %p39 = scmp.eq.s32.totalorder %s17, 1
    %p40 = por %p38, %p39
    %p42 = scmp.ne.s32.totalorder %s25, %s41
    %p43 = scmp.eq.s32.totalorder %s17, 0
    %p44 = por %p42, %p43
    %s46 = sadd.s32 %s45, 1
    %p49 = scmp.eq.s32.totalorder %s11, 1
    %p50 = scmp.ne.s32.totalorder %s45, %s47
    %p51 = scmp.eq.s32.totalorder %s11, 0
    %p52 = por %p50, %p51
    %p53 = scmp.ne.s32.totalorder %s45, %s47
    %p54 = scmp.eq.s32.totalorder %s16, 1
    %p55 = por %p53, %p54
    %p56 = scmp.ne.s32.totalorder %s47, %s48
    %p57 = scmp.eq.s32.totalorder %s16, 0
    %p58 = por %p56, %p57
    %p59 = scmp.ne.s32.totalorder %s47, %s48
    %p60 = scmp.eq.s32.totalorder %s17, 1
    %p61 = por %p59, %p60
    %p63 = scmp.ne.s32.totalorder %s48, %s62
    %p64 = scmp.eq.s32.totalorder %s17, 0
    %p65 = por %p63, %p64
    %s67 = sadd.s32 %s66, 1
    %p70 = scmp.eq.s32.totalorder %s11, 1
    %p71 = scmp.ne.s32.totalorder %s66, %s68
    %p72 = scmp.eq.s32.totalorder %s11, 0
    %p73 = por %p71, %p72
    %p74 = scmp.ne.s32.totalorder %s66, %s68
    %p75 = scmp.eq.s32.totalorder %s16, 1
    %p76 = por %p74, %p75
    %p77 = scmp.ne.s32.totalorder %s68, %s69
    %p78 = scmp.eq.s32.totalorder %s16, 0
    %p79 = por %p77, %p78
    %p80 = scmp.ne.s32.totalorder %s68, %s69
    %p81 = scmp.eq.s32.totalorder %s17, 1
    %p82 = por %p80, %p81
    %p84 = scmp.ne.s32.totalorder %s69, %s83
    %p85 = scmp.eq.s32.totalorder %s17, 0
    %p86 = por %p84, %p85
    %s87 = ssub.s32 %s11, %s18
    %p88 = scmp.eq.s32.totalorder %s87, 0
    %s90 = sadd.s32 %s89, 1
    %s91 = scalar_select %p88, %s89, %s90
    %p94 = pneg %p88
    %p95 = scmp.eq.s32.totalorder %s11, 1
    %p96 = por %p94, %p95
    %p97 = scmp.ne.s32.totalorder %s89, %s92
    %p98 = scmp.eq.s32.totalorder %s11, 0
    %p99 = por %p97, %p98
    %p100 = scmp.ne.s32.totalorder %s89, %s92
    %p101 = scmp.eq.s32.totalorder %s16, 1
    %p102 = por %p100, %p101
    %p103 = scmp.ne.s32.totalorder %s92, %s93
    %p104 = scmp.eq.s32.totalorder %s16, 0
    %p105 = por %p103, %p104
    %p106 = scmp.ne.s32.totalorder %s92, %s93
    %p107 = scmp.eq.s32.totalorder %s17, 1
    %p108 = por %p106, %p107
    %p110 = scmp.ne.s32.totalorder %s93, %s109
    %p111 = scmp.eq.s32.totalorder %s17, 0
    %p112 = por %p110, %p111
    %s113 = ssub.s32 %s11, %s18
    %p114 = scmp.eq.s32.totalorder %s113, 0
    %s116 = sadd.s32 %s115, 1
    %s117 = scalar_select %p114, %s115, %s116
    %p120 = pneg %p114
    %p121 = scmp.eq.s32.totalorder %s11, 1
    %p122 = por %p120, %p121
    %p123 = scmp.ne.s32.totalorder %s115, %s118
    %p124 = scmp.eq.s32.totalorder %s11, 0
    %p125 = por %p123, %p124
    %p126 = scmp.ne.s32.totalorder %s115, %s118
    %p127 = scmp.eq.s32.totalorder %s16, 1
    %p128 = por %p126, %p127
    %p129 = scmp.ne.s32.totalorder %s118, %s119
    %p130 = scmp.eq.s32.totalorder %s16, 0
    %p131 = por %p129, %p130
    %p132 = scmp.ne.s32.totalorder %s118, %s119
    %p133 = scmp.eq.s32.totalorder %s17, 1
    %p134 = por %p132, %p133
    %p136 = scmp.ne.s32.totalorder %s119, %s135
    %p137 = scmp.eq.s32.totalorder %s17, 0
    %p138 = por %p136, %p137
    %p139 = scmp.le.s32.totalorder 1, %s11
    %p140 = scmp.lt.s32.totalorder %s11, 3
    %p141 = pnand %p139, %p140
    %p142 = pneg %p141
    // Predicated region
    $region9: #{encoder_forward.3} parent=5 // pred_check
      _
    $region10: #{encoder_forward.3} parent=5 // pred_check_branch
      %144 = sbr.rel (%p141) target = $region12
    $region11: #{encoder_forward.3} parent=5 // pred_region
      %s145 = ssub.s32 %s11, 1
      // Predicated region
      $region13: #{encoder_forward.3} parent=11 // pred_check
        %p146 = pneg %p58
      $region14: #{encoder_forward.3} parent=11 // pred_check_branch
        %148 = sbr.rel (%p146) target = $region16
      $region15: #{encoder_forward.3} parent=11 // pred_region
        _
      $region16: #{encoder_forward.3} parent=11 // pred_fallthru
        _
      // Predicated region
      $region17: #{encoder_forward.3} parent=11 // pred_check
        %p149 = pneg %p79
      $region18: #{encoder_forward.3} parent=11 // pred_check_branch
        %151 = sbr.rel (%p149) target = $region20
      $region19: #{encoder_forward.3} parent=11 // pred_region
        _
      $region20: #{encoder_forward.3} parent=11 // pred_fallthru
        _
    $region12: #{encoder_forward.3} parent=5 // pred_fallthru
      _
    %p152 = scmp.lt.s32.totalorder %s11, 2
    // Predicated region
    $region21: #{encoder_forward.3} parent=5 // pred_check
      %p153 = pneg %p152
    $region22: #{encoder_forward.3} parent=5 // pred_check_branch
      %155 = sbr.rel (%p153) target = $region24
    $region23: #{encoder_forward.3} parent=5 // pred_region
      // Predicated region
      $region25: #{encoder_forward.3} parent=23 // pred_check
        %p156 = pneg %p31
      $region26: #{encoder_forward.3} parent=23 // pred_check_branch
        %158 = sbr.rel (%p156) target = $region28
      $region27: #{encoder_forward.3} parent=23 // pred_region
        %s159 = smul.u32 13, %s11
        %p160 = scmp.lt.s32.totalorder %s159, 25
        %s161 = scalar_select %p160, %s159, 25
        %s162 = smul.addr %s161, 5
        %s163 = smul.addr %s162, 4
        %s164 = scalar_lea.vmem %s0, %s163
        %s165 = smul.u32 13, %s11
      $region28: #{encoder_forward.3} parent=23 // pred_fallthru
        _
    $region24: #{encoder_forward.3} parent=5 // pred_fallthru
      _
    %p166 = scmp.le.s32.totalorder 1, %s11
    %p167 = scmp.lt.s32.totalorder %s11, 3
    %p168 = pnand %p166, %p167
    %p169 = pneg %p168
    // Predicated region
    $region29: #{encoder_forward.3} parent=5 // pred_check
      _
    $region30: #{encoder_forward.3} parent=5 // pred_check_branch
      %171 = sbr.rel (%p168) target = $region32
    $region31: #{encoder_forward.3} parent=5 // pred_region
      %s172 = ssub.s32 %s11, 1
      %s173 = smul.u32 13, %s16
      %p174 = scmp.lt.s32.totalorder %s173, 25
      %s175 = scalar_select %p174, %s173, 25
      %s176 = smul.addr %s175, 5
      %s177 = smul.addr %s176, 4
      %s178 = scalar_lea.vmem %s0, %s177
      %p179 = pneg %p37
      %p180 = pneg %p34
      %p181 = pneg %p58
      %p182 = pneg %p55
      %p183 = pneg %p79
      %p184 = pneg %p76
      %p185 = pneg %p105
      %p186 = pneg %p102
      %s187 = smul.u32 13, %s16
      %p188 = scmp.lt.s32.totalorder %s187, 25
      %s189 = scalar_select %p188, %s187, 25
      %s190 = smul.addr %s189, 4
      %s191 = smul.addr %s190, 4
      %s192 = scalar_lea.vmem %s3, %s191
      %p193 = pneg %p131
      %p194 = pneg %p128
      %p195 = scmp.lt.s32.totalorder %s16, 1
      %s196 = scalar_select %p195, %s16, 1
      %s197 = smul.addr %s196, 4
      %s198 = smul.addr %s197, 2
      %s199 = scalar_lea.vmem %s4, %s198
      %s200 = smul.u32 13, %s16
      %p201 = scmp.lt.s32.totalorder %s200, 25
      %s202 = scalar_select %p201, %s200, 25
      %s203 = smul.addr %s202, 5
      %s204 = smul.addr %s203, 4
      %s205 = scalar_lea.vmem %s0, %s204
      %s206 = smul.u32 13, %s16
      %s207 = smul.u32 13, %s16
      %p208 = scmp.lt.s32.totalorder %s207, 25
      %s209 = scalar_select %p208, %s207, 25
      %s210 = smul.addr %s209, 4
      %s211 = smul.addr %s210, 4
      %s212 = scalar_lea.vmem %s3, %s211
      %s213 = smul.u32 13, %s16
      %p214 = scmp.lt.s32.totalorder %s16, 1
      %s215 = scalar_select %p214, %s16, 1
      %s216 = smul.addr %s215, 4
      %s217 = smul.addr %s216, 2
      %s218 = scalar_lea.vmem %s4, %s217
      %v220 = vld [vmem:[%s205] sm:$0xff]
      %v221 = vld [vmem:[%s205 + $0x8] sm:$0xff]
      %v222 = vld [vmem:[%s205 + $0x10] sm:$0xf]
      %v223 = vld [vmem:[%s205 + $0x14] sm:$0xff]
      %v224 = vld [vmem:[%s205 + $0x1c] sm:$0xff]
      %v225 = vld [vmem:[%s205 + $0x24] sm:$0xf]
      %v226 = vld [vmem:[%s205 + $0x28] sm:$0xff]
      %v227 = vld [vmem:[%s205 + $0x30] sm:$0xff]
      %v228 = vld [vmem:[%s205 + $0x38] sm:$0xf]
      %v229 = vld [vmem:[%s205 + $0x3c] sm:$0xff]
      %v230 = vld [vmem:[%s205 + $0x44] sm:$0xff]
      %v231 = vld [vmem:[%s205 + $0x4c] sm:$0xf]
      %v232 = vld [vmem:[%s205 + $0x50] sm:$0xff]
      %v233 = vld [vmem:[%s205 + $0x58] sm:$0xff]
      %v234 = vld [vmem:[%s205 + $0x60] sm:$0xf]
      %v235 = vld [vmem:[%s205 + $0x64] sm:$0xff]
      %v236 = vld [vmem:[%s205 + $0x6c] sm:$0xff]
      %v237 = vld [vmem:[%s205 + $0x74] sm:$0xf]
      %v238 = vld [vmem:[%s205 + $0x78] sm:$0xff]
      %v239 = vld [vmem:[%s205 + $0x80] sm:$0xff]
      %v240 = vld [vmem:[%s205 + $0x88] sm:$0xf]
      %v241 = vld [vmem:[%s205 + $0x8c] sm:$0xff]
      %v242 = vld [vmem:[%s205 + $0x94] sm:$0xff]
      %v243 = vld [vmem:[%s205 + $0x9c] sm:$0xf]
      %v244 = vld [vmem:[%s205 + $0xa0] sm:$0xff]
      %v245 = vld [vmem:[%s205 + $0xa8] sm:$0xff]
      %v246 = vld [vmem:[%s205 + $0xb0] sm:$0xf]
      %v247 = vld [vmem:[%s205 + $0xb4] sm:$0xff]
      %v248 = vld [vmem:[%s205 + $0xbc] sm:$0xff]
      %v249 = vld [vmem:[%s205 + $0xc4] sm:$0xf]
      %v250 = vld [vmem:[%s205 + $0xc8] sm:$0xff]
      %v251 = vld [vmem:[%s205 + $0xd0] sm:$0xff]
      %v252 = vld [vmem:[%s205 + $0xd8] sm:$0xf]
      %v253 = vld [vmem:[%s205 + $0xdc] sm:$0xff]
      %v254 = vld [vmem:[%s205 + $0xe4] sm:$0xff]
      %v255 = vld [vmem:[%s205 + $0xec] sm:$0xf]
      %v256 = vld [vmem:[%s205 + $0xf0] sm:$0xff]
      %v257 = vld [vmem:[%s205 + $0xf8] sm:$0xff]
      %v258 = vld [vmem:[%s205 + $0x100] sm:$0xf]
      %v259 = vld [vmem:[%s1] sm:$0xff]
      %v260 = vld [vmem:[%s1 + $0x8] sm:$0xff]
      %v261 = vld [vmem:[%s1 + $0x10] sm:$0xff]
      %v262 = vld [vmem:[%s1 + $0x18] sm:$0xff]
      %v263 = vld [vmem:[%s1 + $0x20] sm:$0xff]
      %v264 = vld [vmem:[%s1 + $0x28] sm:$0xff]
      %v265 = vld [vmem:[%s1 + $0x30] sm:$0xff]
      %v266 = vld [vmem:[%s1 + $0x38] sm:$0xff]
      %v267 = vld [vmem:[%s1 + $0x40] sm:$0xff]
      %v268 = vld [vmem:[%s1 + $0x48] sm:$0xff]
      %v269 = vld [vmem:[%s1 + $0x50] sm:$0xff]
      %v270 = vld [vmem:[%s1 + $0x58] sm:$0xff]
      %v271 = vld [vmem:[%s1 + $0x60] sm:$0xff]
      %v272 = vld [vmem:[%s1 + $0x68] sm:$0xff]
      %v273 = vld [vmem:[%s1 + $0x70] sm:$0xff]
      %v274 = vld [vmem:[%s1 + $0x78] sm:$0xff]
      %v275 = vld [vmem:[%s1 + $0x80] sm:$0xff]
      %v276 = vld [vmem:[%s1 + $0x88] sm:$0xff]
      %v277 = vld [vmem:[%s1 + $0x90] sm:$0xff]
      %v278 = vld [vmem:[%s1 + $0x98] sm:$0xff]
      %v279 = vld [vmem:[%s1 + $0xa0] sm:$0xff]
      %v280 = vld [vmem:[%s1 + $0xa8] sm:$0xff]
      %v281 = vld [vmem:[%s1 + $0xb0] sm:$0xff]
      %v282 = vld [vmem:[%s1 + $0xb8] sm:$0xff]
      %v283 = vld [vmem:[%s1 + $0xc0] sm:$0xff]
      %v284 = vld [vmem:[%s1 + $0xc8] sm:$0xff]
      %v285 = vld [vmem:[%s1 + $0xd0] sm:$0xff]
      %v286 = vld [vmem:[%s1 + $0xd8] sm:$0xff]
      %v287 = vld [vmem:[%s1 + $0xe0] sm:$0xff]
      %v288 = vld [vmem:[%s1 + $0xe8] sm:$0xff]
      %v289 = vld [vmem:[%s1 + $0xf0] sm:$0xff]
      %v290 = vld [vmem:[%s1 + $0xf8] sm:$0xff]
      %v291 = vld [vmem:[%s1 + $0x100] sm:$0xff]
      %v292 = vld [vmem:[%s1 + $0x108] sm:$0xff]
      %v293 = vld [vmem:[%s1 + $0x110] sm:$0xff]
      %v294 = vld [vmem:[%s1 + $0x118] sm:$0xff]
      %v295 = vld [vmem:[%s1 + $0x120] sm:$0xff]
      %v296 = vld [vmem:[%s1 + $0x128] sm:$0xff]
      %v297 = vld [vmem:[%s1 + $0x130] sm:$0xff]
      %v298 = vld [vmem:[%s1 + $0x138] sm:$0xff]
      %v299 = vld [vmem:[%s1 + $0x140] sm:$0xff]
      %v300 = vld [vmem:[%s1 + $0x148] sm:$0xff]
      %v301 = vld [vmem:[%s1 + $0x150] sm:$0xff]
      %v302 = vld [vmem:[%s1 + $0x158] sm:$0xff]
      %v303 = vld [vmem:[%s1 + $0x160] sm:$0xff]
      %v304 = vld [vmem:[%s1 + $0x168] sm:$0xff]
      %v305 = vld [vmem:[%s1 + $0x170] sm:$0xff]
      %v306 = vld [vmem:[%s1 + $0x178] sm:$0xff]
      %v307 = vld [vmem:[%s1 + $0x180] sm:$0xff]
      %v308 = vld [vmem:[%s1 + $0x188] sm:$0xff]
      %v309 = vld [vmem:[%s1 + $0x190] sm:$0xff]
      %v310 = vld [vmem:[%s1 + $0x198] sm:$0xff]
      %v311 = vld [vmem:[%s1 + $0x1a0] sm:$0xff]
      %v312 = vld [vmem:[%s1 + $0x1a8] sm:$0xff]
      %v313 = vld [vmem:[%s1 + $0x1b0] sm:$0xff]
      %v314 = vld [vmem:[%s1 + $0x1b8] sm:$0xff]
      %v315 = vld [vmem:[%s1 + $0x1c0] sm:$0xff]
      %v316 = vld [vmem:[%s1 + $0x1c8] sm:$0xff]
      %v317 = vld [vmem:[%s1 + $0x1d0] sm:$0xff]
      %v318 = vld [vmem:[%s1 + $0x1d8] sm:$0xff]
      %v319 = vld [vmem:[%s1 + $0x1e0] sm:$0xff]
      %v320 = vld [vmem:[%s1 + $0x1e8] sm:$0xff]
      %v321 = vld [vmem:[%s1 + $0x1f0] sm:$0xff]
      %v322 = vld [vmem:[%s1 + $0x1f8] sm:$0xff]
      %v323 = vld [vmem:[%s1 + $0x200] sm:$0xff]
      %v324 = vld [vmem:[%s1 + $0x208] sm:$0xff]
      %v325 = vld [vmem:[%s1 + $0x210] sm:$0xff]
      %v326 = vld [vmem:[%s1 + $0x218] sm:$0xff]
      %v327 = vld [vmem:[%s1 + $0x220] sm:$0xff]
      %v328 = vld [vmem:[%s1 + $0x228] sm:$0xff]
      %v329 = vld [vmem:[%s1 + $0x230] sm:$0xff]
      %v330 = vld [vmem:[%s1 + $0x238] sm:$0xff]
      %v331 = vld [vmem:[%s1 + $0x240] sm:$0xff]
      %v332 = vld [vmem:[%s1 + $0x248] sm:$0xff]
      %v333 = vld [vmem:[%s1 + $0x250] sm:$0xff]
      %v334 = vld [vmem:[%s1 + $0x258] sm:$0xff]
      %v335 = vld [vmem:[%s1 + $0x260] sm:$0xff]
      %v336 = vld [vmem:[%s1 + $0x268] sm:$0xff]
      %v337 = vld [vmem:[%s1 + $0x270] sm:$0xff]
      %v338 = vld [vmem:[%s1 + $0x278] sm:$0xff]
      %v339 = vld [vmem:[%s1 + $0x280] sm:$0xff]
      %v340 = vld [vmem:[%s1 + $0x288] sm:$0xff]
      %v341 = vld [vmem:[%s1 + $0x290] sm:$0xff]
      %v342 = vld [vmem:[%s1 + $0x298] sm:$0xff]
      %v343 = vld [vmem:[%s1 + $0x2a0] sm:$0xff]
      %v344 = vld [vmem:[%s1 + $0x2a8] sm:$0xff]
      %v345 = vld [vmem:[%s1 + $0x2b0] sm:$0xff]
      %v346 = vld [vmem:[%s1 + $0x2b8] sm:$0xff]
      %v347 = vld [vmem:[%s1 + $0x2c0] sm:$0xff]
      %v348 = vld [vmem:[%s1 + $0x2c8] sm:$0xff]
      %v349 = vld [vmem:[%s1 + $0x2d0] sm:$0xff]
      %v350 = vld [vmem:[%s1 + $0x2d8] sm:$0xff]
      %v351 = vld [vmem:[%s1 + $0x2e0] sm:$0xff]
      %v352 = vld [vmem:[%s1 + $0x2e8] sm:$0xff]
      %v353 = vld [vmem:[%s1 + $0x2f0] sm:$0xff]
      %v354 = vld [vmem:[%s1 + $0x2f8] sm:$0xff]
      %v355 = vld [vmem:[%s1 + $0x300] sm:$0xff]
      %v356 = vld [vmem:[%s1 + $0x308] sm:$0xff]
      %v357 = vld [vmem:[%s1 + $0x310] sm:$0xff]
      %v358 = vld [vmem:[%s1 + $0x318] sm:$0xff]
      %v359 = vld [vmem:[%s1 + $0x320] sm:$0xff]
      %v360 = vld [vmem:[%s1 + $0x328] sm:$0xff]
      %v361 = vld [vmem:[%s1 + $0x330] sm:$0xff]
      %v362 = vld [vmem:[%s1 + $0x338] sm:$0xff]
      %v363 = vld [vmem:[%s1 + $0x340] sm:$0xff]
      %v364 = vld [vmem:[%s1 + $0x348] sm:$0xff]
      %v365 = vld [vmem:[%s1 + $0x350] sm:$0xff]
      %v366 = vld [vmem:[%s1 + $0x358] sm:$0xff]
      %v367 = vld [vmem:[%s1 + $0x360] sm:$0xff]
      %v368 = vld [vmem:[%s1 + $0x368] sm:$0xff]
      %v369 = vld [vmem:[%s1 + $0x370] sm:$0xff]
      %v370 = vld [vmem:[%s1 + $0x378] sm:$0xff]
      %v371 = vld [vmem:[%s1 + $0x380] sm:$0xff]
      %v372 = vld [vmem:[%s1 + $0x388] sm:$0xff]
      %v373 = vld [vmem:[%s1 + $0x390] sm:$0xff]
      %v374 = vld [vmem:[%s1 + $0x398] sm:$0xff]
      %v375 = vld [vmem:[%s1 + $0x3a0] sm:$0xff]
      %v376 = vld [vmem:[%s1 + $0x3a8] sm:$0xff]
      %v377 = vld [vmem:[%s1 + $0x3b0] sm:$0xff]
      %v378 = vld [vmem:[%s1 + $0x3b8] sm:$0xff]
      %v379 = vld [vmem:[%s1 + $0x3c0] sm:$0xff]
      %v380 = vld [vmem:[%s1 + $0x3c8] sm:$0xff]
      %v381 = vld [vmem:[%s1 + $0x3d0] sm:$0xff]
      %v382 = vld [vmem:[%s1 + $0x3d8] sm:$0xff]
      %v383 = vld [vmem:[%s1 + $0x3e0] sm:$0xff]
      %v384 = vld [vmem:[%s1 + $0x3e8] sm:$0xff]
      %v385 = vld [vmem:[%s1 + $0x3f0] sm:$0xff]
      %v386 = vld [vmem:[%s1 + $0x3f8] sm:$0xff]
      %v387 = vld [vmem:[%s1 + $0x400] sm:$0xff]
      %v388 = vld [vmem:[%s1 + $0x408] sm:$0xff]
      %v389 = vld [vmem:[%s1 + $0x410] sm:$0xff]
      %v390 = vld [vmem:[%s1 + $0x418] sm:$0xff]
      %v391 = vld [vmem:[%s1 + $0x420] sm:$0xff]
      %v392 = vld [vmem:[%s1 + $0x428] sm:$0xff]
      %v393 = vld [vmem:[%s1 + $0x430] sm:$0xff]
      %v394 = vld [vmem:[%s1 + $0x438] sm:$0xff]
      %v395 = vld [vmem:[%s1 + $0x440] sm:$0xff]
      %v396 = vld [vmem:[%s1 + $0x448] sm:$0xff]
      %v397 = vld [vmem:[%s1 + $0x450] sm:$0xff]
      %v398 = vld [vmem:[%s1 + $0x458] sm:$0xff]
      %v399 = vld [vmem:[%s1 + $0x460] sm:$0xff]
      %v400 = vld [vmem:[%s1 + $0x468] sm:$0xff]
      %v401 = vld [vmem:[%s1 + $0x470] sm:$0xff]
      %v402 = vld [vmem:[%s1 + $0x478] sm:$0xff]
      %v403 = vld [vmem:[%s1 + $0x480] sm:$0xff]
      %v404 = vld [vmem:[%s1 + $0x488] sm:$0xff]
      %v405 = vld [vmem:[%s1 + $0x490] sm:$0xff]
      %v406 = vld [vmem:[%s1 + $0x498] sm:$0xff]
      %v407 = vld [vmem:[%s1 + $0x4a0] sm:$0xff]
      %v408 = vld [vmem:[%s1 + $0x4a8] sm:$0xff]
      %v409 = vld [vmem:[%s1 + $0x4b0] sm:$0xff]
      %v410 = vld [vmem:[%s1 + $0x4b8] sm:$0xff]
      %v411 = vld [vmem:[%s1 + $0x4c0] sm:$0xff]
      %v412 = vld [vmem:[%s1 + $0x4c8] sm:$0xff]
      %v413 = vld [vmem:[%s1 + $0x4d0] sm:$0xff]
      %v414 = vld [vmem:[%s1 + $0x4d8] sm:$0xff]
      %v415 = vld [vmem:[%s1 + $0x4e0] sm:$0xff]
      %v416 = vld [vmem:[%s1 + $0x4e8] sm:$0xff]
      %v417 = vld [vmem:[%s1 + $0x4f0] sm:$0xff]
      %v418 = vld [vmem:[%s1 + $0x4f8] sm:$0xff]
      %v419 = vld [vmem:[%s2] sm:$0xf]
      %v421 = vlaneseq
      %v422 = vshrl.u32 %v421, 7
      %v423 = vsub.s32 0, %v422
      %v424 = vrot.slane %v419, %v423
      %v425 = vlaneseq
      %v426 = vshrl.u32 %v425, 7
      %v427 = vsub.s32 1, %v426
      %v428 = vrot.slane %v419, %v427
      %v429 = vlaneseq
      %v430 = vshrl.u32 %v429, 7
      %v431 = vsub.s32 2, %v430
      %v432 = vrot.slane %v419, %v431
      %v433 = vlaneseq
      %v434 = vshrl.u32 %v433, 7
      %v435 = vsub.s32 3, %v434
      %v436 = vrot.slane %v419, %v435
      %v480 = vunpack.c.l.b16 %v220
      %v481 = vunpack.c.h.b16 %v220
      %v482 = vunpack.c.l.b16 %v221
      %v483 = vunpack.c.h.b16 %v221
      %v484 = vunpack.c.l.b16 %v222
      %v485 = vunpack.c.l.b16 %v223
      %v486 = vunpack.c.h.b16 %v223
      %v487 = vunpack.c.l.b16 %v224
      %v488 = vunpack.c.h.b16 %v224
      %v489 = vunpack.c.l.b16 %v225
      %v490 = vunpack.c.l.b16 %v226
      %v491 = vunpack.c.h.b16 %v226
      %v492 = vunpack.c.l.b16 %v227
      %v493 = vunpack.c.h.b16 %v227
      %v494 = vunpack.c.l.b16 %v228
      %v495 = vunpack.c.l.b16 %v229
      %v496 = vunpack.c.h.b16 %v229
      %v497 = vunpack.c.l.b16 %v230
      %v498 = vunpack.c.h.b16 %v230
      %v499 = vunpack.c.l.b16 %v231
      %v500 = vunpack.c.l.b16 %v232
      %v501 = vunpack.c.h.b16 %v232
      %v502 = vunpack.c.l.b16 %v233
      %v503 = vunpack.c.h.b16 %v233
      %v504 = vunpack.c.l.b16 %v234
      %v505 = vunpack.c.l.b16 %v235
      %v506 = vunpack.c.h.b16 %v235
      %v507 = vunpack.c.l.b16 %v236
      %v508 = vunpack.c.h.b16 %v236
      %v509 = vunpack.c.l.b16 %v237
      %v510 = vunpack.c.l.b16 %v238
      %v511 = vunpack.c.h.b16 %v238
      %v512 = vunpack.c.l.b16 %v239
      %v513 = vunpack.c.h.b16 %v239
      %v514 = vunpack.c.l.b16 %v240
      %v515 = vunpack.c.l.b16 %v241
      %v516 = vunpack.c.h.b16 %v241
      %v517 = vunpack.c.l.b16 %v242
      %v518 = vunpack.c.h.b16 %v242
      %v519 = vunpack.c.l.b16 %v243
      %v520 = vunpack.c.l.b16 %v244
      %v521 = vunpack.c.h.b16 %v244
      %v522 = vunpack.c.l.b16 %v245
      %v523 = vunpack.c.h.b16 %v245
      %v524 = vunpack.c.l.b16 %v246
      %v525 = vunpack.c.l.b16 %v247
      %v526 = vunpack.c.h.b16 %v247
      %v527 = vunpack.c.l.b16 %v248
      %v528 = vunpack.c.h.b16 %v248
      %v529 = vunpack.c.l.b16 %v249
      %v530 = vunpack.c.l.b16 %v250
      %v531 = vunpack.c.h.b16 %v250
      %v532 = vunpack.c.l.b16 %v251
      %v533 = vunpack.c.h.b16 %v251
      %v534 = vunpack.c.l.b16 %v252
      %v535 = vunpack.c.l.b16 %v253
      %v536 = vunpack.c.h.b16 %v253
      %v537 = vunpack.c.l.b16 %v254
      %v538 = vunpack.c.h.b16 %v254
      %v539 = vunpack.c.l.b16 %v255
      %v540 = vunpack.c.l.b16 %v256
      %v541 = vunpack.c.h.b16 %v256
      %v542 = vunpack.c.l.b16 %v257
      %v543 = vunpack.c.h.b16 %v257
      %v544 = vunpack.c.l.b16 %v258
      %v545 = vpack.c.b16 %v485, %v480
      %v546 = vpack.c.b16 %v486, %v481
      %v547 = vpack.c.b16 %v487, %v482
      %v548 = vpack.c.b16 %v488, %v483
      %v549 = vpack.c.b16 %v489, %v484
      %v550 = vpack.c.b16 %v495, %v490
      %v551 = vpack.c.b16 %v496, %v491
      %v552 = vpack.c.b16 %v497, %v492
      %v553 = vpack.c.b16 %v498, %v493
      %v554 = vpack.c.b16 %v499, %v494
      %v555 = vpack.c.b16 %v505, %v500
      %v556 = vpack.c.b16 %v506, %v501
      %v557 = vpack.c.b16 %v507, %v502
      %v558 = vpack.c.b16 %v508, %v503
      %v559 = vpack.c.b16 %v509, %v504
      %v560 = vpack.c.b16 %v515, %v510
      %v561 = vpack.c.b16 %v516, %v511
      %v562 = vpack.c.b16 %v517, %v512
      %v563 = vpack.c.b16 %v518, %v513
      %v564 = vpack.c.b16 %v519, %v514
      %v565 = vpack.c.b16 %v525, %v520
      %v566 = vpack.c.b16 %v526, %v521
      %v567 = vpack.c.b16 %v527, %v522
      %v568 = vpack.c.b16 %v528, %v523
      %v569 = vpack.c.b16 %v529, %v524
      %v570 = vpack.c.b16 %v535, %v530
      %v571 = vpack.c.b16 %v536, %v531
      %v572 = vpack.c.b16 %v537, %v532
      %v573 = vpack.c.b16 %v538, %v533
      %v574 = vpack.c.b16 %v539, %v534
      %v575 = vpack.c.b16 %v540, %v540
      %v576 = vpack.c.b16 %v541, %v541
      %v577 = vpack.c.b16 %v542, %v542
      %v578 = vpack.c.b16 %v543, %v543
      %v579 = vpack.c.b16 %v544, %v544
      %v775 = vunpack.c.l.b16 %v259
      %v776 = vunpack.c.h.b16 %v259
      %v777 = vunpack.c.l.b16 %v260
      %v778 = vunpack.c.h.b16 %v260
      %v779 = vunpack.c.l.b16 %v261
      %v780 = vunpack.c.h.b16 %v261
      %v781 = vunpack.c.l.b16 %v262
      %v782 = vunpack.c.h.b16 %v262
      %v783 = vunpack.c.l.b16 %v263
      %v784 = vunpack.c.h.b16 %v263
      %v785 = vunpack.c.l.b16 %v264
      %v786 = vunpack.c.h.b16 %v264
      %v787 = vunpack.c.l.b16 %v265
      %v788 = vunpack.c.h.b16 %v265
      %v789 = vunpack.c.l.b16 %v266
      %v790 = vunpack.c.h.b16 %v266
      %v791 = vunpack.c.l.b16 %v267
      %v792 = vunpack.c.h.b16 %v267
      %v793 = vunpack.c.l.b16 %v268
      %v794 = vunpack.c.h.b16 %v268
      %v795 = vunpack.c.l.b16 %v269
      %v796 = vunpack.c.h.b16 %v269
      %v797 = vunpack.c.l.b16 %v270
      %v798 = vunpack.c.h.b16 %v270
      %v799 = vunpack.c.l.b16 %v271
      %v800 = vunpack.c.h.b16 %v271
      %v801 = vunpack.c.l.b16 %v272
      %v802 = vunpack.c.h.b16 %v272
      %v803 = vunpack.c.l.b16 %v273
      %v804 = vunpack.c.h.b16 %v273
      %v805 = vunpack.c.l.b16 %v274
      %v806 = vunpack.c.h.b16 %v274
      %v807 = vunpack.c.l.b16 %v275
      %v808 = vunpack.c.h.b16 %v275
      %v809 = vunpack.c.l.b16 %v276
      %v810 = vunpack.c.h.b16 %v276
      %v811 = vunpack.c.l.b16 %v277
      %v812 = vunpack.c.h.b16 %v277
      %v813 = vunpack.c.l.b16 %v278
      %v814 = vunpack.c.h.b16 %v278
      %v815 = vunpack.c.l.b16 %v279
      %v816 = vunpack.c.h.b16 %v279
      %v817 = vunpack.c.l.b16 %v280
      %v818 = vunpack.c.h.b16 %v280
      %v819 = vunpack.c.l.b16 %v281
      %v820 = vunpack.c.h.b16 %v281
      %v821 = vunpack.c.l.b16 %v282
      %v822 = vunpack.c.h.b16 %v282
      %v823 = vunpack.c.l.b16 %v283
      %v824 = vunpack.c.h.b16 %v283
      %v825 = vunpack.c.l.b16 %v284
      %v826 = vunpack.c.h.b16 %v284
      %v827 = vunpack.c.l.b16 %v285
      %v828 = vunpack.c.h.b16 %v285
      %v829 = vunpack.c.l.b16 %v286
      %v830 = vunpack.c.h.b16 %v286
      %v831 = vunpack.c.l.b16 %v287
      %v832 = vunpack.c.h.b16 %v287
      %v833 = vunpack.c.l.b16 %v288
      %v834 = vunpack.c.h.b16 %v288
      %v835 = vunpack.c.l.b16 %v289
      %v836 = vunpack.c.h.b16 %v289
      %v837 = vunpack.c.l.b16 %v290
      %v838 = vunpack.c.h.b16 %v290
      %v839 = vunpack.c.l.b16 %v291
      %v840 = vunpack.c.h.b16 %v291
      %v841 = vunpack.c.l.b16 %v292
      %v842 = vunpack.c.h.b16 %v292
      %v843 = vunpack.c.l.b16 %v293
      %v844 = vunpack.c.h.b16 %v293
      %v845 = vunpack.c.l.b16 %v294
      %v846 = vunpack.c.h.b16 %v294
      %v847 = vunpack.c.l.b16 %v295
      %v848 = vunpack.c.h.b16 %v295
      %v849 = vunpack.c.l.b16 %v296
      %v850 = vunpack.c.h.b16 %v296
      %v851 = vunpack.c.l.b16 %v297
      %v852 = vunpack.c.h.b16 %v297
      %v853 = vunpack.c.l.b16 %v298
      %v854 = vunpack.c.h.b16 %v298
      %v855 = vunpack.c.l.b16 %v299
      %v856 = vunpack.c.h.b16 %v299
      %v857 = vunpack.c.l.b16 %v300
      %v858 = vunpack.c.h.b16 %v300
      %v859 = vunpack.c.l.b16 %v301
      %v860 = vunpack.c.h.b16 %v301
      %v861 = vunpack.c.l.b16 %v302
      %v862 = vunpack.c.h.b16 %v302
      %v863 = vunpack.c.l.b16 %v303
      %v864 = vunpack.c.h.b16 %v303
      %v865 = vunpack.c.l.b16 %v304
      %v866 = vunpack.c.h.b16 %v304
      %v867 = vunpack.c.l.b16 %v305
      %v868 = vunpack.c.h.b16 %v305
      %v869 = vunpack.c.l.b16 %v306
      %v870 = vunpack.c.h.b16 %v306
      %v871 = vunpack.c.l.b16 %v307
      %v872 = vunpack.c.h.b16 %v307
      %v873 = vunpack.c.l.b16 %v308
      %v874 = vunpack.c.h.b16 %v308
      %v875 = vunpack.c.l.b16 %v309
      %v876 = vunpack.c.h.b16 %v309
      %v877 = vunpack.c.l.b16 %v310
      %v878 = vunpack.c.h.b16 %v310
      %v879 = vunpack.c.l.b16 %v311
      %v880 = vunpack.c.h.b16 %v311
      %v881 = vunpack.c.l.b16 %v312
      %v882 = vunpack.c.h.b16 %v312
      %v883 = vunpack.c.l.b16 %v313
      %v884 = vunpack.c.h.b16 %v313
      %v885 = vunpack.c.l.b16 %v314
      %v886 = vunpack.c.h.b16 %v314
      %v887 = vunpack.c.l.b16 %v315
      %v888 = vunpack.c.h.b16 %v315
      %v889 = vunpack.c.l.b16 %v316
      %v890 = vunpack.c.h.b16 %v316
      %v891 = vunpack.c.l.b16 %v317
      %v892 = vunpack.c.h.b16 %v317
      %v893 = vunpack.c.l.b16 %v318
      %v894 = vunpack.c.h.b16 %v318
      %v895 = vunpack.c.l.b16 %v319
      %v896 = vunpack.c.h.b16 %v319
      %v897 = vunpack.c.l.b16 %v320
      %v898 = vunpack.c.h.b16 %v320
      %v899 = vunpack.c.l.b16 %v321
      %v900 = vunpack.c.h.b16 %v321
      %v901 = vunpack.c.l.b16 %v322
      %v902 = vunpack.c.h.b16 %v322
      %v903 = vunpack.c.l.b16 %v323
      %v904 = vunpack.c.h.b16 %v323
      %v905 = vunpack.c.l.b16 %v324
      %v906 = vunpack.c.h.b16 %v324
      %v907 = vunpack.c.l.b16 %v325
      %v908 = vunpack.c.h.b16 %v325
      %v909 = vunpack.c.l.b16 %v326
      %v910 = vunpack.c.h.b16 %v326
      %v911 = vunpack.c.l.b16 %v327
      %v912 = vunpack.c.h.b16 %v327
      %v913 = vunpack.c.l.b16 %v328
      %v914 = vunpack.c.h.b16 %v328
      %v915 = vunpack.c.l.b16 %v329
      %v916 = vunpack.c.h.b16 %v329
      %v917 = vunpack.c.l.b16 %v330
      %v918 = vunpack.c.h.b16 %v330
      %v919 = vunpack.c.l.b16 %v331
      %v920 = vunpack.c.h.b16 %v331
      %v921 = vunpack.c.l.b16 %v332
      %v922 = vunpack.c.h.b16 %v332
      %v923 = vunpack.c.l.b16 %v333
      %v924 = vunpack.c.h.b16 %v333
      %v925 = vunpack.c.l.b16 %v334
      %v926 = vunpack.c.h.b16 %v334
      %v927 = vunpack.c.l.b16 %v335
      %v928 = vunpack.c.h.b16 %v335
      %v929 = vunpack.c.l.b16 %v336
      %v930 = vunpack.c.h.b16 %v336
      %v931 = vunpack.c.l.b16 %v337
      %v932 = vunpack.c.h.b16 %v337
      %v933 = vunpack.c.l.b16 %v338
      %v934 = vunpack.c.h.b16 %v338
      %v935 = vunpack.c.l.b16 %v339
      %v936 = vunpack.c.h.b16 %v339
      %v937 = vunpack.c.l.b16 %v340
      %v938 = vunpack.c.h.b16 %v340
      %v939 = vunpack.c.l.b16 %v341
      %v940 = vunpack.c.h.b16 %v341
      %v941 = vunpack.c.l.b16 %v342
      %v942 = vunpack.c.h.b16 %v342
      %v943 = vunpack.c.l.b16 %v343
      %v944 = vunpack.c.h.b16 %v343
      %v945 = vunpack.c.l.b16 %v344
      %v946 = vunpack.c.h.b16 %v344
      %v947 = vunpack.c.l.b16 %v345
      %v948 = vunpack.c.h.b16 %v345
      %v949 = vunpack.c.l.b16 %v346
      %v950 = vunpack.c.h.b16 %v346
      %v951 = vunpack.c.l.b16 %v347
      %v952 = vunpack.c.h.b16 %v347
      %v953 = vunpack.c.l.b16 %v348
      %v954 = vunpack.c.h.b16 %v348
      %v955 = vunpack.c.l.b16 %v349
      %v956 = vunpack.c.h.b16 %v349
      %v957 = vunpack.c.l.b16 %v350
      %v958 = vunpack.c.h.b16 %v350
      %v959 = vunpack.c.l.b16 %v351
      %v960 = vunpack.c.h.b16 %v351
      %v961 = vunpack.c.l.b16 %v352
      %v962 = vunpack.c.h.b16 %v352
      %v963 = vunpack.c.l.b16 %v353
      %v964 = vunpack.c.h.b16 %v353
      %v965 = vunpack.c.l.b16 %v354
      %v966 = vunpack.c.h.b16 %v354
      %v967 = vunpack.c.l.b16 %v355
      %v968 = vunpack.c.h.b16 %v355
      %v969 = vunpack.c.l.b16 %v356
      %v970 = vunpack.c.h.b16 %v356
      %v971 = vunpack.c.l.b16 %v357
      %v972 = vunpack.c.h.b16 %v357
      %v973 = vunpack.c.l.b16 %v358
      %v974 = vunpack.c.h.b16 %v358
      %v975 = vunpack.c.l.b16 %v359
      %v976 = vunpack.c.h.b16 %v359
      %v977 = vunpack.c.l.b16 %v360
      %v978 = vunpack.c.h.b16 %v360
      %v979 = vunpack.c.l.b16 %v361
      %v980 = vunpack.c.h.b16 %v361
      %v981 = vunpack.c.l.b16 %v362
      %v982 = vunpack.c.h.b16 %v362
      %v983 = vunpack.c.l.b16 %v363
      %v984 = vunpack.c.h.b16 %v363
      %v985 = vunpack.c.l.b16 %v364
      %v986 = vunpack.c.h.b16 %v364
      %v987 = vunpack.c.l.b16 %v365
      %v988 = vunpack.c.h.b16 %v365
      %v989 = vunpack.c.l.b16 %v366
      %v990 = vunpack.c.h.b16 %v366
      %v991 = vunpack.c.l.b16 %v367
      %v992 = vunpack.c.h.b16 %v367
      %v993 = vunpack.c.l.b16 %v368
      %v994 = vunpack.c.h.b16 %v368
      %v995 = vunpack.c.l.b16 %v369
      %v996 = vunpack.c.h.b16 %v369
      %v997 = vunpack.c.l.b16 %v370
      %v998 = vunpack.c.h.b16 %v370
      %v999 = vunpack.c.l.b16 %v371
      %v1000 = vunpack.c.h.b16 %v371
      %v1001 = vunpack.c.l.b16 %v372
      %v1002 = vunpack.c.h.b16 %v372
      %v1003 = vunpack.c.l.b16 %v373
      %v1004 = vunpack.c.h.b16 %v373
      %v1005 = vunpack.c.l.b16 %v374
      %v1006 = vunpack.c.h.b16 %v374
      %v1007 = vunpack.c.l.b16 %v375
      %v1008 = vunpack.c.h.b16 %v375
      %v1009 = vunpack.c.l.b16 %v376
      %v1010 = vunpack.c.h.b16 %v376
      %v1011 = vunpack.c.l.b16 %v377
      %v1012 = vunpack.c.h.b16 %v377
      %v1013 = vunpack.c.l.b16 %v378
      %v1014 = vunpack.c.h.b16 %v378
      %v1015 = vunpack.c.l.b16 %v379
      %v1016 = vunpack.c.h.b16 %v379
      %v1017 = vunpack.c.l.b16 %v380
      %v1018 = vunpack.c.h.b16 %v380
      %v1019 = vunpack.c.l.b16 %v381
      %v1020 = vunpack.c.h.b16 %v381
      %v1021 = vunpack.c.l.b16 %v382
      %v1022 = vunpack.c.h.b16 %v382
      %v1023 = vunpack.c.l.b16 %v383
      %v1024 = vunpack.c.h.b16 %v383
      %v1025 = vunpack.c.l.b16 %v384
      %v1026 = vunpack.c.h.b16 %v384
      %v1027 = vunpack.c.l.b16 %v385
      %v1028 = vunpack.c.h.b16 %v385
      %v1029 = vunpack.c.l.b16 %v386
      %v1030 = vunpack.c.h.b16 %v386
      %v1031 = vunpack.c.l.b16 %v387
      %v1032 = vunpack.c.h.b16 %v387
      %v1033 = vunpack.c.l.b16 %v388
      %v1034 = vunpack.c.h.b16 %v388
      %v1035 = vunpack.c.l.b16 %v389
      %v1036 = vunpack.c.h.b16 %v389
      %v1037 = vunpack.c.l.b16 %v390
      %v1038 = vunpack.c.h.b16 %v390
      %v1039 = vunpack.c.l.b16 %v391
      %v1040 = vunpack.c.h.b16 %v391
      %v1041 = vunpack.c.l.b16 %v392
      %v1042 = vunpack.c.h.b16 %v392
      %v1043 = vunpack.c.l.b16 %v393
      %v1044 = vunpack.c.h.b16 %v393
      %v1045 = vunpack.c.l.b16 %v394
      %v1046 = vunpack.c.h.b16 %v394
      %v1047 = vunpack.c.l.b16 %v395
      %v1048 = vunpack.c.h.b16 %v395
      %v1049 = vunpack.c.l.b16 %v396
      %v1050 = vunpack.c.h.b16 %v396
      %v1051 = vunpack.c.l.b16 %v397
      %v1052 = vunpack.c.h.b16 %v397
      %v1053 = vunpack.c.l.b16 %v398
      %v1054 = vunpack.c.h.b16 %v398
      %v1055 = vunpack.c.l.b16 %v399
      %v1056 = vunpack.c.h.b16 %v399
      %v1057 = vunpack.c.l.b16 %v400
      %v1058 = vunpack.c.h.b16 %v400
      %v1059 = vunpack.c.l.b16 %v401
      %v1060 = vunpack.c.h.b16 %v401
      %v1061 = vunpack.c.l.b16 %v402
      %v1062 = vunpack.c.h.b16 %v402
      %v1063 = vunpack.c.l.b16 %v403
      %v1064 = vunpack.c.h.b16 %v403
      %v1065 = vunpack.c.l.b16 %v404
      %v1066 = vunpack.c.h.b16 %v404
      %v1067 = vunpack.c.l.b16 %v405
      %v1068 = vunpack.c.h.b16 %v405
      %v1069 = vunpack.c.l.b16 %v406
      %v1070 = vunpack.c.h.b16 %v406
      %v1071 = vunpack.c.l.b16 %v407
      %v1072 = vunpack.c.h.b16 %v407
      %v1073 = vunpack.c.l.b16 %v408
      %v1074 = vunpack.c.h.b16 %v408
      %v1075 = vunpack.c.l.b16 %v409
      %v1076 = vunpack.c.h.b16 %v409
      %v1077 = vunpack.c.l.b16 %v410
      %v1078 = vunpack.c.h.b16 %v410
      %v1079 = vunpack.c.l.b16 %v411
      %v1080 = vunpack.c.h.b16 %v411
      %v1081 = vunpack.c.l.b16 %v412
      %v1082 = vunpack.c.h.b16 %v412
      %v1083 = vunpack.c.l.b16 %v413
      %v1084 = vunpack.c.h.b16 %v413
      %v1085 = vunpack.c.l.b16 %v414
      %v1086 = vunpack.c.h.b16 %v414
      %v1087 = vunpack.c.l.b16 %v415
      %v1088 = vunpack.c.h.b16 %v415
      %v1089 = vunpack.c.l.b16 %v416
      %v1090 = vunpack.c.h.b16 %v416
      %v1091 = vunpack.c.l.b16 %v417
      %v1092 = vunpack.c.h.b16 %v417
      %v1093 = vunpack.c.l.b16 %v418
      %v1094 = vunpack.c.h.b16 %v418
      %v1095 = vpack.c.b16 %v779, %v775
      %v1096 = vpack.c.b16 %v780, %v776
      %v1097 = vpack.c.b16 %v781, %v777
      %v1098 = vpack.c.b16 %v782, %v778
      %v1099 = vpack.c.b16 %v787, %v783
      %v1100 = vpack.c.b16 %v788, %v784
      %v1101 = vpack.c.b16 %v789, %v785
      %v1102 = vpack.c.b16 %v790, %v786
      %v1103 = vpack.c.b16 %v795, %v791
      %v1104 = vpack.c.b16 %v796, %v792
      %v1105 = vpack.c.b16 %v797, %v793
      %v1106 = vpack.c.b16 %v798, %v794
      %v1107 = vpack.c.b16 %v803, %v799
      %v1108 = vpack.c.b16 %v804, %v800
      %v1109 = vpack.c.b16 %v805, %v801
      %v1110 = vpack.c.b16 %v806, %v802
      %v1111 = vpack.c.b16 %v811, %v807
      %v1112 = vpack.c.b16 %v812, %v808
      %v1113 = vpack.c.b16 %v813, %v809
      %v1114 = vpack.c.b16 %v814, %v810
      %v1115 = vpack.c.b16 %v819, %v815
      %v1116 = vpack.c.b16 %v820, %v816
      %v1117 = vpack.c.b16 %v821, %v817
      %v1118 = vpack.c.b16 %v822, %v818
      %v1119 = vpack.c.b16 %v827, %v823
      %v1120 = vpack.c.b16 %v828, %v824
      %v1121 = vpack.c.b16 %v829, %v825
      %v1122 = vpack.c.b16 %v830, %v826
      %v1123 = vpack.c.b16 %v835, %v831
      %v1124 = vpack.c.b16 %v836, %v832
      %v1125 = vpack.c.b16 %v837, %v833
      %v1126 = vpack.c.b16 %v838, %v834
      %v1127 = vpack.c.b16 %v843, %v839
      %v1128 = vpack.c.b16 %v844, %v840
      %v1129 = vpack.c.b16 %v845, %v841
      %v1130 = vpack.c.b16 %v846, %v842
      %v1131 = vpack.c.b16 %v851, %v847
      %v1132 = vpack.c.b16 %v852, %v848
      %v1133 = vpack.c.b16 %v853, %v849
      %v1134 = vpack.c.b16 %v854, %v850
      %v1135 = vpack.c.b16 %v859, %v855
      %v1136 = vpack.c.b16 %v860, %v856
      %v1137 = vpack.c.b16 %v861, %v857
      %v1138 = vpack.c.b16 %v862, %v858
      %v1139 = vpack.c.b16 %v867, %v863
      %v1140 = vpack.c.b16 %v868, %v864
      %v1141 = vpack.c.b16 %v869, %v865
      %v1142 = vpack.c.b16 %v870, %v866
      %v1143 = vpack.c.b16 %v875, %v871
      %v1144 = vpack.c.b16 %v876, %v872
      %v1145 = vpack.c.b16 %v877, %v873
      %v1146 = vpack.c.b16 %v878, %v874
      %v1147 = vpack.c.b16 %v883, %v879
      %v1148 = vpack.c.b16 %v884, %v880
      %v1149 = vpack.c.b16 %v885, %v881
      %v1150 = vpack.c.b16 %v886, %v882
      %v1151 = vpack.c.b16 %v891, %v887
      %v1152 = vpack.c.b16 %v892, %v888
      %v1153 = vpack.c.b16 %v893, %v889
      %v1154 = vpack.c.b16 %v894, %v890
      %v1155 = vpack.c.b16 %v899, %v895
      %v1156 = vpack.c.b16 %v900, %v896
      %v1157 = vpack.c.b16 %v901, %v897
      %v1158 = vpack.c.b16 %v902, %v898
      %v1159 = vpack.c.b16 %v907, %v903
      %v1160 = vpack.c.b16 %v908, %v904
      %v1161 = vpack.c.b16 %v909, %v905
      %v1162 = vpack.c.b16 %v910, %v906
      %v1163 = vpack.c.b16 %v915, %v911
      %v1164 = vpack.c.b16 %v916, %v912
      %v1165 = vpack.c.b16 %v917, %v913
      %v1166 = vpack.c.b16 %v918, %v914
      %v1167 = vpack.c.b16 %v923, %v919
      %v1168 = vpack.c.b16 %v924, %v920
      %v1169 = vpack.c.b16 %v925, %v921
      %v1170 = vpack.c.b16 %v926, %v922
      %v1171 = vpack.c.b16 %v931, %v927
      %v1172 = vpack.c.b16 %v932, %v928
      %v1173 = vpack.c.b16 %v933, %v929
      %v1174 = vpack.c.b16 %v934, %v930
      %v1175 = vpack.c.b16 %v939, %v935
      %v1176 = vpack.c.b16 %v940, %v936
      %v1177 = vpack.c.b16 %v941, %v937
      %v1178 = vpack.c.b16 %v942, %v938
      %v1179 = vpack.c.b16 %v947, %v943
      %v1180 = vpack.c.b16 %v948, %v944
      %v1181 = vpack.c.b16 %v949, %v945
      %v1182 = vpack.c.b16 %v950, %v946
      %v1183 = vpack.c.b16 %v955, %v951
      %v1184 = vpack.c.b16 %v956, %v952
      %v1185 = vpack.c.b16 %v957, %v953
      %v1186 = vpack.c.b16 %v958, %v954
      %v1187 = vpack.c.b16 %v963, %v959
      %v1188 = vpack.c.b16 %v964, %v960
      %v1189 = vpack.c.b16 %v965, %v961
      %v1190 = vpack.c.b16 %v966, %v962
      %v1191 = vpack.c.b16 %v971, %v967
      %v1192 = vpack.c.b16 %v972, %v968
      %v1193 = vpack.c.b16 %v973, %v969
      %v1194 = vpack.c.b16 %v974, %v970
      %v1195 = vpack.c.b16 %v979, %v975
      %v1196 = vpack.c.b16 %v980, %v976
      %v1197 = vpack.c.b16 %v981, %v977
      %v1198 = vpack.c.b16 %v982, %v978
      %v1199 = vpack.c.b16 %v987, %v983
      %v1200 = vpack.c.b16 %v988, %v984
      %v1201 = vpack.c.b16 %v989, %v985
      %v1202 = vpack.c.b16 %v990, %v986
      %v1203 = vpack.c.b16 %v995, %v991
      %v1204 = vpack.c.b16 %v996, %v992
      %v1205 = vpack.c.b16 %v997, %v993
      %v1206 = vpack.c.b16 %v998, %v994
      %v1207 = vpack.c.b16 %v1003, %v999
      %v1208 = vpack.c.b16 %v1004, %v1000
      %v1209 = vpack.c.b16 %v1005, %v1001
      %v1210 = vpack.c.b16 %v1006, %v1002
      %v1211 = vpack.c.b16 %v1011, %v1007
      %v1212 = vpack.c.b16 %v1012, %v1008
      %v1213 = vpack.c.b16 %v1013, %v1009
      %v1214 = vpack.c.b16 %v1014, %v1010
      %v1215 = vpack.c.b16 %v1019, %v1015
      %v1216 = vpack.c.b16 %v1020, %v1016
      %v1217 = vpack.c.b16 %v1021, %v1017
      %v1218 = vpack.c.b16 %v1022, %v1018
      %v1219 = vpack.c.b16 %v1027, %v1023
      %v1220 = vpack.c.b16 %v1028, %v1024
      %v1221 = vpack.c.b16 %v1029, %v1025
      %v1222 = vpack.c.b16 %v1030, %v1026
      %v1223 = vpack.c.b16 %v1035, %v1031
      %v1224 = vpack.c.b16 %v1036, %v1032
      %v1225 = vpack.c.b16 %v1037, %v1033
      %v1226 = vpack.c.b16 %v1038, %v1034
      %v1227 = vpack.c.b16 %v1043, %v1039
      %v1228 = vpack.c.b16 %v1044, %v1040
      %v1229 = vpack.c.b16 %v1045, %v1041
      %v1230 = vpack.c.b16 %v1046, %v1042
      %v1231 = vpack.c.b16 %v1051, %v1047
      %v1232 = vpack.c.b16 %v1052, %v1048
      %v1233 = vpack.c.b16 %v1053, %v1049
      %v1234 = vpack.c.b16 %v1054, %v1050
      %v1235 = vpack.c.b16 %v1059, %v1055
      %v1236 = vpack.c.b16 %v1060, %v1056
      %v1237 = vpack.c.b16 %v1061, %v1057
      %v1238 = vpack.c.b16 %v1062, %v1058
      %v1239 = vpack.c.b16 %v1067, %v1063
      %v1240 = vpack.c.b16 %v1068, %v1064
      %v1241 = vpack.c.b16 %v1069, %v1065
      %v1242 = vpack.c.b16 %v1070, %v1066
      %v1243 = vpack.c.b16 %v1075, %v1071
      %v1244 = vpack.c.b16 %v1076, %v1072
      %v1245 = vpack.c.b16 %v1077, %v1073
      %v1246 = vpack.c.b16 %v1078, %v1074
      %v1247 = vpack.c.b16 %v1083, %v1079
      %v1248 = vpack.c.b16 %v1084, %v1080
      %v1249 = vpack.c.b16 %v1085, %v1081
      %v1250 = vpack.c.b16 %v1086, %v1082
      %v1251 = vpack.c.b16 %v1091, %v1087
      %v1252 = vpack.c.b16 %v1092, %v1088
      %v1253 = vpack.c.b16 %v1093, %v1089
      %v1254 = vpack.c.b16 %v1094, %v1090
      %1415 = vmatprep.subr.bf16.mxu0 %v1096
      %1416 = vmatpush1.bf16.msra.mxu0 %v1095
      %1417 = vmatprep.subr.bf16.mxu0 %v1100
      %1418 = vmatpush1.bf16.msra.mxu0 %v1099
      %1419 = vmatprep.subr.bf16.mxu0 %v1104
      %1420 = vmatpush1.bf16.msra.mxu0 %v1103
      %1421 = vmatprep.subr.bf16.mxu0 %v1108
      %1422 = vmatpush1.bf16.msra.mxu0 %v1107
      %1423 = vmatprep.subr.bf16.mxu0 %v1112
      %1424 = vmatpush1.bf16.msra.mxu0 %v1111
      %1425 = vmatprep.subr.bf16.mxu0 %v1116
      %1426 = vmatpush1.bf16.msra.mxu0 %v1115
      %1427 = vmatprep.subr.bf16.mxu0 %v1120
      %1428 = vmatpush1.bf16.msra.mxu0 %v1119
      %1429 = vmatprep.subr.bf16.mxu0 %v1124
      %1430 = vmatpush1.bf16.msra.mxu0 %v1123
      %1431 = vmatprep.subr.bf16.mxu0 %v1128
      %1432 = vmatpush1.bf16.msra.mxu0 %v1127
      %1433 = vmatprep.subr.bf16.mxu0 %v1132
      %1434 = vmatpush1.bf16.msra.mxu0 %v1131
      %1435 = vmatprep.subr.bf16.mxu0 %v1136
      %1436 = vmatpush1.bf16.msra.mxu0 %v1135
      %1437 = vmatprep.subr.bf16.mxu0 %v1140
      %1438 = vmatpush1.bf16.msra.mxu0 %v1139
      %1439 = vmatprep.subr.bf16.mxu0 %v1144
      %1440 = vmatpush1.bf16.msra.mxu0 %v1143
      %1441 = vmatprep.subr.bf16.mxu0 %v1148
      %1442 = vmatpush1.bf16.msra.mxu0 %v1147
      %1443 = vmatprep.subr.bf16.mxu0 %v1152
      %1444 = vmatpush1.bf16.msra.mxu0 %v1151
      %1445 = vmatprep.subr.bf16.mxu0 %v1156
      %1446 = vmatpush1.bf16.msra.mxu0 %v1155
      %1447 = vmatprep.mubr.bf16.mxu0 %v546
      %1448 = vmatmul.mubr.bf16.gmra.mrb[0].mxu0 %v545
      %v1449 = vpop.f32.mrb[0].mxu0
      %v1450 = vadd.f32 %v424, %v1449
      %v1451 = vpop.f32.mrb[0].mxu0
      %v1452 = vadd.f32 %v428, %v1451
      %v1453 = vpop.f32.mrb[0].mxu0
      %v1454 = vadd.f32 %v424, %v1453
      %v1455 = vpop.f32.mrb[0].mxu0
      %v1456 = vadd.f32 %v428, %v1455
      %1457 = vmatprep.mubr.bf16.mxu0 %v551
      %1458 = vmatmul.mubr.bf16.gmra.mrb[0].mxu0 %v550
      %v1459 = vpop.f32.mrb[0].mxu0
      %v1460 = vadd.f32 %v424, %v1459
      %v1461 = vpop.f32.mrb[0].mxu0
      %v1462 = vadd.f32 %v428, %v1461
      %v1463 = vpop.f32.mrb[0].mxu0
      %v1464 = vadd.f32 %v424, %v1463
      %v1465 = vpop.f32.mrb[0].mxu0
      %v1466 = vadd.f32 %v428, %v1465
      %1467 = vmatprep.mubr.bf16.mxu0 %v556
      %1468 = vmatmul.mubr.bf16.gmra.mrb[0].mxu0 %v555
      %v1469 = vpop.f32.mrb[0].mxu0
      %v1470 = vadd.f32 %v424, %v1469
      %v1471 = vpop.f32.mrb[0].mxu0
      %v1472 = vadd.f32 %v428, %v1471
      %v1473 = vpop.f32.mrb[0].mxu0
      %v1474 = vadd.f32 %v424, %v1473
      %v1475 = vpop.f32.mrb[0].mxu0
      %v1476 = vadd.f32 %v428, %v1475
      %1477 = vmatprep.mubr.bf16.mxu0 %v561
      %1478 = vmatmul.mubr.bf16.gmra.mrb[0].mxu0 %v560
      %v1479 = vpop.f32.mrb[0].mxu0
      %v1480 = vadd.f32 %v424, %v1479
      %v1481 = vpop.f32.mrb[0].mxu0
      %v1482 = vadd.f32 %v428, %v1481
      %v1483 = vpop.f32.mrb[0].mxu0
      %v1484 = vadd.f32 %v424, %v1483
      %v1485 = vpop.f32.mrb[0].mxu0
      %v1486 = vadd.f32 %v428, %v1485
      %1487 = vmatprep.mubr.bf16.mxu0 %v566
      %1488 = vmatmul.mubr.bf16.gmra.mrb[0].mxu0 %v565
      %v1489 = vpop.f32.mrb[0].mxu0
      %v1490 = vadd.f32 %v424, %v1489
      %v1491 = vpop.f32.mrb[0].mxu0
      %v1492 = vadd.f32 %v428, %v1491
      %v1493 = vpop.f32.mrb[0].mxu0
      %v1494 = vadd.f32 %v424, %v1493
      %v1495 = vpop.f32.mrb[0].mxu0
      %v1496 = vadd.f32 %v428, %v1495
      %1497 = vmatprep.mubr.bf16.mxu0 %v571
      %1498 = vmatmul.mubr.bf16.gmra.mrb[0].mxu0 %v570
      %v1499 = vpop.f32.mrb[0].mxu0
      %v1500 = vadd.f32 %v424, %v1499
      %v1501 = vpop.f32.mrb[0].mxu0
      %v1502 = vadd.f32 %v428, %v1501
      %v1503 = vpop.f32.mrb[0].mxu0
      %v1504 = vadd.f32 %v424, %v1503
      %v1505 = vpop.f32.mrb[0].mxu0
      %v1506 = vadd.f32 %v428, %v1505
      %1507 = vmatprep.mubr.bf16.mxu0 %v576
      %1508 = vmatmul.mubr.bf16.gmra.mrb[0].mxu0 %v575
      %v1509 = vpop.f32.mrb[0].mxu0
      %v1510 = vadd.f32 %v424, %v1509
      %v1511 = vpop.f32.mrb[0].mxu0
      %v1512 = vadd.f32 %v428, %v1511
      %v1513 = vpop.f32.mrb[0].mxu0
      %v1514 = vpop.f32.mrb[0].mxu0
      %1515 = vdwg.mxu0
      %1516 = vmatprep.subr.bf16.mxu0 %v1160
      %1517 = vmatpush1.bf16.msra.mxu0 %v1159
      %1518 = vmatprep.subr.bf16.mxu0 %v1164
      %1519 = vmatpush1.bf16.msra.mxu0 %v1163
      %1520 = vmatprep.subr.bf16.mxu0 %v1168
      %1521 = vmatpush1.bf16.msra.mxu0 %v1167
      %1522 = vmatprep.subr.bf16.mxu0 %v1172
      %1523 = vmatpush1.bf16.msra.mxu0 %v1171
      %1524 = vmatprep.subr.bf16.mxu0 %v1176
      %1525 = vmatpush1.bf16.msra.mxu0 %v1175
      %1526 = vmatprep.subr.bf16.mxu0 %v1180
      %1527 = vmatpush1.bf16.msra.mxu0 %v1179
      %1528 = vmatprep.subr.bf16.mxu0 %v1184
      %1529 = vmatpush1.bf16.msra.mxu0 %v1183
      %1530 = vmatprep.subr.bf16.mxu0 %v1188
      %1531 = vmatpush1.bf16.msra.mxu0 %v1187
      %1532 = vmatprep.subr.bf16.mxu0 %v1192
      %1533 = vmatpush1.bf16.msra.mxu0 %v1191
      %1534 = vmatprep.subr.bf16.mxu0 %v1196
      %1535 = vmatpush1.bf16.msra.mxu0 %v1195
      %1536 = vmatprep.subr.bf16.mxu0 %v1200
      %1537 = vmatpush1.bf16.msra.mxu0 %v1199
      %1538 = vmatprep.subr.bf16.mxu0 %v1204
      %1539 = vmatpush1.bf16.msra.mxu0 %v1203
      %1540 = vmatprep.subr.bf16.mxu0 %v1208
      %1541 = vmatpush1.bf16.msra.mxu0 %v1207
      %1542 = vmatprep.subr.bf16.mxu0 %v1212
      %1543 = vmatpush1.bf16.msra.mxu0 %v1211
      %1544 = vmatprep.subr.bf16.mxu0 %v1216
      %1545 = vmatpush1.bf16.msra.mxu0 %v1215
      %1546 = vmatprep.subr.bf16.mxu0 %v1220
      %1547 = vmatpush1.bf16.msra.mxu0 %v1219
      %1548 = vmatprep.mubr.bf16.mxu0 %v548
      %1549 = vmatmul.mubr.bf16.gmra.mrb[0].mxu0 %v547
      %v1550 = vpop.f32.mrb[0].mxu0
      %v1551 = vadd.f32 %v1450, %v1550
      %v1552 = vpop.f32.mrb[0].mxu0
      %v1553 = vadd.f32 %v1452, %v1552
      %v1554 = vpop.f32.mrb[0].mxu0
      %v1555 = vadd.f32 %v1454, %v1554
      %v1556 = vpop.f32.mrb[0].mxu0
      %v1557 = vadd.f32 %v1456, %v1556
      %1558 = vmatprep.mubr.bf16.mxu0 %v553
      %1559 = vmatmul.mubr.bf16.gmra.mrb[0].mxu0 %v552
      %v1560 = vpop.f32.mrb[0].mxu0
      %v1561 = vadd.f32 %v1460, %v1560
      %v1562 = vpop.f32.mrb[0].mxu0
      %v1563 = vadd.f32 %v1462, %v1562
      %v1564 = vpop.f32.mrb[0].mxu0
      %v1565 = vadd.f32 %v1464, %v1564
      %v1566 = vpop.f32.mrb[0].mxu0
      %v1567 = vadd.f32 %v1466, %v1566
      %1568 = vmatprep.mubr.bf16.mxu0 %v558
      %1569 = vmatmul.mubr.bf16.gmra.mrb[0].mxu0 %v557
      %v1570 = vpop.f32.mrb[0].mxu0
      %v1571 = vadd.f32 %v1470, %v1570
      %v1572 = vpop.f32.mrb[0].mxu0
      %v1573 = vadd.f32 %v1472, %v1572
      %v1574 = vpop.f32.mrb[0].mxu0
      %v1575 = vadd.f32 %v1474, %v1574
      %v1576 = vpop.f32.mrb[0].mxu0
      %v1577 = vadd.f32 %v1476, %v1576
      %1578 = vmatprep.mubr.bf16.mxu0 %v563
      %1579 = vmatmul.mubr.bf16.gmra.mrb[0].mxu0 %v562
      %v1580 = vpop.f32.mrb[0].mxu0
      %v1581 = vadd.f32 %v1480, %v1580
      %v1582 = vpop.f32.mrb[0].mxu0
      %v1583 = vadd.f32 %v1482, %v1582
      %v1584 = vpop.f32.mrb[0].mxu0
      %v1585 = vadd.f32 %v1484, %v1584
      %v1586 = vpop.f32.mrb[0].mxu0
      %v1587 = vadd.f32 %v1486, %v1586
      %1588 = vmatprep.mubr.bf16.mxu0 %v568
      %1589 = vmatmul.mubr.bf16.gmra.mrb[0].mxu0 %v567
      %v1590 = vpop.f32.mrb[0].mxu0
      %v1591 = vadd.f32 %v1490, %v1590
      %v1592 = vpop.f32.mrb[0].mxu0
      %v1593 = vadd.f32 %v1492, %v1592
      %v1594 = vpop.f32.mrb[0].mxu0
      %v1595 = vadd.f32 %v1494, %v1594
      %v1596 = vpop.f32.mrb[0].mxu0
      %v1597 = vadd.f32 %v1496, %v1596
      %1598 = vmatprep.mubr.bf16.mxu0 %v573
      %1599 = vmatmul.mubr.bf16.gmra.mrb[0].mxu0 %v572
      %v1600 = vpop.f32.mrb[0].mxu0
      %v1601 = vadd.f32 %v1500, %v1600
      %v1602 = vpop.f32.mrb[0].mxu0
      %v1603 = vadd.f32 %v1502, %v1602
      %v1604 = vpop.f32.mrb[0].mxu0
      %v1605 = vadd.f32 %v1504, %v1604
      %v1606 = vpop.f32.mrb[0].mxu0
      %v1607 = vadd.f32 %v1506, %v1606
      %1608 = vmatprep.mubr.bf16.mxu0 %v578
      %1609 = vmatmul.mubr.bf16.gmra.mrb[0].mxu0 %v577
      %v1610 = vpop.f32.mrb[0].mxu0
      %v1611 = vadd.f32 %v1510, %v1610
      %v1612 = vpop.f32.mrb[0].mxu0
      %v1613 = vadd.f32 %v1512, %v1612
      %v1614 = vpop.f32.mrb[0].mxu0
      %v1615 = vpop.f32.mrb[0].mxu0
      %1616 = vdwg.mxu0
      %1617 = vmatprep.subr.bf16.mxu0 %v1224
      %1618 = vmatpush1.bf16.msra.mxu0 %v1223
      %1619 = vmatprep.subr.bf16.mxu0 %v1228
      %1620 = vmatpush1.bf16.msra.mxu0 %v1227
      %1621 = vmatprep.subr.bf16.mxu0 %v1232
      %1622 = vmatpush1.bf16.msra.mxu0 %v1231
      %1623 = vmatprep.subr.bf16.mxu0 %v1236
      %1624 = vmatpush1.bf16.msra.mxu0 %v1235
      %1625 = vmatprep.subr.bf16.mxu0 %v1240
      %1626 = vmatpush1.bf16.msra.mxu0 %v1239
      %1627 = vmatprep.subr.bf16.mxu0 %v1244
      %1628 = vmatpush1.bf16.msra.mxu0 %v1243
      %1629 = vmatprep.subr.bf16.mxu0 %v1248
      %1630 = vmatpush1.bf16.msra.mxu0 %v1247
      %1631 = vmatprep.subr.bf16.mxu0 %v1252
      %1632 = vmatpush1.bf16.msra.mxu0 %v1251
      %1633 = vmatprep.subr.bf16.mxu0 0
      %1634 = vmatpush1.bf16.msra.mxu0 0
      %1635 = vmatprep.subr.bf16.mxu0 0
      %1636 = vmatpush1.bf16.msra.mxu0 0
      %1637 = vmatprep.subr.bf16.mxu0 0
      %1638 = vmatpush1.bf16.msra.mxu0 0
      %1639 = vmatprep.subr.bf16.mxu0 0
      %1640 = vmatpush1.bf16.msra.mxu0 0
      %1641 = vmatprep.subr.bf16.mxu0 0
      %1642 = vmatpush1.bf16.msra.mxu0 0
      %1643 = vmatprep.subr.bf16.mxu0 0
      %1644 = vmatpush1.bf16.msra.mxu0 0
      %1645 = vmatprep.subr.bf16.mxu0 0
      %1646 = vmatpush1.bf16.msra.mxu0 0
      %1647 = vmatprep.subr.bf16.mxu0 0
      %1648 = vmatpush1.bf16.msra.mxu0 0
      %1649 = vmatprep.mubr.bf16.mxu0 0
      %1650 = vmatmul.mubr.bf16.gmra.mrb[0].mxu0 %v549
      %v1651 = vpop.f32.mrb[0].mxu0
      %v1652 = vadd.f32 %v1551, %v1651
      %v1653 = vpop.f32.mrb[0].mxu0
      %v1654 = vadd.f32 %v1553, %v1653
      %v1655 = vpop.f32.mrb[0].mxu0
      %v1656 = vadd.f32 %v1555, %v1655
      %v1657 = vpop.f32.mrb[0].mxu0
      %v1658 = vadd.f32 %v1557, %v1657
      %1659 = vmatprep.mubr.bf16.mxu0 0
      %1660 = vmatmul.mubr.bf16.gmra.mrb[0].mxu0 %v554
      %v1661 = vpop.f32.mrb[0].mxu0
      %v1662 = vadd.f32 %v1561, %v1661
      %v1663 = vpop.f32.mrb[0].mxu0
      %v1664 = vadd.f32 %v1563, %v1663
      %v1665 = vpop.f32.mrb[0].mxu0
      %v1666 = vadd.f32 %v1565, %v1665
      %v1667 = vpop.f32.mrb[0].mxu0
      %v1668 = vadd.f32 %v1567, %v1667
      %1669 = vmatprep.mubr.bf16.mxu0 0
      %1670 = vmatmul.mubr.bf16.gmra.mrb[0].mxu0 %v559
      %v1671 = vpop.f32.mrb[0].mxu0
      %v1672 = vadd.f32 %v1571, %v1671
      %v1673 = vpop.f32.mrb[0].mxu0
      %v1674 = vadd.f32 %v1573, %v1673
      %v1675 = vpop.f32.mrb[0].mxu0
      %v1676 = vadd.f32 %v1575, %v1675
      %v1677 = vpop.f32.mrb[0].mxu0
      %v1678 = vadd.f32 %v1577, %v1677
      %1679 = vmatprep.mubr.bf16.mxu0 0
      %1680 = vmatmul.mubr.bf16.gmra.mrb[0].mxu0 %v564
      %v1681 = vpop.f32.mrb[0].mxu0
      %v1682 = vadd.f32 %v1581, %v1681
      %v1683 = vpop.f32.mrb[0].mxu0
      %v1684 = vadd.f32 %v1583, %v1683
      %v1685 = vpop.f32.mrb[0].mxu0
      %v1686 = vadd.f32 %v1585, %v1685
      %v1687 = vpop.f32.mrb[0].mxu0
      %v1688 = vadd.f32 %v1587, %v1687
      %1689 = vmatprep.mubr.bf16.mxu0 0
      %1690 = vmatmul.mubr.bf16.gmra.mrb[0].mxu0 %v569
      %v1691 = vpop.f32.mrb[0].mxu0
      %v1692 = vadd.f32 %v1591, %v1691
      %v1693 = vpop.f32.mrb[0].mxu0
      %v1694 = vadd.f32 %v1593, %v1693
      %v1695 = vpop.f32.mrb[0].mxu0
      %v1696 = vadd.f32 %v1595, %v1695
      %v1697 = vpop.f32.mrb[0].mxu0
      %v1698 = vadd.f32 %v1597, %v1697
      %1699 = vmatprep.mubr.bf16.mxu0 0
      %1700 = vmatmul.mubr.bf16.gmra.mrb[0].mxu0 %v574
      %v1701 = vpop.f32.mrb[0].mxu0
      %v1702 = vadd.f32 %v1601, %v1701
      %v1703 = vpop.f32.mrb[0].mxu0
      %v1704 = vadd.f32 %v1603, %v1703
      %v1705 = vpop.f32.mrb[0].mxu0
      %v1706 = vadd.f32 %v1605, %v1705
      %v1707 = vpop.f32.mrb[0].mxu0
      %v1708 = vadd.f32 %v1607, %v1707
      %1709 = vmatprep.mubr.bf16.mxu0 0
      %1710 = vmatmul.mubr.bf16.gmra.mrb[0].mxu0 %v579
      %v1711 = vpop.f32.mrb[0].mxu0
      %v1712 = vadd.f32 %v1611, %v1711
      %v1713 = vpop.f32.mrb[0].mxu0
      %v1714 = vadd.f32 %v1613, %v1713
      %v1715 = vpop.f32.mrb[0].mxu0
      %v1716 = vpop.f32.mrb[0].mxu0
      %1717 = vdwg.mxu0
      %1718 = vmatprep.subr.bf16.mxu0 %v1098
      %1719 = vmatpush1.bf16.msra.mxu0 %v1097
      %1720 = vmatprep.subr.bf16.mxu0 %v1102
      %1721 = vmatpush1.bf16.msra.mxu0 %v1101
      %1722 = vmatprep.subr.bf16.mxu0 %v1106
      %1723 = vmatpush1.bf16.msra.mxu0 %v1105
      %1724 = vmatprep.subr.bf16.mxu0 %v1110
      %1725 = vmatpush1.bf16.msra.mxu0 %v1109
      %1726 = vmatprep.subr.bf16.mxu0 %v1114
      %1727 = vmatpush1.bf16.msra.mxu0 %v1113
      %1728 = vmatprep.subr.bf16.mxu0 %v1118
      %1729 = vmatpush1.bf16.msra.mxu0 %v1117
      %1730 = vmatprep.subr.bf16.mxu0 %v1122
      %1731 = vmatpush1.bf16.msra.mxu0 %v1121
      %1732 = vmatprep.subr.bf16.mxu0 %v1126
      %1733 = vmatpush1.bf16.msra.mxu0 %v1125
      %1734 = vmatprep.subr.bf16.mxu0 %v1130
      %1735 = vmatpush1.bf16.msra.mxu0 %v1129
      %1736 = vmatprep.subr.bf16.mxu0 %v1134
      %1737 = vmatpush1.bf16.msra.mxu0 %v1133
      %1738 = vmatprep.subr.bf16.mxu0 %v1138
      %1739 = vmatpush1.bf16.msra.mxu0 %v1137
      %1740 = vmatprep.subr.bf16.mxu0 %v1142
      %1741 = vmatpush1.bf16.msra.mxu0 %v1141
      %1742 = vmatprep.subr.bf16.mxu0 %v1146
      %1743 = vmatpush1.bf16.msra.mxu0 %v1145
      %1744 = vmatprep.subr.bf16.mxu0 %v1150
      %1745 = vmatpush1.bf16.msra.mxu0 %v1149
      %1746 = vmatprep.subr.bf16.mxu0 %v1154
      %1747 = vmatpush1.bf16.msra.mxu0 %v1153
      %1748 = vmatprep.subr.bf16.mxu0 %v1158
      %1749 = vmatpush1.bf16.msra.mxu0 %v1157
      %1750 = vmatprep.mubr.bf16.mxu0 %v546
      %1751 = vmatmul.mubr.bf16.gmra.mrb[0].mxu0 %v545
      %v1752 = vpop.f32.mrb[0].mxu0
      %v1753 = vadd.f32 %v432, %v1752
      %v1754 = vpop.f32.mrb[0].mxu0
      %v1755 = vadd.f32 %v436, %v1754
      %v1756 = vpop.f32.mrb[0].mxu0
      %v1757 = vadd.f32 %v432, %v1756
      %v1758 = vpop.f32.mrb[0].mxu0
      %v1759 = vadd.f32 %v436, %v1758
      %1760 = vmatprep.mubr.bf16.mxu0 %v551
      %1761 = vmatmul.mubr.bf16.gmra.mrb[0].mxu0 %v550
      %v1762 = vpop.f32.mrb[0].mxu0
      %v1763 = vadd.f32 %v432, %v1762
      %v1764 = vpop.f32.mrb[0].mxu0
      %v1765 = vadd.f32 %v436, %v1764
      %v1766 = vpop.f32.mrb[0].mxu0
      %v1767 = vadd.f32 %v432, %v1766
      %v1768 = vpop.f32.mrb[0].mxu0
      %v1769 = vadd.f32 %v436, %v1768
      %1770 = vmatprep.mubr.bf16.mxu0 %v556
      %1771 = vmatmul.mubr.bf16.gmra.mrb[0].mxu0 %v555
      %v1772 = vpop.f32.mrb[0].mxu0
      %v1773 = vadd.f32 %v432, %v1772
      %v1774 = vpop.f32.mrb[0].mxu0
      %v1775 = vadd.f32 %v436, %v1774
      %v1776 = vpop.f32.mrb[0].mxu0
      %v1777 = vadd.f32 %v432, %v1776
      %v1778 = vpop.f32.mrb[0].mxu0
      %v1779 = vadd.f32 %v436, %v1778
      %1780 = vmatprep.mubr.bf16.mxu0 %v561
      %1781 = vmatmul.mubr.bf16.gmra.mrb[0].mxu0 %v560
      %v1782 = vpop.f32.mrb[0].mxu0
      %v1783 = vadd.f32 %v432, %v1782
      %v1784 = vpop.f32.mrb[0].mxu0
      %v1785 = vadd.f32 %v436, %v1784
      %v1786 = vpop.f32.mrb[0].mxu0
      %v1787 = vadd.f32 %v432, %v1786
      %v1788 = vpop.f32.mrb[0].mxu0
      %v1789 = vadd.f32 %v436, %v1788
      %1790 = vmatprep.mubr.bf16.mxu0 %v566
      %1791 = vmatmul.mubr.bf16.gmra.mrb[0].mxu0 %v565
      %v1792 = vpop.f32.mrb[0].mxu0
      %v1793 = vadd.f32 %v432, %v1792
      %v1794 = vpop.f32.mrb[0].mxu0
      %v1795 = vadd.f32 %v436, %v1794
      %v1796 = vpop.f32.mrb[0].mxu0
      %v1797 = vadd.f32 %v432, %v1796
      %v1798 = vpop.f32.mrb[0].mxu0
      %v1799 = vadd.f32 %v436, %v1798
      %1800 = vmatprep.mubr.bf16.mxu0 %v571
      %1801 = vmatmul.mubr.bf16.gmra.mrb[0].mxu0 %v570
      %v1802 = vpop.f32.mrb[0].mxu0
      %v1803 = vadd.f32 %v432, %v1802
      %v1804 = vpop.f32.mrb[0].mxu0
      %v1805 = vadd.f32 %v436, %v1804
      %v1806 = vpop.f32.mrb[0].mxu0
      %v1807 = vadd.f32 %v432, %v1806
      %v1808 = vpop.f32.mrb[0].mxu0
      %v1809 = vadd.f32 %v436, %v1808
      %1810 = vmatprep.mubr.bf16.mxu0 %v576
      %1811 = vmatmul.mubr.bf16.gmra.mrb[0].mxu0 %v575
      %v1812 = vpop.f32.mrb[0].mxu0
      %v1813 = vadd.f32 %v432, %v1812
      %v1814 = vpop.f32.mrb[0].mxu0
      %v1815 = vadd.f32 %v436, %v1814
      %v1816 = vpop.f32.mrb[0].mxu0
      %v1817 = vpop.f32.mrb[0].mxu0
      %1818 = vdwg.mxu0
      %1819 = vmatprep.subr.bf16.mxu0 %v1162
      %1820 = vmatpush1.bf16.msra.mxu0 %v1161
      %1821 = vmatprep.subr.bf16.mxu0 %v1166
      %1822 = vmatpush1.bf16.msra.mxu0 %v1165
      %1823 = vmatprep.subr.bf16.mxu0 %v1170
      %1824 = vmatpush1.bf16.msra.mxu0 %v1169
      %1825 = vmatprep.subr.bf16.mxu0 %v1174
      %1826 = vmatpush1.bf16.msra.mxu0 %v1173
      %1827 = vmatprep.subr.bf16.mxu0 %v1178
      %1828 = vmatpush1.bf16.msra.mxu0 %v1177
      %1829 = vmatprep.subr.bf16.mxu0 %v1182
      %1830 = vmatpush1.bf16.msra.mxu0 %v1181
      %1831 = vmatprep.subr.bf16.mxu0 %v1186
      %1832 = vmatpush1.bf16.msra.mxu0 %v1185
      %1833 = vmatprep.subr.bf16.mxu0 %v1190
      %1834 = vmatpush1.bf16.msra.mxu0 %v1189
      %1835 = vmatprep.subr.bf16.mxu0 %v1194
      %1836 = vmatpush1.bf16.msra.mxu0 %v1193
      %1837 = vmatprep.subr.bf16.mxu0 %v1198
      %1838 = vmatpush1.bf16.msra.mxu0 %v1197
      %1839 = vmatprep.subr.bf16.mxu0 %v1202
      %1840 = vmatpush1.bf16.msra.mxu0 %v1201
      %1841 = vmatprep.subr.bf16.mxu0 %v1206
      %1842 = vmatpush1.bf16.msra.mxu0 %v1205
      %1843 = vmatprep.subr.bf16.mxu0 %v1210
      %1844 = vmatpush1.bf16.msra.mxu0 %v1209
      %1845 = vmatprep.subr.bf16.mxu0 %v1214
      %1846 = vmatpush1.bf16.msra.mxu0 %v1213
      %1847 = vmatprep.subr.bf16.mxu0 %v1218
      %1848 = vmatpush1.bf16.msra.mxu0 %v1217
      %1849 = vmatprep.subr.bf16.mxu0 %v1222
      %1850 = vmatpush1.bf16.msra.mxu0 %v1221
      %1851 = vmatprep.mubr.bf16.mxu0 %v548
      %1852 = vmatmul.mubr.bf16.gmra.mrb[0].mxu0 %v547
      %v1853 = vpop.f32.mrb[0].mxu0
      %v1854 = vadd.f32 %v1753, %v1853
      %v1855 = vpop.f32.mrb[0].mxu0
      %v1856 = vadd.f32 %v1755, %v1855
      %v1857 = vpop.f32.mrb[0].mxu0
      %v1858 = vadd.f32 %v1757, %v1857
      %v1859 = vpop.f32.mrb[0].mxu0
      %v1860 = vadd.f32 %v1759, %v1859
      %1861 = vmatprep.mubr.bf16.mxu0 %v553
      %1862 = vmatmul.mubr.bf16.gmra.mrb[0].mxu0 %v552
      %v1863 = vpop.f32.mrb[0].mxu0
      %v1864 = vadd.f32 %v1763, %v1863
      %v1865 = vpop.f32.mrb[0].mxu0
      %v1866 = vadd.f32 %v1765, %v1865
      %v1867 = vpop.f32.mrb[0].mxu0
      %v1868 = vadd.f32 %v1767, %v1867
      %v1869 = vpop.f32.mrb[0].mxu0
      %v1870 = vadd.f32 %v1769, %v1869
      %1871 = vmatprep.mubr.bf16.mxu0 %v558
      %1872 = vmatmul.mubr.bf16.gmra.mrb[0].mxu0 %v557
      %v1873 = vpop.f32.mrb[0].mxu0
      %v1874 = vadd.f32 %v1773, %v1873
      %v1875 = vpop.f32.mrb[0].mxu0
      %v1876 = vadd.f32 %v1775, %v1875
      %v1877 = vpop.f32.mrb[0].mxu0
      %v1878 = vadd.f32 %v1777, %v1877
      %v1879 = vpop.f32.mrb[0].mxu0
      %v1880 = vadd.f32 %v1779, %v1879
      %1881 = vmatprep.mubr.bf16.mxu0 %v563
      %1882 = vmatmul.mubr.bf16.gmra.mrb[0].mxu0 %v562
      %v1883 = vpop.f32.mrb[0].mxu0
      %v1884 = vadd.f32 %v1783, %v1883
      %v1885 = vpop.f32.mrb[0].mxu0
      %v1886 = vadd.f32 %v1785, %v1885
      %v1887 = vpop.f32.mrb[0].mxu0
      %v1888 = vadd.f32 %v1787, %v1887
      %v1889 = vpop.f32.mrb[0].mxu0
      %v1890 = vadd.f32 %v1789, %v1889
      %1891 = vmatprep.mubr.bf16.mxu0 %v568
      %1892 = vmatmul.mubr.bf16.gmra.mrb[0].mxu0 %v567
      %v1893 = vpop.f32.mrb[0].mxu0
      %v1894 = vadd.f32 %v1793, %v1893
      %v1895 = vpop.f32.mrb[0].mxu0
      %v1896 = vadd.f32 %v1795, %v1895
      %v1897 = vpop.f32.mrb[0].mxu0
      %v1898 = vadd.f32 %v1797, %v1897
      %v1899 = vpop.f32.mrb[0].mxu0
      %v1900 = vadd.f32 %v1799, %v1899
      %1901 = vmatprep.mubr.bf16.mxu0 %v573
      %1902 = vmatmul.mubr.bf16.gmra.mrb[0].mxu0 %v572
      %v1903 = vpop.f32.mrb[0].mxu0
      %v1904 = vadd.f32 %v1803, %v1903
      %v1905 = vpop.f32.mrb[0].mxu0
      %v1906 = vadd.f32 %v1805, %v1905
      %v1907 = vpop.f32.mrb[0].mxu0
      %v1908 = vadd.f32 %v1807, %v1907
      %v1909 = vpop.f32.mrb[0].mxu0
      %v1910 = vadd.f32 %v1809, %v1909
      %1911 = vmatprep.mubr.bf16.mxu0 %v578
      %1912 = vmatmul.mubr.bf16.gmra.mrb[0].mxu0 %v577
      %v1913 = vpop.f32.mrb[0].mxu0
      %v1914 = vadd.f32 %v1813, %v1913
      %v1915 = vpop.f32.mrb[0].mxu0
      %v1916 = vadd.f32 %v1815, %v1915
      %v1917 = vpop.f32.mrb[0].mxu0
      %v1918 = vpop.f32.mrb[0].mxu0
      %1919 = vdwg.mxu0
      %1920 = vmatprep.subr.bf16.mxu0 %v1226
      %1921 = vmatpush1.bf16.msra.mxu0 %v1225
      %1922 = vmatprep.subr.bf16.mxu0 %v1230
      %1923 = vmatpush1.bf16.msra.mxu0 %v1229
      %1924 = vmatprep.subr.bf16.mxu0 %v1234
      %1925 = vmatpush1.bf16.msra.mxu0 %v1233
      %1926 = vmatprep.subr.bf16.mxu0 %v1238
      %1927 = vmatpush1.bf16.msra.mxu0 %v1237
      %1928 = vmatprep.subr.bf16.mxu0 %v1242
      %1929 = vmatpush1.bf16.msra.mxu0 %v1241
      %1930 = vmatprep.subr.bf16.mxu0 %v1246
      %1931 = vmatpush1.bf16.msra.mxu0 %v1245
      %1932 = vmatprep.subr.bf16.mxu0 %v1250
      %1933 = vmatpush1.bf16.msra.mxu0 %v1249
      %1934 = vmatprep.subr.bf16.mxu0 %v1254
      %1935 = vmatpush1.bf16.msra.mxu0 %v1253
      %1936 = vmatprep.subr.bf16.mxu0 0
      %1937 = vmatpush1.bf16.msra.mxu0 0
      %1938 = vmatprep.subr.bf16.mxu0 0
      %1939 = vmatpush1.bf16.msra.mxu0 0
      %1940 = vmatprep.subr.bf16.mxu0 0
      %1941 = vmatpush1.bf16.msra.mxu0 0
      %1942 = vmatprep.subr.bf16.mxu0 0
      %1943 = vmatpush1.bf16.msra.mxu0 0
      %1944 = vmatprep.subr.bf16.mxu0 0
      %1945 = vmatpush1.bf16.msra.mxu0 0
      %1946 = vmatprep.subr.bf16.mxu0 0
      %1947 = vmatpush1.bf16.msra.mxu0 0
      %1948 = vmatprep.subr.bf16.mxu0 0
      %1949 = vmatpush1.bf16.msra.mxu0 0
      %1950 = vmatprep.subr.bf16.mxu0 0
      %1951 = vmatpush1.bf16.msra.mxu0 0
      %1952 = vmatprep.mubr.bf16.mxu0 0
      %1953 = vmatmul.mubr.bf16.gmra.mrb[0].mxu0 %v549
      %v1954 = vpop.f32.mrb[0].mxu0
      %v1955 = vadd.f32 %v1854, %v1954
      %v1956 = vpop.f32.mrb[0].mxu0
      %v1957 = vadd.f32 %v1856, %v1956
      %v1958 = vpop.f32.mrb[0].mxu0
      %v1959 = vadd.f32 %v1858, %v1958
      %v1960 = vpop.f32.mrb[0].mxu0
      %v1961 = vadd.f32 %v1860, %v1960
      %1962 = vmatprep.mubr.bf16.mxu0 0
      %1963 = vmatmul.mubr.bf16.gmra.mrb[0].mxu0 %v554
      %v1964 = vpop.f32.mrb[0].mxu0
      %v1965 = vadd.f32 %v1864, %v1964
      %v1966 = vpop.f32.mrb[0].mxu0
      %v1967 = vadd.f32 %v1866, %v1966
      %v1968 = vpop.f32.mrb[0].mxu0
      %v1969 = vadd.f32 %v1868, %v1968
      %v1970 = vpop.f32.mrb[0].mxu0
      %v1971 = vadd.f32 %v1870, %v1970
      %1972 = vmatprep.mubr.bf16.mxu0 0
      %1973 = vmatmul.mubr.bf16.gmra.mrb[0].mxu0 %v559
      %v1974 = vpop.f32.mrb[0].mxu0
      %v1975 = vadd.f32 %v1874, %v1974
      %v1976 = vpop.f32.mrb[0].mxu0
      %v1977 = vadd.f32 %v1876, %v1976
      %v1978 = vpop.f32.mrb[0].mxu0
      %v1979 = vadd.f32 %v1878, %v1978
      %v1980 = vpop.f32.mrb[0].mxu0
      %v1981 = vadd.f32 %v1880, %v1980
      %1982 = vmatprep.mubr.bf16.mxu0 0
      %1983 = vmatmul.mubr.bf16.gmra.mrb[0].mxu0 %v564
      %v1984 = vpop.f32.mrb[0].mxu0
      %v1985 = vadd.f32 %v1884, %v1984
      %v1986 = vpop.f32.mrb[0].mxu0
      %v1987 = vadd.f32 %v1886, %v1986
      %v1988 = vpop.f32.mrb[0].mxu0
      %v1989 = vadd.f32 %v1888, %v1988
      %v1990 = vpop.f32.mrb[0].mxu0
      %v1991 = vadd.f32 %v1890, %v1990
      %1992 = vmatprep.mubr.bf16.mxu0 0
      %1993 = vmatmul.mubr.bf16.gmra.mrb[0].mxu0 %v569
      %v1994 = vpop.f32.mrb[0].mxu0
      %v1995 = vadd.f32 %v1894, %v1994
      %v1996 = vpop.f32.mrb[0].mxu0
      %v1997 = vadd.f32 %v1896, %v1996
      %v1998 = vpop.f32.mrb[0].mxu0
      %v1999 = vadd.f32 %v1898, %v1998
      %v2000 = vpop.f32.mrb[0].mxu0
      %v2001 = vadd.f32 %v1900, %v2000
      %2002 = vmatprep.mubr.bf16.mxu0 0
      %2003 = vmatmul.mubr.bf16.gmra.mrb[0].mxu0 %v574
      %v2004 = vpop.f32.mrb[0].mxu0
      %v2005 = vadd.f32 %v1904, %v2004
      %v2006 = vpop.f32.mrb[0].mxu0
      %v2007 = vadd.f32 %v1906, %v2006
      %v2008 = vpop.f32.mrb[0].mxu0
      %v2009 = vadd.f32 %v1908, %v2008
      %v2010 = vpop.f32.mrb[0].mxu0
      %v2011 = vadd.f32 %v1910, %v2010
      %2012 = vmatprep.mubr.bf16.mxu0 0
      %2013 = vmatmul.mubr.bf16.gmra.mrb[0].mxu0 %v579
      %v2014 = vpop.f32.mrb[0].mxu0
      %v2015 = vadd.f32 %v1914, %v2014
      %v2016 = vpop.f32.mrb[0].mxu0
      %v2017 = vadd.f32 %v1916, %v2016
      %v2018 = vpop.f32.mrb[0].mxu0
      %v2019 = vpop.f32.mrb[0].mxu0
      %2020 = vdwg.mxu0
      %v2021 = vpack.c.bf16 %v1656, %v1652
      %v2022 = vpack.c.bf16 %v1658, %v1654
      %v2023 = vpack.c.bf16 %v1959, %v1955
      %v2024 = vpack.c.bf16 %v1961, %v1957
      %v2025 = vpack.c.bf16 %v1666, %v1662
      %v2026 = vpack.c.bf16 %v1668, %v1664
      %v2027 = vpack.c.bf16 %v1969, %v1965
      %v2028 = vpack.c.bf16 %v1971, %v1967
      %v2029 = vpack.c.bf16 %v1676, %v1672
      %v2030 = vpack.c.bf16 %v1678, %v1674
      %v2031 = vpack.c.bf16 %v1979, %v1975
      %v2032 = vpack.c.bf16 %v1981, %v1977
      %v2033 = vpack.c.bf16 %v1686, %v1682
      %v2034 = vpack.c.bf16 %v1688, %v1684
      %v2035 = vpack.c.bf16 %v1989, %v1985
      %v2036 = vpack.c.bf16 %v1991, %v1987
      %v2037 = vpack.c.bf16 %v1696, %v1692
      %v2038 = vpack.c.bf16 %v1698, %v1694
      %v2039 = vpack.c.bf16 %v1999, %v1995
      %v2040 = vpack.c.bf16 %v2001, %v1997
      %v2041 = vpack.c.bf16 %v1706, %v1702
      %v2042 = vpack.c.bf16 %v1708, %v1704
      %v2043 = vpack.c.bf16 %v2009, %v2005
      %v2044 = vpack.c.bf16 %v2011, %v2007
      %v2045 = vpack.c.bf16 %v1712, %v1712
      %v2046 = vpack.c.bf16 %v1714, %v1714
      %v2047 = vpack.c.bf16 %v2015, %v2015
      %v2048 = vpack.c.bf16 %v2017, %v2017
      %v2077 = vunpack.c.l.b16 %v2021
      %v2078 = vunpack.c.l.b16 %v2022
      %v2079 = vunpack.c.l.b16 %v2023
      %v2080 = vunpack.c.l.b16 %v2024
      %v2081 = vunpack.c.h.b16 %v2021
      %v2082 = vunpack.c.h.b16 %v2022
      %v2083 = vunpack.c.h.b16 %v2023
      %v2084 = vunpack.c.h.b16 %v2024
      %v2085 = vunpack.c.l.b16 %v2025
      %v2086 = vunpack.c.l.b16 %v2026
      %v2087 = vunpack.c.l.b16 %v2027
      %v2088 = vunpack.c.l.b16 %v2028
      %v2089 = vunpack.c.h.b16 %v2025
      %v2090 = vunpack.c.h.b16 %v2026
      %v2091 = vunpack.c.h.b16 %v2027
      %v2092 = vunpack.c.h.b16 %v2028
      %v2093 = vunpack.c.l.b16 %v2029
      %v2094 = vunpack.c.l.b16 %v2030
      %v2095 = vunpack.c.l.b16 %v2031
      %v2096 = vunpack.c.l.b16 %v2032
      %v2097 = vunpack.c.h.b16 %v2029
      %v2098 = vunpack.c.h.b16 %v2030
      %v2099 = vunpack.c.h.b16 %v2031
      %v2100 = vunpack.c.h.b16 %v2032
      %v2101 = vunpack.c.l.b16 %v2033
      %v2102 = vunpack.c.l.b16 %v2034
      %v2103 = vunpack.c.l.b16 %v2035
      %v2104 = vunpack.c.l.b16 %v2036
      %v2105 = vunpack.c.h.b16 %v2033
      %v2106 = vunpack.c.h.b16 %v2034
      %v2107 = vunpack.c.h.b16 %v2035
      %v2108 = vunpack.c.h.b16 %v2036
      %v2109 = vunpack.c.l.b16 %v2037
      %v2110 = vunpack.c.l.b16 %v2038
      %v2111 = vunpack.c.l.b16 %v2039
      %v2112 = vunpack.c.l.b16 %v2040
      %v2113 = vunpack.c.h.b16 %v2037
      %v2114 = vunpack.c.h.b16 %v2038
      %v2115 = vunpack.c.h.b16 %v2039
      %v2116 = vunpack.c.h.b16 %v2040
      %v2117 = vunpack.c.l.b16 %v2041
      %v2118 = vunpack.c.l.b16 %v2042
      %v2119 = vunpack.c.l.b16 %v2043
      %v2120 = vunpack.c.l.b16 %v2044
      %v2121 = vunpack.c.h.b16 %v2041
      %v2122 = vunpack.c.h.b16 %v2042
      %v2123 = vunpack.c.h.b16 %v2043
      %v2124 = vunpack.c.h.b16 %v2044
      %v2125 = vunpack.c.l.b16 %v2045
      %v2126 = vunpack.c.l.b16 %v2046
      %v2127 = vunpack.c.l.b16 %v2047
      %v2128 = vunpack.c.l.b16 %v2048
      %v2129 = vpack.c.b16 %v2078, %v2077
      %v2130 = vpack.c.b16 %v2080, %v2079
      %v2131 = vpack.c.b16 %v2082, %v2081
      %v2132 = vpack.c.b16 %v2084, %v2083
      %v2133 = vpack.c.b16 %v2086, %v2085
      %v2134 = vpack.c.b16 %v2088, %v2087
      %v2135 = vpack.c.b16 %v2090, %v2089
      %v2136 = vpack.c.b16 %v2092, %v2091
      %v2137 = vpack.c.b16 %v2094, %v2093
      %v2138 = vpack.c.b16 %v2096, %v2095
      %v2139 = vpack.c.b16 %v2098, %v2097
      %v2140 = vpack.c.b16 %v2100, %v2099
      %v2141 = vpack.c.b16 %v2102, %v2101
      %v2142 = vpack.c.b16 %v2104, %v2103
      %v2143 = vpack.c.b16 %v2106, %v2105
      %v2144 = vpack.c.b16 %v2108, %v2107
      %v2145 = vpack.c.b16 %v2110, %v2109
      %v2146 = vpack.c.b16 %v2112, %v2111
      %v2147 = vpack.c.b16 %v2114, %v2113
      %v2148 = vpack.c.b16 %v2116, %v2115
      %v2149 = vpack.c.b16 %v2118, %v2117
      %v2150 = vpack.c.b16 %v2120, %v2119
      %v2151 = vpack.c.b16 %v2122, %v2121
      %v2152 = vpack.c.b16 %v2124, %v2123
      %v2153 = vpack.c.b16 %v2126, %v2125
      %v2154 = vpack.c.b16 %v2128, %v2127
      %2181 = vst [vmem:[%s212] sm:$0xff] %v2129
      %2182 = vst [vmem:[%s212 + $0x8] sm:$0xff] %v2130
      %2183 = vst [vmem:[%s212 + $0x10] sm:$0xff] %v2131
      %2184 = vst [vmem:[%s212 + $0x18] sm:$0xff] %v2132
      %2185 = vst [vmem:[%s212 + $0x20] sm:$0xff] %v2133
      %2186 = vst [vmem:[%s212 + $0x28] sm:$0xff] %v2134
      %2187 = vst [vmem:[%s212 + $0x30] sm:$0xff] %v2135
      %2188 = vst [vmem:[%s212 + $0x38] sm:$0xff] %v2136
      %2189 = vst [vmem:[%s212 + $0x40] sm:$0xff] %v2137
      %2190 = vst [vmem:[%s212 + $0x48] sm:$0xff] %v2138
      %2191 = vst [vmem:[%s212 + $0x50] sm:$0xff] %v2139
      %2192 = vst [vmem:[%s212 + $0x58] sm:$0xff] %v2140
      %2193 = vst [vmem:[%s212 + $0x60] sm:$0xff] %v2141
      %2194 = vst [vmem:[%s212 + $0x68] sm:$0xff] %v2142
      %2195 = vst [vmem:[%s212 + $0x70] sm:$0xff] %v2143
      %2196 = vst [vmem:[%s212 + $0x78] sm:$0xff] %v2144
      %2197 = vst [vmem:[%s212 + $0x80] sm:$0xff] %v2145
      %2198 = vst [vmem:[%s212 + $0x88] sm:$0xff] %v2146
      %2199 = vst [vmem:[%s212 + $0x90] sm:$0xff] %v2147
      %2200 = vst [vmem:[%s212 + $0x98] sm:$0xff] %v2148
      %2201 = vst [vmem:[%s212 + $0xa0] sm:$0xff] %v2149
      %2202 = vst [vmem:[%s212 + $0xa8] sm:$0xff] %v2150
      %2203 = vst [vmem:[%s212 + $0xb0] sm:$0xff] %v2151
      %2204 = vst [vmem:[%s212 + $0xb8] sm:$0xff] %v2152
      %2205 = vst [vmem:[%s212 + $0xc0] sm:$0xff] %v2153
      %2206 = vst [vmem:[%s212 + $0xc8] sm:$0xff] %v2154
      %p2207 = scmp.eq.s32.totalorder %s16, 1
      %p2208 = scmp.ne.s32.totalorder %s16, 1
      // Predicated region
      $region33: #{encoder_forward.3} parent=31 // pred_check
        %p2209 = pneg %p2208
      $region34: #{encoder_forward.3} parent=31 // pred_check_branch
        %2211 = sbr.rel (%p2209) target = $region36
      $region35: #{encoder_forward.3} parent=31 // pred_region
        %v2212 = vadd.f32 %v1652, %v1656
        %v2213 = vadd.f32 %v2212, %v1662
        %v2214 = vadd.f32 %v2213, %v1666
        %v2215 = vadd.f32 %v2214, %v1672
        %v2216 = vadd.f32 %v2215, %v1676
        %v2217 = vadd.f32 %v2216, %v1682
        %v2218 = vadd.f32 %v2217, %v1686
        %v2219 = vadd.f32 %v2218, %v1692
        %v2220 = vadd.f32 %v2219, %v1696
        %v2221 = vadd.f32 %v2220, %v1702
        %v2222 = vadd.f32 %v2221, %v1706
        %v2223 = vadd.f32 %v2222, %v1712
        %v2224 = vrot.slane %v2223, 4
        %v2225 = vadd.f32 %v2223, %v2224
        %v2226 = vrot.slane %v2225, 2
        %v2227 = vadd.f32 %v2225, %v2226
        %v2228 = vrot.slane %v2227, 1
        %v2229 = vadd.f32 %v2227, %v2228
        %v2230 = vadd.f32 %v1654, %v1658
        %v2231 = vadd.f32 %v2230, %v1664
        %v2232 = vadd.f32 %v2231, %v1668
        %v2233 = vadd.f32 %v2232, %v1674
        %v2234 = vadd.f32 %v2233, %v1678
        %v2235 = vadd.f32 %v2234, %v1684
        %v2236 = vadd.f32 %v2235, %v1688
        %v2237 = vadd.f32 %v2236, %v1694
        %v2238 = vadd.f32 %v2237, %v1698
        %v2239 = vadd.f32 %v2238, %v1704
        %v2240 = vadd.f32 %v2239, %v1708
        %v2241 = vadd.f32 %v2240, %v1714
        %v2242 = vrot.slane %v2241, 4
        %v2243 = vadd.f32 %v2241, %v2242
        %v2244 = vrot.slane %v2243, 2
        %v2245 = vadd.f32 %v2243, %v2244
        %v2246 = vrot.slane %v2245, 1
        %v2247 = vadd.f32 %v2245, %v2246
        %v2248 = vadd.f32 %v1955, %v1959
        %v2249 = vadd.f32 %v2248, %v1965
        %v2250 = vadd.f32 %v2249, %v1969
        %v2251 = vadd.f32 %v2250, %v1975
        %v2252 = vadd.f32 %v2251, %v1979
        %v2253 = vadd.f32 %v2252, %v1985
        %v2254 = vadd.f32 %v2253, %v1989
        %v2255 = vadd.f32 %v2254, %v1995
        %v2256 = vadd.f32 %v2255, %v1999
        %v2257 = vadd.f32 %v2256, %v2005
        %v2258 = vadd.f32 %v2257, %v2009
        %v2259 = vadd.f32 %v2258, %v2015
        %v2260 = vrot.slane %v2259, 4
        %v2261 = vadd.f32 %v2259, %v2260
        %v2262 = vrot.slane %v2261, 2
        %v2263 = vadd.f32 %v2261, %v2262
        %v2264 = vrot.slane %v2263, 1
        %v2265 = vadd.f32 %v2263, %v2264
        %v2266 = vadd.f32 %v1957, %v1961
        %v2267 = vadd.f32 %v2266, %v1967
        %v2268 = vadd.f32 %v2267, %v1971
        %v2269 = vadd.f32 %v2268, %v1977
        %v2270 = vadd.f32 %v2269, %v1981
        %v2271 = vadd.f32 %v2270, %v1987
        %v2272 = vadd.f32 %v2271, %v1991
        %v2273 = vadd.f32 %v2272, %v1997
        %v2274 = vadd.f32 %v2273, %v2001
        %v2275 = vadd.f32 %v2274, %v2007
        %v2276 = vadd.f32 %v2275, %v2011
        %v2277 = vadd.f32 %v2276, %v2017
        %v2278 = vrot.slane %v2277, 4
        %v2279 = vadd.f32 %v2277, %v2278
        %v2280 = vrot.slane %v2279, 2
        %v2281 = vadd.f32 %v2279, %v2280
        %v2282 = vrot.slane %v2281, 1
        %v2283 = vadd.f32 %v2281, %v2282
        %v2284 = vmul.f32 %v1652, %v1652
        %v2285 = vmul.f32 %v1654, %v1654
        %v2286 = vmul.f32 %v1955, %v1955
        %v2287 = vmul.f32 %v1957, %v1957
        %v2288 = vmul.f32 %v1656, %v1656
        %v2289 = vmul.f32 %v1658, %v1658
        %v2290 = vmul.f32 %v1959, %v1959
        %v2291 = vmul.f32 %v1961, %v1961
        %v2292 = vmul.f32 %v1662, %v1662
        %v2293 = vmul.f32 %v1664, %v1664
        %v2294 = vmul.f32 %v1965, %v1965
        %v2295 = vmul.f32 %v1967, %v1967
        %v2296 = vmul.f32 %v1666, %v1666
        %v2297 = vmul.f32 %v1668, %v1668
        %v2298 = vmul.f32 %v1969, %v1969
        %v2299 = vmul.f32 %v1971, %v1971
        %v2300 = vmul.f32 %v1672, %v1672
        %v2301 = vmul.f32 %v1674, %v1674
        %v2302 = vmul.f32 %v1975, %v1975
        %v2303 = vmul.f32 %v1977, %v1977
        %v2304 = vmul.f32 %v1676, %v1676
        %v2305 = vmul.f32 %v1678, %v1678
        %v2306 = vmul.f32 %v1979, %v1979
        %v2307 = vmul.f32 %v1981, %v1981
        %v2308 = vmul.f32 %v1682, %v1682
        %v2309 = vmul.f32 %v1684, %v1684
        %v2310 = vmul.f32 %v1985, %v1985
        %v2311 = vmul.f32 %v1987, %v1987
        %v2312 = vmul.f32 %v1686, %v1686
        %v2313 = vmul.f32 %v1688, %v1688
        %v2314 = vmul.f32 %v1989, %v1989
        %v2315 = vmul.f32 %v1991, %v1991
        %v2316 = vmul.f32 %v1692, %v1692
        %v2317 = vmul.f32 %v1694, %v1694
        %v2318 = vmul.f32 %v1995, %v1995
        %v2319 = vmul.f32 %v1997, %v1997
        %v2320 = vmul.f32 %v1696, %v1696
        %v2321 = vmul.f32 %v1698, %v1698
        %v2322 = vmul.f32 %v1999, %v1999
        %v2323 = vmul.f32 %v2001, %v2001
        %v2324 = vmul.f32 %v1702, %v1702
        %v2325 = vmul.f32 %v1704, %v1704
        %v2326 = vmul.f32 %v2005, %v2005
        %v2327 = vmul.f32 %v2007, %v2007
        %v2328 = vmul.f32 %v1706, %v1706
        %v2329 = vmul.f32 %v1708, %v1708
        %v2330 = vmul.f32 %v2009, %v2009
        %v2331 = vmul.f32 %v2011, %v2011
        %v2332 = vmul.f32 %v1712, %v1712
        %v2333 = vmul.f32 %v1714, %v1714
        %v2334 = vmul.f32 %v2015, %v2015
        %v2335 = vmul.f32 %v2017, %v2017
        %v2336 = vadd.f32 %v2284, %v2288
        %v2337 = vadd.f32 %v2336, %v2292
        %v2338 = vadd.f32 %v2337, %v2296
        %v2339 = vadd.f32 %v2338, %v2300
        %v2340 = vadd.f32 %v2339, %v2304
        %v2341 = vadd.f32 %v2340, %v2308
        %v2342 = vadd.f32 %v2341, %v2312
        %v2343 = vadd.f32 %v2342, %v2316
        %v2344 = vadd.f32 %v2343, %v2320
        %v2345 = vadd.f32 %v2344, %v2324
        %v2346 = vadd.f32 %v2345, %v2328
        %v2347 = vadd.f32 %v2346, %v2332
        %v2348 = vrot.slane %v2347, 4
        %v2349 = vadd.f32 %v2347, %v2348
        %v2350 = vrot.slane %v2349, 2
        %v2351 = vadd.f32 %v2349, %v2350
        %v2352 = vrot.slane %v2351, 1
        %v2353 = vadd.f32 %v2351, %v2352
        %v2354 = vadd.f32 %v2285, %v2289
        %v2355 = vadd.f32 %v2354, %v2293
        %v2356 = vadd.f32 %v2355, %v2297
        %v2357 = vadd.f32 %v2356, %v2301
        %v2358 = vadd.f32 %v2357, %v2305
        %v2359 = vadd.f32 %v2358, %v2309
        %v2360 = vadd.f32 %v2359, %v2313
        %v2361 = vadd.f32 %v2360, %v2317
        %v2362 = vadd.f32 %v2361, %v2321
        %v2363 = vadd.f32 %v2362, %v2325
        %v2364 = vadd.f32 %v2363, %v2329
        %v2365 = vadd.f32 %v2364, %v2333
        %v2366 = vrot.slane %v2365, 4
        %v2367 = vadd.f32 %v2365, %v2366
        %v2368 = vrot.slane %v2367, 2
        %v2369 = vadd.f32 %v2367, %v2368
        %v2370 = vrot.slane %v2369, 1
        %v2371 = vadd.f32 %v2369, %v2370
        %v2372 = vadd.f32 %v2286, %v2290
        %v2373 = vadd.f32 %v2372, %v2294
        %v2374 = vadd.f32 %v2373, %v2298
        %v2375 = vadd.f32 %v2374, %v2302
        %v2376 = vadd.f32 %v2375, %v2306
        %v2377 = vadd.f32 %v2376, %v2310
        %v2378 = vadd.f32 %v2377, %v2314
        %v2379 = vadd.f32 %v2378, %v2318
        %v2380 = vadd.f32 %v2379, %v2322
        %v2381 = vadd.f32 %v2380, %v2326
        %v2382 = vadd.f32 %v2381, %v2330
        %v2383 = vadd.f32 %v2382, %v2334
        %v2384 = vrot.slane %v2383, 4
        %v2385 = vadd.f32 %v2383, %v2384
        %v2386 = vrot.slane %v2385, 2
        %v2387 = vadd.f32 %v2385, %v2386
        %v2388 = vrot.slane %v2387, 1
        %v2389 = vadd.f32 %v2387, %v2388
        %v2390 = vadd.f32 %v2287, %v2291
        %v2391 = vadd.f32 %v2390, %v2295
        %v2392 = vadd.f32 %v2391, %v2299
        %v2393 = vadd.f32 %v2392, %v2303
        %v2394 = vadd.f32 %v2393, %v2307
        %v2395 = vadd.f32 %v2394, %v2311
        %v2396 = vadd.f32 %v2395, %v2315
        %v2397 = vadd.f32 %v2396, %v2319
        %v2398 = vadd.f32 %v2397, %v2323
        %v2399 = vadd.f32 %v2398, %v2327
        %v2400 = vadd.f32 %v2399, %v2331
        %v2401 = vadd.f32 %v2400, %v2335
        %v2402 = vrot.slane %v2401, 4
        %v2403 = vadd.f32 %v2401, %v2402
        %v2404 = vrot.slane %v2403, 2
        %v2405 = vadd.f32 %v2403, %v2404
        %v2406 = vrot.slane %v2405, 1
        %v2407 = vadd.f32 %v2405, %v2406
        %vm2408 = vcmask 1040384
        %v2409 = vsel %vm2408, %v2229, %v2353
        %v2410 = vsel %vm2408, %v2247, %v2371
        %v2411 = vsel %vm2408, %v2265, %v2389
        %v2412 = vsel %vm2408, %v2283, %v2407
        %v2417 = vcombine.low %v2409, %v2410
        %v2418 = vcombine.low %v2411, %v2412
        %v2420 = vunpack.c.l.s4 1983009808
        %v2421 = vunpack.c.0.s8 %v2420
        %v2422 = vlaneseq
        %v2423 = vshrl.u32 %v2422, 7
        %v2424 = vsub.s32 %v2421, %v2423
        %v2425 = vrot.slane %v2417, %v2424
        %v2427 = vunpack.c.l.s4 1983009808
        %v2428 = vunpack.c.0.s8 %v2427
        %v2429 = vlaneseq
        %v2430 = vshrl.u32 %v2429, 7
        %v2431 = vsub.s32 %v2428, %v2430
        %v2432 = vrot.slane %v2418, %v2431
        %v2433 = vcombine.low %v2425, %v2432
        %2435 = vst [vmem:[%s218] sm:$0xff] %v2433
      $region36: #{encoder_forward.3} parent=31 // pred_fallthru
        _
      // Predicated region
      $region37: #{encoder_forward.3} parent=31 // pred_check
        %p2436 = pneg %p2207
      $region38: #{encoder_forward.3} parent=31 // pred_check_branch
        %2438 = sbr.rel (%p2436) target = $region40
      $region39: #{encoder_forward.3} parent=31 // pred_region
        %v2439 = vlaneseq
        %v2440 = vshrl.u32 %v2439, 7
        %v2441 = vadd.s32 %v2440, 8
        %v2442 = vadd.s32 %v2440, 16
        %v2443 = vadd.s32 %v2440, 24
        %v2444 = vadd.s32 %v2440, 32
        %v2445 = vadd.s32 %v2440, 40
        %v2446 = vadd.s32 %v2440, 48
        %v2447 = vadd.s32 %v2440, 56
        %v2448 = vadd.s32 %v2440, 64
        %v2449 = vadd.s32 %v2440, 72
        %v2450 = vadd.s32 %v2440, 80
        %v2451 = vadd.s32 %v2440, 88
        %v2452 = vadd.s32 %v2440, 96
        %vm2453 = vcmp.lt.s32.totalorder %v2440, 96
        %vm2454 = vcmp.lt.s32.totalorder %v2441, 96
        %vm2455 = vcmp.lt.s32.totalorder %v2442, 96
        %vm2456 = vcmp.lt.s32.totalorder %v2443, 96
        %vm2457 = vcmp.lt.s32.totalorder %v2444, 96
        %vm2458 = vcmp.lt.s32.totalorder %v2445, 96
        %vm2459 = vcmp.lt.s32.totalorder %v2446, 96
        %vm2460 = vcmp.lt.s32.totalorder %v2447, 96
        %vm2461 = vcmp.lt.s32.totalorder %v2448, 96
        %vm2462 = vcmp.lt.s32.totalorder %v2449, 96
        %vm2463 = vcmp.lt.s32.totalorder %v2450, 96
        %vm2464 = vcmp.lt.s32.totalorder %v2451, 96
        %vm2465 = vcmp.lt.s32.totalorder %v2452, 96
        %v2466 = vsel %vm2453, 1, 0
        %v2467 = vsel %vm2454, 1, 0
        %v2468 = vsel %vm2455, 1, 0
        %v2469 = vsel %vm2456, 1, 0
        %v2470 = vsel %vm2457, 1, 0
        %v2471 = vsel %vm2458, 1, 0
        %v2472 = vsel %vm2459, 1, 0
        %v2473 = vsel %vm2460, 1, 0
        %v2474 = vsel %vm2461, 1, 0
        %v2475 = vsel %vm2462, 1, 0
        %v2476 = vsel %vm2463, 1, 0
        %v2477 = vsel %vm2464, 1, 0
        %v2478 = vsel %vm2465, 1, 0
        %vm2479 = vcmp.eq.s32.totalorder %v2466, 1
        %vm2480 = vcmp.eq.s32.totalorder %v2467, 1
        %vm2481 = vcmp.eq.s32.totalorder %v2468, 1
        %vm2482 = vcmp.eq.s32.totalorder %v2469, 1
        %vm2483 = vcmp.eq.s32.totalorder %v2470, 1
        %vm2484 = vcmp.eq.s32.totalorder %v2471, 1
        %vm2485 = vcmp.eq.s32.totalorder %v2472, 1
        %vm2486 = vcmp.eq.s32.totalorder %v2473, 1
        %vm2487 = vcmp.eq.s32.totalorder %v2474, 1
        %vm2488 = vcmp.eq.s32.totalorder %v2475, 1
        %vm2489 = vcmp.eq.s32.totalorder %v2476, 1
        %vm2490 = vcmp.eq.s32.totalorder %v2477, 1
        %vm2491 = vcmp.eq.s32.totalorder %v2478, 1
        %v2492 = vsel %vm2479, %v1652, 0.0
        %v2493 = vsel %vm2479, %v1654, 0.0
        %v2494 = vsel %vm2479, %v1955, 0.0
        %v2495 = vsel %vm2479, %v1957, 0.0
        %v2496 = vsel %vm2480, %v1656, 0.0
        %v2497 = vsel %vm2480, %v1658, 0.0
        %v2498 = vsel %vm2480, %v1959, 0.0
        %v2499 = vsel %vm2480, %v1961, 0.0
        %v2500 = vsel %vm2481, %v1662, 0.0
        %v2501 = vsel %vm2481, %v1664, 0.0
        %v2502 = vsel %vm2481, %v1965, 0.0
        %v2503 = vsel %vm2481, %v1967, 0.0
        %v2504 = vsel %vm2482, %v1666, 0.0
        %v2505 = vsel %vm2482, %v1668, 0.0
        %v2506 = vsel %vm2482, %v1969, 0.0
        %v2507 = vsel %vm2482, %v1971, 0.0
        %v2508 = vsel %vm2483, %v1672, 0.0
        %v2509 = vsel %vm2483, %v1674, 0.0
        %v2510 = vsel %vm2483, %v1975, 0.0
        %v2511 = vsel %vm2483, %v1977, 0.0
        %v2512 = vsel %vm2484, %v1676, 0.0
        %v2513 = vsel %vm2484, %v1678, 0.0
        %v2514 = vsel %vm2484, %v1979, 0.0
        %v2515 = vsel %vm2484, %v1981, 0.0
        %v2516 = vsel %vm2485, %v1682, 0.0
        %v2517 = vsel %vm2485, %v1684, 0.0
        %v2518 = vsel %vm2485, %v1985, 0.0
        %v2519 = vsel %vm2485, %v1987, 0.0
        %v2520 = vsel %vm2486, %v1686, 0.0
        %v2521 = vsel %vm2486, %v1688, 0.0
        %v2522 = vsel %vm2486, %v1989, 0.0
        %v2523 = vsel %vm2486, %v1991, 0.0
        %v2524 = vsel %vm2487, %v1692, 0.0
        %v2525 = vsel %vm2487, %v1694, 0.0
        %v2526 = vsel %vm2487, %v1995, 0.0
        %v2527 = vsel %vm2487, %v1997, 0.0
        %v2528 = vsel %vm2488, %v1696, 0.0
        %v2529 = vsel %vm2488, %v1698, 0.0
        %v2530 = vsel %vm2488, %v1999, 0.0
        %v2531 = vsel %vm2488, %v2001, 0.0
        %v2532 = vsel %vm2489, %v1702, 0.0
        %v2533 = vsel %vm2489, %v1704, 0.0
        %v2534 = vsel %vm2489, %v2005, 0.0
        %v2535 = vsel %vm2489, %v2007, 0.0
        %v2536 = vsel %vm2490, %v1706, 0.0
        %v2537 = vsel %vm2490, %v1708, 0.0
        %v2538 = vsel %vm2490, %v2009, 0.0
        %v2539 = vsel %vm2490, %v2011, 0.0
        %v2540 = vsel %vm2491, %v1712, 0.0
        %v2541 = vsel %vm2491, %v1714, 0.0
        %v2542 = vsel %vm2491, %v2015, 0.0
        %v2543 = vsel %vm2491, %v2017, 0.0
        %v2544 = vadd.f32 %v2492, %v2496
        %v2545 = vadd.f32 %v2544, %v2500
        %v2546 = vadd.f32 %v2545, %v2504
        %v2547 = vadd.f32 %v2546, %v2508
        %v2548 = vadd.f32 %v2547, %v2512
        %v2549 = vadd.f32 %v2548, %v2516
        %v2550 = vadd.f32 %v2549, %v2520
        %v2551 = vadd.f32 %v2550, %v2524
        %v2552 = vadd.f32 %v2551, %v2528
        %v2553 = vadd.f32 %v2552, %v2532
        %v2554 = vadd.f32 %v2553, %v2536
        %v2555 = vadd.f32 %v2554, %v2540
        %v2556 = vrot.slane %v2555, 4
        %v2557 = vadd.f32 %v2555, %v2556
        %v2558 = vrot.slane %v2557, 2
        %v2559 = vadd.f32 %v2557, %v2558
        %v2560 = vrot.slane %v2559, 1
        %v2561 = vadd.f32 %v2559, %v2560
        %v2562 = vadd.f32 %v2493, %v2497
        %v2563 = vadd.f32 %v2562, %v2501
        %v2564 = vadd.f32 %v2563, %v2505
        %v2565 = vadd.f32 %v2564, %v2509
        %v2566 = vadd.f32 %v2565, %v2513
        %v2567 = vadd.f32 %v2566, %v2517
        %v2568 = vadd.f32 %v2567, %v2521
        %v2569 = vadd.f32 %v2568, %v2525
        %v2570 = vadd.f32 %v2569, %v2529
        %v2571 = vadd.f32 %v2570, %v2533
        %v2572 = vadd.f32 %v2571, %v2537
        %v2573 = vadd.f32 %v2572, %v2541
        %v2574 = vrot.slane %v2573, 4
        %v2575 = vadd.f32 %v2573, %v2574
        %v2576 = vrot.slane %v2575, 2
        %v2577 = vadd.f32 %v2575, %v2576
        %v2578 = vrot.slane %v2577, 1
        %v2579 = vadd.f32 %v2577, %v2578
        %v2580 = vadd.f32 %v2494, %v2498
        %v2581 = vadd.f32 %v2580, %v2502
        %v2582 = vadd.f32 %v2581, %v2506
        %v2583 = vadd.f32 %v2582, %v2510
        %v2584 = vadd.f32 %v2583, %v2514
        %v2585 = vadd.f32 %v2584, %v2518
        %v2586 = vadd.f32 %v2585, %v2522
        %v2587 = vadd.f32 %v2586, %v2526
        %v2588 = vadd.f32 %v2587, %v2530
        %v2589 = vadd.f32 %v2588, %v2534
        %v2590 = vadd.f32 %v2589, %v2538
        %v2591 = vadd.f32 %v2590, %v2542
        %v2592 = vrot.slane %v2591, 4
        %v2593 = vadd.f32 %v2591, %v2592
        %v2594 = vrot.slane %v2593, 2
        %v2595 = vadd.f32 %v2593, %v2594
        %v2596 = vrot.slane %v2595, 1
        %v2597 = vadd.f32 %v2595, %v2596
        %v2598 = vadd.f32 %v2495, %v2499
        %v2599 = vadd.f32 %v2598, %v2503
        %v2600 = vadd.f32 %v2599, %v2507
        %v2601 = vadd.f32 %v2600, %v2511
        %v2602 = vadd.f32 %v2601, %v2515
        %v2603 = vadd.f32 %v2602, %v2519
        %v2604 = vadd.f32 %v2603, %v2523
        %v2605 = vadd.f32 %v2604, %v2527
        %v2606 = vadd.f32 %v2605, %v2531
        %v2607 = vadd.f32 %v2606, %v2535
        %v2608 = vadd.f32 %v2607, %v2539
        %v2609 = vadd.f32 %v2608, %v2543
        %v2610 = vrot.slane %v2609, 4
        %v2611 = vadd.f32 %v2609, %v2610
        %v2612 = vrot.slane %v2611, 2
        %v2613 = vadd.f32 %v2611, %v2612
        %v2614 = vrot.slane %v2613, 1
        %v2615 = vadd.f32 %v2613, %v2614
        %v2616 = vmul.f32 %v2492, %v2492
        %v2617 = vmul.f32 %v2493, %v2493
        %v2618 = vmul.f32 %v2494, %v2494
        %v2619 = vmul.f32 %v2495, %v2495
        %v2620 = vmul.f32 %v2496, %v2496
        %v2621 = vmul.f32 %v2497, %v2497
        %v2622 = vmul.f32 %v2498, %v2498
        %v2623 = vmul.f32 %v2499, %v2499
        %v2624 = vmul.f32 %v2500, %v2500
        %v2625 = vmul.f32 %v2501, %v2501
        %v2626 = vmul.f32 %v2502, %v2502
        %v2627 = vmul.f32 %v2503, %v2503
        %v2628 = vmul.f32 %v2504, %v2504
        %v2629 = vmul.f32 %v2505, %v2505
        %v2630 = vmul.f32 %v2506, %v2506
        %v2631 = vmul.f32 %v2507, %v2507
        %v2632 = vmul.f32 %v2508, %v2508
        %v2633 = vmul.f32 %v2509, %v2509
        %v2634 = vmul.f32 %v2510, %v2510
        %v2635 = vmul.f32 %v2511, %v2511
        %v2636 = vmul.f32 %v2512, %v2512
        %v2637 = vmul.f32 %v2513, %v2513
        %v2638 = vmul.f32 %v2514, %v2514
        %v2639 = vmul.f32 %v2515, %v2515
        %v2640 = vmul.f32 %v2516, %v2516
        %v2641 = vmul.f32 %v2517, %v2517
        %v2642 = vmul.f32 %v2518, %v2518
        %v2643 = vmul.f32 %v2519, %v2519
        %v2644 = vmul.f32 %v2520, %v2520
        %v2645 = vmul.f32 %v2521, %v2521
        %v2646 = vmul.f32 %v2522, %v2522
        %v2647 = vmul.f32 %v2523, %v2523
        %v2648 = vmul.f32 %v2524, %v2524
        %v2649 = vmul.f32 %v2525, %v2525
        %v2650 = vmul.f32 %v2526, %v2526
        %v2651 = vmul.f32 %v2527, %v2527
        %v2652 = vmul.f32 %v2528, %v2528
        %v2653 = vmul.f32 %v2529, %v2529
        %v2654 = vmul.f32 %v2530, %v2530
        %v2655 = vmul.f32 %v2531, %v2531
        %v2656 = vmul.f32 %v2532, %v2532
        %v2657 = vmul.f32 %v2533, %v2533
        %v2658 = vmul.f32 %v2534, %v2534
        %v2659 = vmul.f32 %v2535, %v2535
        %v2660 = vmul.f32 %v2536, %v2536
        %v2661 = vmul.f32 %v2537, %v2537
        %v2662 = vmul.f32 %v2538, %v2538
        %v2663 = vmul.f32 %v2539, %v2539
        %v2664 = vmul.f32 %v2540, %v2540
        %v2665 = vmul.f32 %v2541, %v2541
        %v2666 = vmul.f32 %v2542, %v2542
        %v2667 = vmul.f32 %v2543, %v2543
        %v2668 = vadd.f32 %v2616, %v2620
        %v2669 = vadd.f32 %v2668, %v2624
        %v2670 = vadd.f32 %v2669, %v2628
        %v2671 = vadd.f32 %v2670, %v2632
        %v2672 = vadd.f32 %v2671, %v2636
        %v2673 = vadd.f32 %v2672, %v2640
        %v2674 = vadd.f32 %v2673, %v2644
        %v2675 = vadd.f32 %v2674, %v2648
        %v2676 = vadd.f32 %v2675, %v2652
        %v2677 = vadd.f32 %v2676, %v2656
        %v2678 = vadd.f32 %v2677, %v2660
        %v2679 = vadd.f32 %v2678, %v2664
        %v2680 = vrot.slane %v2679, 4
        %v2681 = vadd.f32 %v2679, %v2680
        %v2682 = vrot.slane %v2681, 2
        %v2683 = vadd.f32 %v2681, %v2682
        %v2684 = vrot.slane %v2683, 1
        %v2685 = vadd.f32 %v2683, %v2684
        %v2686 = vadd.f32 %v2617, %v2621
        %v2687 = vadd.f32 %v2686, %v2625
        %v2688 = vadd.f32 %v2687, %v2629
        %v2689 = vadd.f32 %v2688, %v2633
        %v2690 = vadd.f32 %v2689, %v2637
        %v2691 = vadd.f32 %v2690, %v2641
        %v2692 = vadd.f32 %v2691, %v2645
        %v2693 = vadd.f32 %v2692, %v2649
        %v2694 = vadd.f32 %v2693, %v2653
        %v2695 = vadd.f32 %v2694, %v2657
        %v2696 = vadd.f32 %v2695, %v2661
        %v2697 = vadd.f32 %v2696, %v2665
        %v2698 = vrot.slane %v2697, 4
        %v2699 = vadd.f32 %v2697, %v2698
        %v2700 = vrot.slane %v2699, 2
        %v2701 = vadd.f32 %v2699, %v2700
        %v2702 = vrot.slane %v2701, 1
        %v2703 = vadd.f32 %v2701, %v2702
        %v2704 = vadd.f32 %v2618, %v2622
        %v2705 = vadd.f32 %v2704, %v2626
        %v2706 = vadd.f32 %v2705, %v2630
        %v2707 = vadd.f32 %v2706, %v2634
        %v2708 = vadd.f32 %v2707, %v2638
        %v2709 = vadd.f32 %v2708, %v2642
        %v2710 = vadd.f32 %v2709, %v2646
        %v2711 = vadd.f32 %v2710, %v2650
        %v2712 = vadd.f32 %v2711, %v2654
        %v2713 = vadd.f32 %v2712, %v2658
        %v2714 = vadd.f32 %v2713, %v2662
        %v2715 = vadd.f32 %v2714, %v2666
        %v2716 = vrot.slane %v2715, 4
        %v2717 = vadd.f32 %v2715, %v2716
        %v2718 = vrot.slane %v2717, 2
        %v2719 = vadd.f32 %v2717, %v2718
        %v2720 = vrot.slane %v2719, 1
        %v2721 = vadd.f32 %v2719, %v2720
        %v2722 = vadd.f32 %v2619, %v2623
        %v2723 = vadd.f32 %v2722, %v2627
        %v2724 = vadd.f32 %v2723, %v2631
        %v2725 = vadd.f32 %v2724, %v2635
        %v2726 = vadd.f32 %v2725, %v2639
        %v2727 = vadd.f32 %v2726, %v2643
        %v2728 = vadd.f32 %v2727, %v2647
        %v2729 = vadd.f32 %v2728, %v2651
        %v2730 = vadd.f32 %v2729, %v2655
        %v2731 = vadd.f32 %v2730, %v2659
        %v2732 = vadd.f32 %v2731, %v2663
        %v2733 = vadd.f32 %v2732, %v2667
        %v2734 = vrot.slane %v2733, 4
        %v2735 = vadd.f32 %v2733, %v2734
        %v2736 = vrot.slane %v2735, 2
        %v2737 = vadd.f32 %v2735, %v2736
        %v2738 = vrot.slane %v2737, 1
        %v2739 = vadd.f32 %v2737, %v2738
        %vm2740 = vcmask 1040384
        %v2741 = vsel %vm2740, %v2561, %v2685
        %v2742 = vsel %vm2740, %v2579, %v2703
        %v2743 = vsel %vm2740, %v2597, %v2721
        %v2744 = vsel %vm2740, %v2615, %v2739
        %v2749 = vcombine.low %v2741, %v2742
        %v2750 = vcombine.low %v2743, %v2744
        %v2752 = vunpack.c.l.s4 1983009808
        %v2753 = vunpack.c.0.s8 %v2752
        %v2754 = vlaneseq
        %v2755 = vshrl.u32 %v2754, 7
        %v2756 = vsub.s32 %v2753, %v2755
        %v2757 = vrot.slane %v2749, %v2756
        %v2759 = vunpack.c.l.s4 1983009808
        %v2760 = vunpack.c.0.s8 %v2759
        %v2761 = vlaneseq
        %v2762 = vshrl.u32 %v2761, 7
        %v2763 = vsub.s32 %v2760, %v2762
        %v2764 = vrot.slane %v2750, %v2763
        %v2765 = vcombine.low %v2757, %v2764
        %2767 = vst [vmem:[%s218] sm:$0xff] %v2765
      $region40: #{encoder_forward.3} parent=31 // pred_fallthru
        _
      %s2768 = smul.u32 13, %s16
      %p2769 = scmp.lt.s32.totalorder %s2768, 25
      %s2770 = scalar_select %p2769, %s2768, 25
      %s2771 = smul.addr %s2770, 4
      %s2772 = smul.addr %s2771, 4
      %s2773 = scalar_lea.vmem %s3, %s2772
      %p2774 = scmp.lt.s32.totalorder %s16, 1
      %s2775 = scalar_select %p2774, %s16, 1
      %s2776 = smul.addr %s2775, 4
      %s2777 = smul.addr %s2776, 2
      %s2778 = scalar_lea.vmem %s4, %s2777
      // Predicated region
      $region41: #{encoder_forward.3} parent=31 // pred_check
        %p2779 = pneg %p102
      $region42: #{encoder_forward.3} parent=31 // pred_check_branch
        %2781 = sbr.rel (%p2779) target = $region44
      $region43: #{encoder_forward.3} parent=31 // pred_region
        %s2782 = smul.u32 13, %s16
      $region44: #{encoder_forward.3} parent=31 // pred_fallthru
        _
      // Predicated region
      $region45: #{encoder_forward.3} parent=31 // pred_check
        %p2783 = pneg %p128
      $region46: #{encoder_forward.3} parent=31 // pred_check_branch
        %2785 = sbr.rel (%p2783) target = $region48
      $region47: #{encoder_forward.3} parent=31 // pred_region
        _
      $region48: #{encoder_forward.3} parent=31 // pred_fallthru
        _
    $region32: #{encoder_forward.3} parent=5 // pred_fallthru
      _
    %p2786 = scmp.le.s32.totalorder 2, %s11
    // Predicated region
    $region49: #{encoder_forward.3} parent=5 // pred_check
      %p2787 = pneg %p2786
    $region50: #{encoder_forward.3} parent=5 // pred_check_branch
      %2789 = sbr.rel (%p2787) target = $region52
    $region51: #{encoder_forward.3} parent=5 // pred_region
      %s2790 = ssub.s32 %s11, 2
      // Predicated region
      $region53: #{encoder_forward.3} parent=51 // pred_check
        %p2791 = pneg %p108
      $region54: #{encoder_forward.3} parent=51 // pred_check_branch
        %2793 = sbr.rel (%p2791) target = $region56
      $region55: #{encoder_forward.3} parent=51 // pred_region
        %s2794 = smul.u32 13, %s17
        %p2795 = scmp.lt.s32.totalorder %s2794, 25
        %s2796 = scalar_select %p2795, %s2794, 25
        %s2797 = smul.addr %s2796, 4
        %s2798 = smul.addr %s2797, 4
        %s2799 = scalar_lea.vmem %s3, %s2798
      $region56: #{encoder_forward.3} parent=51 // pred_fallthru
        _
      // Predicated region
      $region57: #{encoder_forward.3} parent=51 // pred_check
        %p2800 = pneg %p134
      $region58: #{encoder_forward.3} parent=51 // pred_check_branch
        %2802 = sbr.rel (%p2800) target = $region60
      $region59: #{encoder_forward.3} parent=51 // pred_region
        %p2803 = scmp.lt.s32.totalorder %s17, 1
        %s2804 = scalar_select %p2803, %s17, 1
        %s2805 = smul.addr %s2804, 4
        %s2806 = smul.addr %s2805, 2
        %s2807 = scalar_lea.vmem %s4, %s2806
      $region60: #{encoder_forward.3} parent=51 // pred_fallthru
        _
    $region52: #{encoder_forward.3} parent=5 // pred_fallthru
      _
  $region6: #{encoder_forward.3} parent=0 // loop_footer
    %s15 = sadd.s32 1, %s11
  $region7: #{encoder_forward.3} parent=0 // loop_footer_branch
    %10 = sbr.rel target = $region3
  $region8: #{encoder_forward.3} parent=0 // loop_exit
    _

</llo_original>
